<compile_context>
chip_gen: v7x
topology: tpu7x:2x2x1
jax: 0.10.0
libtpu: 0.0.40
codegen_flags: <defaults>
</compile_context>

<pallas_src>
import functools

import jax
import jax.numpy as jnp
from jax.experimental import pallas as pl
from jax.experimental.pallas import tpu as pltpu

_EPS = 1e-5
_LANES = 128
_VMEM_LIMIT = 32 * 1024 * 1024


def _conv_stats_kernel(x_ref, w_ref, aff_ref, y_ref, stats_ref,
                       xpad_ref, patch_ref, *, fuse_in_bn_relu):
    """One batch tile: [optional fused BN-affine+ReLU on input] -> 3x3 conv -> raw out + stats.

    x_ref     : (TN, H, W, C)     f32   stage input tile
    w_ref     : (9*C, C)          bf16  conv weight, taps folded into contraction dim
    aff_ref   : (2, C)            f32   input affine [scale; shift] (stage 2 fuses BN1+ReLU)
    y_ref     : (TN, H, W, C)     f32   raw conv output (normalized later w/ global stats)
    stats_ref : (1, 2, C)         f32   per-tile partial [sum; sum-of-squares] per channel
    xpad_ref  : (TN, H+2, W+2, C) bf16  VMEM: zero-halo padded input
    patch_ref : (TN, H, W, 9*C)   bf16  VMEM: im2col patches
    """
    TN, H, W, C = x_ref.shape
    K = 9 * C

    xin = x_ref[...]
    if fuse_in_bn_relu:
        scale = aff_ref[0:1, :].reshape(1, 1, 1, C)
        shift = aff_ref[1:2, :].reshape(1, 1, 1, C)
        xin = jnp.maximum(xin * scale + shift, 0.0)
    xin = xin.astype(xpad_ref.dtype)

    # Zero only the 1-pixel halo border, then write the interior (no full-tensor memset).
    zrow = jnp.zeros((TN, 1, W + 2, C), xpad_ref.dtype)
    zcol = jnp.zeros((TN, H, 1, C), xpad_ref.dtype)
    xpad_ref[:, 0:1, :, :] = zrow
    xpad_ref[:, H + 1:H + 2, :, :] = zrow
    xpad_ref[:, 1:H + 1, 0:1, :] = zcol
    xpad_ref[:, 1:H + 1, W + 1:W + 2, :] = zcol
    xpad_ref[:, 1:H + 1, 1:W + 1, :] = xin

    # im2col: fold the 9 taps into the contraction dimension.
    for ky in range(3):
        for kx in range(3):
            t = ky * 3 + kx
            patch_ref[:, :, :, t * C:(t + 1) * C] = xpad_ref[:, ky:ky + H, kx:kx + W, :]

    # Single bf16 MXU matmul per tile, f32 accumulation.
    patch = patch_ref[...].reshape(TN * H * W, K)
    acc = jnp.dot(patch, w_ref[...], preferred_element_type=jnp.float32)   # (TN*H*W, C)

    y_ref[...] = acc.reshape(TN, H, W, C)

    # One-pass per-tile partial BN statistics (global reduction happens in the wrapper).
    stats_ref[0, 0:1, :] = jnp.sum(acc, axis=0, keepdims=True)
    stats_ref[0, 1:2, :] = jnp.sum(acc * acc, axis=0, keepdims=True)


def _conv_stage(x_nhwc, w_folded, in_aff, *, fuse_in_bn_relu):
    """Tiled conv3x3 (+optional fused input BN/ReLU) producing raw output + stat partials."""
    N, H, W, C = x_nhwc.shape
    kernel = functools.partial(_conv_stats_kernel, fuse_in_bn_relu=fuse_in_bn_relu)
    return pl.pallas_call(
        kernel,
        out_shape=(jax.ShapeDtypeStruct((N, H, W, C), jnp.float32),
                   jax.ShapeDtypeStruct((N, 2, C), jnp.float32)),
        grid=(N,),
        in_specs=[
            pl.BlockSpec((1, H, W, C), lambda i: (i, 0, 0, 0)),
            pl.BlockSpec((9 * C, C), lambda i: (0, 0)),       # resident weights
            pl.BlockSpec((2, C), lambda i: (0, 0)),            # resident affine
        ],
        out_specs=(
            pl.BlockSpec((1, H, W, C), lambda i: (i, 0, 0, 0)),
            pl.BlockSpec((1, 2, C), lambda i: (i, 0, 0)),
        ),
        scratch_shapes=[
            pltpu.VMEM((1, H + 2, W + 2, C), jnp.bfloat16),
            pltpu.VMEM((1, H, W, 9 * C), jnp.bfloat16),
        ],
        compiler_params=pltpu.CompilerParams(
            dimension_semantics=("parallel",),
            vmem_limit_bytes=_VMEM_LIMIT),
    )(x_nhwc, w_folded, in_aff)


def _bn_scale_shift(stats, gamma, beta, count):
    """Fold global batch stats + BN affine into per-channel (scale, shift)."""
    s = jnp.sum(stats[:, 0, :], axis=0)                 # (C,)
    ss = jnp.sum(stats[:, 1, :], axis=0)                # (C,)
    mean = s / count
    var = ss / count - mean * mean                      # biased variance (training mode)
    scale = gamma * jax.lax.rsqrt(var + _EPS)
    shift = beta - mean * scale
    return jnp.stack([scale, shift], axis=0)            # (2, C)


def _bn_residual_kernel(y_ref, x_ref, aff_ref, o_ref):
    """Lane-dense finalize: out = y * scale + shift + residual."""
    scale = aff_ref[0:1, :]
    shift = aff_ref[1:2, :]
    o_ref[...] = y_ref[...] * scale + shift + x_ref[...]


def _bn_residual(y_raw, x_nhwc, aff):
    N, H, W, C = x_nhwc.shape
    total = N * H * W * C
    assert total % _LANES == 0 and _LANES % C == 0, "lane-dense packing assumption"
    rows = total // _LANES
    tr = 8 if rows % 8 == 0 else rows
    y_flat = y_raw.reshape(rows, _LANES)
    x_flat = x_nhwc.reshape(rows, _LANES)
    aff_lanes = jnp.tile(aff, (1, _LANES // C))          # (2, 128): per-lane scale/shift
    out_flat = pl.pallas_call(
        _bn_residual_kernel,
        out_shape=jax.ShapeDtypeStruct((rows, _LANES), jnp.float32),
        grid=(rows // tr,),
        in_specs=[
            pl.BlockSpec((tr, _LANES), lambda i: (i, 0)),
            pl.BlockSpec((tr, _LANES), lambda i: (i, 0)),
            pl.BlockSpec((2, _LANES), lambda i: (0, 0)),
        ],
        out_specs=pl.BlockSpec((tr, _LANES), lambda i: (i, 0)),
        compiler_params=pltpu.CompilerParams(
            dimension_semantics=("parallel",),
            vmem_limit_bytes=_VMEM_LIMIT),
    )(y_flat, x_flat, aff_lanes)
    return out_flat.reshape(N, H, W, C)


def _fold_weight(w_oihw):
    """PyTorch (Cout, Cin, 3, 3) -> (9*Cin, Cout) bf16, tap-major / channel-minor."""
    cout = w_oihw.shape[0]
    return jnp.transpose(w_oihw, (2, 3, 1, 0)).reshape(-1, cout).astype(jnp.bfloat16)


def residual_block_nhwc(x_nhwc, params):
    """Forward pass of ResidualBlock on an NHWC tensor (training-mode BatchNorm)."""
    w1, b1, g1, be1, w2, b2, g2, be2 = params
    del b1, b2  # conv bias is exactly cancelled by the BN batch-mean subtraction
    N, H, W, C = x_nhwc.shape
    count = N * H * W

    wf1 = _fold_weight(w1)
    wf2 = _fold_weight(w2)
    dummy_aff = jnp.zeros((2, C), jnp.float32)           # unused when fuse_in_bn_relu=False

    # Stage 1: conv1 -> raw output + global-stat partials.
    y1_raw, st1 = _conv_stage(x_nhwc, wf1, dummy_aff, fuse_in_bn_relu=False)
    aff1 = _bn_scale_shift(st1, g1, be1, count)          # BN1 folded to scale/shift

    # Stage 2: (BN1 + ReLU fused into the input path) -> conv2 -> raw output + partials.
    y2_raw, st2 = _conv_stage(y1_raw, wf2, aff1, fuse_in_bn_relu=True)
    aff2 = _bn_scale_shift(st2, g2, be2, count)

    # Finalize: BN2 affine + residual add on a lane-dense slab.
    return _bn_residual(y2_raw, x_nhwc, aff2)


def residual_block_nchw(x_nchw, params):
    x_nhwc = jnp.transpose(x_nchw, (0, 2, 3, 1))
    out = residual_block_nhwc(x_nhwc, params)
    return jnp.transpose(out, (0, 3, 1, 2))


def _torch_like_reference(x_nchw, params):
    """Pure-JAX NCHW reference matching the PyTorch module (training-mode BN)."""
    w1, b1, g1, be1, w2, b2, g2, be2 = params

    def conv(x, w, b):
        y = jax.lax.conv_general_dilated(
            x, w, window_strides=(1, 1), padding=((1, 1), (1, 1)),
            dimension_numbers=("NCHW", "OIHW", "NCHW"))
        return y + b[None, :, None, None]

    def bn(x, g, be):
        mean = jnp.mean(x, axis=(0, 2, 3), keepdims=True)
        var = jnp.mean(jnp.square(x - mean), axis=(0, 2, 3), keepdims=True)
        return ((x - mean) * jax.lax.rsqrt(var + _EPS)
                * g[None, :, None, None] + be[None, :, None, None])

    out = jnp.maximum(bn(conv(x_nchw, w1, b1), g1, be1), 0.0)
    out = bn(conv(out, w2, b2), g2, be2)
    return out + x_nchw


if __name__ == "__main__":
    N, C, H, W = 2, 4, 16, 16

    key = jax.random.PRNGKey(0)
    ks = jax.random.split(key, 9)
    # Deterministic synthetic parameters (shapes from ResidualBlock.__init__).
    w1 = 0.2 * jax.random.normal(ks[0], (C, C, 3, 3), jnp.float32)
    b1 = 0.1 * jax.random.normal(ks[1], (C,), jnp.float32)
    g1 = 1.0 + 0.1 * jax.random.normal(ks[2], (C,), jnp.float32)
    be1 = 0.1 * jax.random.normal(ks[3], (C,), jnp.float32)
    w2 = 0.2 * jax.random.normal(ks[4], (C, C, 3, 3), jnp.float32)
    b2 = 0.1 * jax.random.normal(ks[5], (C,), jnp.float32)
    g2 = 1.0 + 0.1 * jax.random.normal(ks[6], (C,), jnp.float32)
    be2 = 0.1 * jax.random.normal(ks[7], (C,), jnp.float32)
    params = (w1, b1, g1, be1, w2, b2, g2, be2)

    x_nchw = jax.random.normal(ks[8], (N, C, H, W), jnp.float32)

    out = residual_block_nchw(x_nchw, params)
    out = jax.block_until_ready(out)

    ref = _torch_like_reference(x_nchw, params)
    # Tolerance covers bf16 MXU operands (f32 accumulation) through two conv+BN stages.
    if not jnp.allclose(out, ref, atol=2e-2, rtol=2e-2):
        raise RuntimeError("Pallas ResidualBlock output mismatch vs reference")

    print("KERNEL_OK")
</pallas_src>

<mosaic_0001>
module attributes {stable_mosaic.version = 11 : i64} {
  func.func @_conv_stats_kernel(%arg0: i32, %arg1: memref<1x16x16x4xf32, #tpu.memory_space<vmem>>, %arg2: memref<36x4xbf16, #tpu.memory_space<vmem>>, %arg3: memref<2x4xf32, #tpu.memory_space<vmem>>, %arg4: memref<1x16x16x4xf32, #tpu.memory_space<vmem>>, %arg5: memref<1x2x4xf32, #tpu.memory_space<vmem>>, %arg6: memref<1x18x18x4xbf16, #tpu.memory_space<vmem>>, %arg7: memref<1x16x16x36xbf16, #tpu.memory_space<vmem>>) attributes {dimension_semantics = [#tpu.dimension_semantics<parallel>], iteration_bounds = array<i64: 2>, scalar_prefetch = 0 : i64, scratch_operands = 2 : i64, tpu.core_type = #tpu.core_type<tc>, window_params = [{transform_indices = @transform_0, window_bounds = array<i64: 1, 16, 16, 4>}, {pipeline_mode = #tpu.pipeline_mode<synchronous>, transform_indices = @transform_1, window_bounds = array<i64: 36, 4>}, {pipeline_mode = #tpu.pipeline_mode<synchronous>, transform_indices = @transform_2, window_bounds = array<i64: 2, 4>}, {transform_indices = @transform_3, window_bounds = array<i64: 1, 16, 16, 4>}, {transform_indices = @transform_4, window_bounds = array<i64: 1, 2, 4>}]} {
    %c0 = arith.constant 0 : index
    %c0_0 = arith.constant 0 : index
    %c0_1 = arith.constant 0 : index
    %c0_2 = arith.constant 0 : index
    %0 = vector.load %arg1[%c0, %c0_0, %c0_1, %c0_2] : memref<1x16x16x4xf32, #tpu.memory_space<vmem>>, vector<1x16x16x4xf32>
    %1 = arith.truncf %0 : vector<1x16x16x4xf32> to vector<1x16x16x4xbf16>
    %cst = arith.constant 0.000000e+00 : bf16
    %2 = vector.broadcast %cst : bf16 to vector<1x1x18x4xbf16>
    %cst_3 = arith.constant 0.000000e+00 : bf16
    %3 = vector.broadcast %cst_3 : bf16 to vector<1x16x1x4xbf16>
    %c0_4 = arith.constant 0 : index
    %c0_5 = arith.constant 0 : index
    %c0_6 = arith.constant 0 : index
    %c0_7 = arith.constant 0 : index
    %4 = vector.load %arg6[%c0_4, %c0_5, %c0_6, %c0_7] : memref<1x18x18x4xbf16, #tpu.memory_space<vmem>>, vector<1x1x18x4xbf16>
    tpu.vector_store %arg6[%c0_4, %c0_5, %c0_6, %c0_7], %2 {strides = array<i32>} : memref<1x18x18x4xbf16, #tpu.memory_space<vmem>>, vector<1x1x18x4xbf16>,
    %c0_8 = arith.constant 0 : index
    %c17 = arith.constant 17 : index
    %c0_9 = arith.constant 0 : index
    %c0_10 = arith.constant 0 : index
    %5 = vector.load %arg6[%c0_8, %c17, %c0_9, %c0_10] : memref<1x18x18x4xbf16, #tpu.memory_space<vmem>>, vector<1x1x18x4xbf16>
    tpu.vector_store %arg6[%c0_8, %c17, %c0_9, %c0_10], %2 {strides = array<i32>} : memref<1x18x18x4xbf16, #tpu.memory_space<vmem>>, vector<1x1x18x4xbf16>,
    %c0_11 = arith.constant 0 : index
    %c1 = arith.constant 1 : index
    %c0_12 = arith.constant 0 : index
    %c0_13 = arith.constant 0 : index
    %6 = vector.load %arg6[%c0_11, %c1, %c0_12, %c0_13] : memref<1x18x18x4xbf16, #tpu.memory_space<vmem>>, vector<1x16x1x4xbf16>
    tpu.vector_store %arg6[%c0_11, %c1, %c0_12, %c0_13], %3 {strides = array<i32>} : memref<1x18x18x4xbf16, #tpu.memory_space<vmem>>, vector<1x16x1x4xbf16>,
    %c0_14 = arith.constant 0 : index
    %c1_15 = arith.constant 1 : index
    %c17_16 = arith.constant 17 : index
    %c0_17 = arith.constant 0 : index
    %7 = vector.load %arg6[%c0_14, %c1_15, %c17_16, %c0_17] : memref<1x18x18x4xbf16, #tpu.memory_space<vmem>>, vector<1x16x1x4xbf16>
    tpu.vector_store %arg6[%c0_14, %c1_15, %c17_16, %c0_17], %3 {strides = array<i32>} : memref<1x18x18x4xbf16, #tpu.memory_space<vmem>>, vector<1x16x1x4xbf16>,
    %c0_18 = arith.constant 0 : index
    %c1_19 = arith.constant 1 : index
    %c1_20 = arith.constant 1 : index
    %c0_21 = arith.constant 0 : index
    %8 = vector.load %arg6[%c0_18, %c1_19, %c1_20, %c0_21] : memref<1x18x18x4xbf16, #tpu.memory_space<vmem>>, vector<1x16x16x4xbf16>
    tpu.vector_store %arg6[%c0_18, %c1_19, %c1_20, %c0_21], %1 {strides = array<i32>} : memref<1x18x18x4xbf16, #tpu.memory_space<vmem>>, vector<1x16x16x4xbf16>,
    %c0_22 = arith.constant 0 : index
    %c0_23 = arith.constant 0 : index
    %c0_24 = arith.constant 0 : index
    %c0_25 = arith.constant 0 : index
    %9 = vector.load %arg6[%c0_22, %c0_23, %c0_24, %c0_25] : memref<1x18x18x4xbf16, #tpu.memory_space<vmem>>, vector<1x16x16x4xbf16>
    %c0_26 = arith.constant 0 : index
    %c0_27 = arith.constant 0 : index
    %c0_28 = arith.constant 0 : index
    %c0_29 = arith.constant 0 : index
    %10 = vector.load %arg7[%c0_26, %c0_27, %c0_28, %c0_29] : memref<1x16x16x36xbf16, #tpu.memory_space<vmem>>, vector<1x16x16x4xbf16>
    tpu.vector_store %arg7[%c0_26, %c0_27, %c0_28, %c0_29], %9 {strides = array<i32>} : memref<1x16x16x36xbf16, #tpu.memory_space<vmem>>, vector<1x16x16x4xbf16>,
    %c0_30 = arith.constant 0 : index
    %c0_31 = arith.constant 0 : index
    %c1_32 = arith.constant 1 : index
    %c0_33 = arith.constant 0 : index
    %11 = vector.load %arg6[%c0_30, %c0_31, %c1_32, %c0_33] : memref<1x18x18x4xbf16, #tpu.memory_space<vmem>>, vector<1x16x16x4xbf16>
    %c0_34 = arith.constant 0 : index
    %c0_35 = arith.constant 0 : index
    %c0_36 = arith.constant 0 : index
    %c4 = arith.constant 4 : index
    %12 = vector.load %arg7[%c0_34, %c0_35, %c0_36, %c4] : memref<1x16x16x36xbf16, #tpu.memory_space<vmem>>, vector<1x16x16x4xbf16>
    tpu.vector_store %arg7[%c0_34, %c0_35, %c0_36, %c4], %11 {strides = array<i32>} : memref<1x16x16x36xbf16, #tpu.memory_space<vmem>>, vector<1x16x16x4xbf16>,
    %c0_37 = arith.constant 0 : index
    %c0_38 = arith.constant 0 : index
    %c2 = arith.constant 2 : index
    %c0_39 = arith.constant 0 : index
    %13 = vector.load %arg6[%c0_37, %c0_38, %c2, %c0_39] : memref<1x18x18x4xbf16, #tpu.memory_space<vmem>>, vector<1x16x16x4xbf16>
    %c0_40 = arith.constant 0 : index
    %c0_41 = arith.constant 0 : index
    %c0_42 = arith.constant 0 : index
    %c8 = arith.constant 8 : index
    %14 = vector.load %arg7[%c0_40, %c0_41, %c0_42, %c8] : memref<1x16x16x36xbf16, #tpu.memory_space<vmem>>, vector<1x16x16x4xbf16>
    tpu.vector_store %arg7[%c0_40, %c0_41, %c0_42, %c8], %13 {strides = array<i32>} : memref<1x16x16x36xbf16, #tpu.memory_space<vmem>>, vector<1x16x16x4xbf16>,
    %c0_43 = arith.constant 0 : index
    %c1_44 = arith.constant 1 : index
    %c0_45 = arith.constant 0 : index
    %c0_46 = arith.constant 0 : index
    %15 = vector.load %arg6[%c0_43, %c1_44, %c0_45, %c0_46] : memref<1x18x18x4xbf16, #tpu.memory_space<vmem>>, vector<1x16x16x4xbf16>
    %c0_47 = arith.constant 0 : index
    %c0_48 = arith.constant 0 : index
    %c0_49 = arith.constant 0 : index
    %c12 = arith.constant 12 : index
    %16 = vector.load %arg7[%c0_47, %c0_48, %c0_49, %c12] : memref<1x16x16x36xbf16, #tpu.memory_space<vmem>>, vector<1x16x16x4xbf16>
    tpu.vector_store %arg7[%c0_47, %c0_48, %c0_49, %c12], %15 {strides = array<i32>} : memref<1x16x16x36xbf16, #tpu.memory_space<vmem>>, vector<1x16x16x4xbf16>,
    %c0_50 = arith.constant 0 : index
    %c1_51 = arith.constant 1 : index
    %c1_52 = arith.constant 1 : index
    %c0_53 = arith.constant 0 : index
    %17 = vector.load %arg6[%c0_50, %c1_51, %c1_52, %c0_53] : memref<1x18x18x4xbf16, #tpu.memory_space<vmem>>, vector<1x16x16x4xbf16>
    %c0_54 = arith.constant 0 : index
    %c0_55 = arith.constant 0 : index
    %c0_56 = arith.constant 0 : index
    %c16 = arith.constant 16 : index
    %18 = vector.load %arg7[%c0_54, %c0_55, %c0_56, %c16] : memref<1x16x16x36xbf16, #tpu.memory_space<vmem>>, vector<1x16x16x4xbf16>
    tpu.vector_store %arg7[%c0_54, %c0_55, %c0_56, %c16], %17 {strides = array<i32>} : memref<1x16x16x36xbf16, #tpu.memory_space<vmem>>, vector<1x16x16x4xbf16>,
    %c0_57 = arith.constant 0 : index
    %c1_58 = arith.constant 1 : index
    %c2_59 = arith.constant 2 : index
    %c0_60 = arith.constant 0 : index
    %19 = vector.load %arg6[%c0_57, %c1_58, %c2_59, %c0_60] : memref<1x18x18x4xbf16, #tpu.memory_space<vmem>>, vector<1x16x16x4xbf16>
    %c0_61 = arith.constant 0 : index
    %c0_62 = arith.constant 0 : index
    %c0_63 = arith.constant 0 : index
    %c20 = arith.constant 20 : index
    %20 = vector.load %arg7[%c0_61, %c0_62, %c0_63, %c20] : memref<1x16x16x36xbf16, #tpu.memory_space<vmem>>, vector<1x16x16x4xbf16>
    tpu.vector_store %arg7[%c0_61, %c0_62, %c0_63, %c20], %19 {strides = array<i32>} : memref<1x16x16x36xbf16, #tpu.memory_space<vmem>>, vector<1x16x16x4xbf16>,
    %c0_64 = arith.constant 0 : index
    %c2_65 = arith.constant 2 : index
    %c0_66 = arith.constant 0 : index
    %c0_67 = arith.constant 0 : index
    %21 = vector.load %arg6[%c0_64, %c2_65, %c0_66, %c0_67] : memref<1x18x18x4xbf16, #tpu.memory_space<vmem>>, vector<1x16x16x4xbf16>
    %c0_68 = arith.constant 0 : index
    %c0_69 = arith.constant 0 : index
    %c0_70 = arith.constant 0 : index
    %c24 = arith.constant 24 : index
    %22 = vector.load %arg7[%c0_68, %c0_69, %c0_70, %c24] : memref<1x16x16x36xbf16, #tpu.memory_space<vmem>>, vector<1x16x16x4xbf16>
    tpu.vector_store %arg7[%c0_68, %c0_69, %c0_70, %c24], %21 {strides = array<i32>} : memref<1x16x16x36xbf16, #tpu.memory_space<vmem>>, vector<1x16x16x4xbf16>,
    %c0_71 = arith.constant 0 : index
    %c2_72 = arith.constant 2 : index
    %c1_73 = arith.constant 1 : index
    %c0_74 = arith.constant 0 : index
    %23 = vector.load %arg6[%c0_71, %c2_72, %c1_73, %c0_74] : memref<1x18x18x4xbf16, #tpu.memory_space<vmem>>, vector<1x16x16x4xbf16>
    %c0_75 = arith.constant 0 : index
    %c0_76 = arith.constant 0 : index
    %c0_77 = arith.constant 0 : index
    %c28 = arith.constant 28 : index
    %24 = vector.load %arg7[%c0_75, %c0_76, %c0_77, %c28] : memref<1x16x16x36xbf16, #tpu.memory_space<vmem>>, vector<1x16x16x4xbf16>
    tpu.vector_store %arg7[%c0_75, %c0_76, %c0_77, %c28], %23 {strides = array<i32>} : memref<1x16x16x36xbf16, #tpu.memory_space<vmem>>, vector<1x16x16x4xbf16>,
    %c0_78 = arith.constant 0 : index
    %c2_79 = arith.constant 2 : index
    %c2_80 = arith.constant 2 : index
    %c0_81 = arith.constant 0 : index
    %25 = vector.load %arg6[%c0_78, %c2_79, %c2_80, %c0_81] : memref<1x18x18x4xbf16, #tpu.memory_space<vmem>>, vector<1x16x16x4xbf16>
    %c0_82 = arith.constant 0 : index
    %c0_83 = arith.constant 0 : index
    %c0_84 = arith.constant 0 : index
    %c32 = arith.constant 32 : index
    %26 = vector.load %arg7[%c0_82, %c0_83, %c0_84, %c32] : memref<1x16x16x36xbf16, #tpu.memory_space<vmem>>, vector<1x16x16x4xbf16>
    tpu.vector_store %arg7[%c0_82, %c0_83, %c0_84, %c32], %25 {strides = array<i32>} : memref<1x16x16x36xbf16, #tpu.memory_space<vmem>>, vector<1x16x16x4xbf16>,
    %c0_85 = arith.constant 0 : index
    %c0_86 = arith.constant 0 : index
    %c0_87 = arith.constant 0 : index
    %c0_88 = arith.constant 0 : index
    %27 = vector.load %arg7[%c0_85, %c0_86, %c0_87, %c0_88] : memref<1x16x16x36xbf16, #tpu.memory_space<vmem>>, vector<1x16x16x36xbf16>
    %28 = vector.shape_cast %27 : vector<1x16x16x36xbf16> to vector<256x36xbf16>
    %c0_89 = arith.constant 0 : index
    %c0_90 = arith.constant 0 : index
    %29 = vector.load %arg2[%c0_89, %c0_90] : memref<36x4xbf16, #tpu.memory_space<vmem>>, vector<36x4xbf16>
    %cst_91 = arith.constant dense<0.000000e+00> : vector<256x4xf32>
    %30 = tpu.matmul %28, %29, %cst_91 {dimension_numbers = #tpu.dot_dimension_numbers<[1], [0], [0], [1], [0, 0, 1, 1], [], []>} : vector<256x36xbf16>, vector<36x4xbf16>, vector<256x4xf32> -> vector<256x4xf32>
    %31 = vector.shape_cast %30 : vector<256x4xf32> to vector<1x16x16x4xf32>
    %c0_92 = arith.constant 0 : index
    %c0_93 = arith.constant 0 : index
    %c0_94 = arith.constant 0 : index
    %c0_95 = arith.constant 0 : index
    %32 = vector.load %arg4[%c0_92, %c0_93, %c0_94, %c0_95] : memref<1x16x16x4xf32, #tpu.memory_space<vmem>>, vector<1x16x16x4xf32>
    tpu.vector_store %arg4[%c0_92, %c0_93, %c0_94, %c0_95], %31 {strides = array<i32>} : memref<1x16x16x4xf32, #tpu.memory_space<vmem>>, vector<1x16x16x4xf32>,
    %cst_96 = arith.constant dense<0.000000e+00> : vector<4xf32>
    %33 = vector.multi_reduction <add>, %30, %cst_96 [0] : vector<256x4xf32> to vector<4xf32>
    %34 = vector.shape_cast %33 : vector<4xf32> to vector<1x4xf32>
    %c0_97 = arith.constant 0 : index
    %c0_98 = arith.constant 0 : index
    %c0_99 = arith.constant 0 : index
    %35 = vector.load %arg5[%c0_97, %c0_98, %c0_99] : memref<1x2x4xf32, #tpu.memory_space<vmem>>, vector<1x1x4xf32>
    %36 = vector.shape_cast %35 : vector<1x1x4xf32> to vector<1x4xf32>
    %37 = vector.shape_cast %34 : vector<1x4xf32> to vector<1x1x4xf32>
    tpu.vector_store %arg5[%c0_97, %c0_98, %c0_99], %37 {strides = array<i32>} : memref<1x2x4xf32, #tpu.memory_space<vmem>>, vector<1x1x4xf32>,
    %38 = arith.mulf %30, %30 : vector<256x4xf32>
    %cst_100 = arith.constant dense<0.000000e+00> : vector<4xf32>
    %39 = vector.multi_reduction <add>, %38, %cst_100 [0] : vector<256x4xf32> to vector<4xf32>
    %40 = vector.shape_cast %39 : vector<4xf32> to vector<1x4xf32>
    %c0_101 = arith.constant 0 : index
    %c1_102 = arith.constant 1 : index
    %c0_103 = arith.constant 0 : index
    %41 = vector.load %arg5[%c0_101, %c1_102, %c0_103] : memref<1x2x4xf32, #tpu.memory_space<vmem>>, vector<1x1x4xf32>
    %42 = vector.shape_cast %41 : vector<1x1x4xf32> to vector<1x4xf32>
    %43 = vector.shape_cast %40 : vector<1x4xf32> to vector<1x1x4xf32>
    tpu.vector_store %arg5[%c0_101, %c1_102, %c0_103], %43 {strides = array<i32>} : memref<1x2x4xf32, #tpu.memory_space<vmem>>, vector<1x1x4xf32>,
    return
  }
  func.func @transform_0(%arg0: i32) -> (i32, i32, i32, i32) {
    %c0_i32 = arith.constant 0 : i32
    %c0_i32_0 = arith.constant 0 : i32
    %c0_i32_1 = arith.constant 0 : i32
    %c0_i32_2 = arith.constant 0 : i32
    return %arg0, %c0_i32, %c0_i32_0, %c0_i32_1 : i32, i32, i32, i32
  }
  func.func @transform_1(%arg0: i32) -> (i32, i32) {
    %c0_i32 = arith.constant 0 : i32
    %c0_i32_0 = arith.constant 0 : i32
    %c0_i32_1 = arith.constant 0 : i32
    return %c0_i32, %c0_i32_0 : i32, i32
  }
  func.func @transform_2(%arg0: i32) -> (i32, i32) {
    %c0_i32 = arith.constant 0 : i32
    %c0_i32_0 = arith.constant 0 : i32
    %c0_i32_1 = arith.constant 0 : i32
    return %c0_i32, %c0_i32_0 : i32, i32
  }
  func.func @transform_3(%arg0: i32) -> (i32, i32, i32, i32) {
    %c0_i32 = arith.constant 0 : i32
    %c0_i32_0 = arith.constant 0 : i32
    %c0_i32_1 = arith.constant 0 : i32
    %c0_i32_2 = arith.constant 0 : i32
    return %arg0, %c0_i32, %c0_i32_0, %c0_i32_1 : i32, i32, i32, i32
  }
  func.func @transform_4(%arg0: i32) -> (i32, i32, i32) {
    %c0_i32 = arith.constant 0 : i32
    %c0_i32_0 = arith.constant 0 : i32
    %c0_i32_1 = arith.constant 0 : i32
    return %arg0, %c0_i32, %c0_i32_0 : i32, i32, i32
  }
}

</mosaic_0001>

<llo_original>
// kernel: tpu_custom_call.1
$region0: #{tpu_custom_call.1}
  #allocation0 [shape = 'u32[]', space=smem, size = 0x4, offset = 0x4, fixed_abs, tag = 'smem constant byte address 0x4 - core index']
  #allocation1 [shape = 'u32[144,128]{1,0:T(1,128)}', space=vmem, size = 0x12000, scoped, tag = 'internal scratch']
  #allocation2 [shape = 'bf16[1,18,18,4]{3,2,1,0:T(8,128)(2,1)}', space=vmem, size = 0x1b000, scoped, tag = 'scratch operand']
  #allocation3 [shape = 'bf16[1,16,16,36]{3,2,1,0:T(16,128)(2,1)}', space=vmem, size = 0x10000, scoped, tag = 'scratch operand']
  %s0 = inlined_call_operand.vmem [shape: f32[2,16,16,4], index: 0, kind: input, shape index: {}]
  %s1 = inlined_call_operand.vmem [shape: bf16[36,4], index: 1, kind: input, shape index: {}]
  %s2 = inlined_call_operand.vmem [shape: f32[2,4], index: 2, kind: input, shape index: {}]
  %s3 = inlined_call_operand.vmem [shape: f32[2,16,16,4], index: 3, kind: output, shape index: {0}]
  %s4 = inlined_call_operand.hbm [shape: f32[2,2,4], index: 4, kind: output, shape index: {1}]
  %5 = xla_tuple %s3, %s4
  %s6 = sld [smem:[#allocation0]]
  $region53: #{tpu_custom_call.1} parent=0
    _
  %s8 = ssub.s32 1, %s6
  %s9 = scalar_select 0, %s8, %s6
  $region1: #{tpu_custom_call.1} parent=0
    #allocation4 [shape = 'u8[2048]{0}', space=vmem, size = 0x800, scoped, tag = 'output window, operand 1']
    #allocation5 [shape = 's32[2]{0}', space=sflag, size = 0x8, scoped, tag = 'scoped memory for tpu_custom_call.1']
    %10 = vsyncpa [#allocation5], 0
    %s11 = scalar_lea.sflag [#allocation5], 1
    %12 = vsyncpa %s11, 0
    loop: start=0, step=1, limit=4
    $region2: #{tpu_custom_call.1} parent=1 // loop_pre_header
      _
    $region3: #{tpu_custom_call.1} parent=1 // loop_header
      %s14 = sphi 0, %s18
      %p15 = scmp.ge.s32.totalorder %s14, 4
      %s24 = sphi 0, %s26
      %s27 = sphi 0, %s24
      %s28 = sphi 0, %s27
      %s44 = sphi 0, %s28
      %s48 = sphi 0, %s48
      %s50 = sphi 0, %s48
      %s51 = sphi 0, %s50
      %s65 = sphi 0, %s51
      %s69 = sphi 0, %s69
      %s71 = sphi 0, %s69
      %s72 = sphi 0, %s71
      %s86 = sphi 0, %s72
      %s92 = sphi 0, %s94
      %s95 = sphi 0, %s92
      %s96 = sphi 0, %s95
      %s112 = sphi 0, %s96
      %s118 = sphi 0, %s120
      %s121 = sphi 0, %s118
      %s122 = sphi 0, %s121
      %s138 = sphi 0, %s122
    $region4: #{tpu_custom_call.1} parent=1 // loop_header_branch
      %17 = sbr.rel (%p15) target = $region8
    $region5: #{tpu_custom_call.1} parent=1 // loop_body
      %s19 = ssub.s32 %s14, 1
      %s20 = ssub.s32 %s14, 2
      %s21 = sadd.s32 %s14, 1
      %s22 = ssub.s32 %s14, %s21
      %p23 = scmp.eq.s32.totalorder %s22, 0
      %s25 = sadd.s32 %s24, 1
      %s26 = scalar_select %p23, %s24, %s25
      %p29 = pneg %p23
      %p30 = scmp.eq.s32.totalorder %s14, 1
      %p31 = por %p29, %p30
      %p32 = scmp.ne.s32.totalorder %s24, %s27
      %p33 = scmp.eq.s32.totalorder %s14, 0
      %p34 = por %p32, %p33
      %p35 = scmp.ne.s32.totalorder %s24, %s27
      %p36 = scmp.eq.s32.totalorder %s19, 1
      %p37 = por %p35, %p36
      %p38 = scmp.ne.s32.totalorder %s27, %s28
      %p39 = scmp.eq.s32.totalorder %s19, 0
      %p40 = por %p38, %p39
      %p41 = scmp.ne.s32.totalorder %s27, %s28
      %p42 = scmp.eq.s32.totalorder %s20, 1
      %p43 = por %p41, %p42
      %p45 = scmp.ne.s32.totalorder %s28, %s44
      %p46 = scmp.eq.s32.totalorder %s20, 0
      %p47 = por %p45, %p46
      %s49 = sadd.s32 %s48, 1
      %p52 = scmp.eq.s32.totalorder %s14, 1
      %p53 = scmp.ne.s32.totalorder %s48, %s50
      %p54 = scmp.eq.s32.totalorder %s14, 0
      %p55 = por %p53, %p54
      %p56 = scmp.ne.s32.totalorder %s48, %s50
      %p57 = scmp.eq.s32.totalorder %s19, 1
      %p58 = por %p56, %p57
      %p59 = scmp.ne.s32.totalorder %s50, %s51
      %p60 = scmp.eq.s32.totalorder %s19, 0
      %p61 = por %p59, %p60
      %p62 = scmp.ne.s32.totalorder %s50, %s51
      %p63 = scmp.eq.s32.totalorder %s20, 1
      %p64 = por %p62, %p63
      %p66 = scmp.ne.s32.totalorder %s51, %s65
      %p67 = scmp.eq.s32.totalorder %s20, 0
      %p68 = por %p66, %p67
      %s70 = sadd.s32 %s69, 1
      %p73 = scmp.eq.s32.totalorder %s14, 1
      %p74 = scmp.ne.s32.totalorder %s69, %s71
      %p75 = scmp.eq.s32.totalorder %s14, 0
      %p76 = por %p74, %p75
      %p77 = scmp.ne.s32.totalorder %s69, %s71
      %p78 = scmp.eq.s32.totalorder %s19, 1
      %p79 = por %p77, %p78
      %p80 = scmp.ne.s32.totalorder %s71, %s72
      %p81 = scmp.eq.s32.totalorder %s19, 0
      %p82 = por %p80, %p81
      %p83 = scmp.ne.s32.totalorder %s71, %s72
      %p84 = scmp.eq.s32.totalorder %s20, 1
      %p85 = por %p83, %p84
      %p87 = scmp.ne.s32.totalorder %s72, %s86
      %p88 = scmp.eq.s32.totalorder %s20, 0
      %p89 = por %p87, %p88
      %s90 = ssub.s32 %s14, %s21
      %p91 = scmp.eq.s32.totalorder %s90, 0
      %s93 = sadd.s32 %s92, 1
      %s94 = scalar_select %p91, %s92, %s93
      %p97 = pneg %p91
      %p98 = scmp.eq.s32.totalorder %s14, 1
      %p99 = por %p97, %p98
      %p100 = scmp.ne.s32.totalorder %s92, %s95
      %p101 = scmp.eq.s32.totalorder %s14, 0
      %p102 = por %p100, %p101
      %p103 = scmp.ne.s32.totalorder %s92, %s95
      %p104 = scmp.eq.s32.totalorder %s19, 1
      %p105 = por %p103, %p104
      %p106 = scmp.ne.s32.totalorder %s95, %s96
      %p107 = scmp.eq.s32.totalorder %s19, 0
      %p108 = por %p106, %p107
      %p109 = scmp.ne.s32.totalorder %s95, %s96
      %p110 = scmp.eq.s32.totalorder %s20, 1
      %p111 = por %p109, %p110
      %p113 = scmp.ne.s32.totalorder %s96, %s112
      %p114 = scmp.eq.s32.totalorder %s20, 0
      %p115 = por %p113, %p114
      %s116 = ssub.s32 %s14, %s21
      %p117 = scmp.eq.s32.totalorder %s116, 0
      %s119 = sadd.s32 %s118, 1
      %s120 = scalar_select %p117, %s118, %s119
      %p123 = pneg %p117
      %p124 = scmp.eq.s32.totalorder %s14, 1
      %p125 = por %p123, %p124
      %p126 = scmp.ne.s32.totalorder %s118, %s121
      %p127 = scmp.eq.s32.totalorder %s14, 0
      %p128 = por %p126, %p127
      %p129 = scmp.ne.s32.totalorder %s118, %s121
      %p130 = scmp.eq.s32.totalorder %s19, 1
      %p131 = por %p129, %p130
      %p132 = scmp.ne.s32.totalorder %s121, %s122
      %p133 = scmp.eq.s32.totalorder %s19, 0
      %p134 = por %p132, %p133
      %p135 = scmp.ne.s32.totalorder %s121, %s122
      %p136 = scmp.eq.s32.totalorder %s20, 1
      %p137 = por %p135, %p136
      %p139 = scmp.ne.s32.totalorder %s122, %s138
      %p140 = scmp.eq.s32.totalorder %s20, 0
      %p141 = por %p139, %p140
      %p142 = scmp.le.s32.totalorder 1, %s14
      %p143 = scmp.lt.s32.totalorder %s14, 3
      %p144 = pnand %p142, %p143
      %p145 = pneg %p144
      // Predicated region
      $region9: #{tpu_custom_call.1} parent=5 // pred_check
        _
      $region10: #{tpu_custom_call.1} parent=5 // pred_check_branch
        %147 = sbr.rel (%p144) target = $region12
      $region11: #{tpu_custom_call.1} parent=5 // pred_region
        %s148 = ssub.s32 %s14, 1
        // Predicated region
        $region13: #{tpu_custom_call.1} parent=11 // pred_check
          %p149 = pneg %p61
        $region14: #{tpu_custom_call.1} parent=11 // pred_check_branch
          %151 = sbr.rel (%p149) target = $region16
        $region15: #{tpu_custom_call.1} parent=11 // pred_region
          _
        $region16: #{tpu_custom_call.1} parent=11 // pred_fallthru
          _
        // Predicated region
        $region17: #{tpu_custom_call.1} parent=11 // pred_check
          %p152 = pneg %p82
        $region18: #{tpu_custom_call.1} parent=11 // pred_check_branch
          %154 = sbr.rel (%p152) target = $region20
        $region19: #{tpu_custom_call.1} parent=11 // pred_region
          _
        $region20: #{tpu_custom_call.1} parent=11 // pred_fallthru
          _
      $region12: #{tpu_custom_call.1} parent=5 // pred_fallthru
        _
      %p155 = scmp.lt.s32.totalorder %s14, 2
      // Predicated region
      $region21: #{tpu_custom_call.1} parent=5 // pred_check
        %p156 = pneg %p155
      $region22: #{tpu_custom_call.1} parent=5 // pred_check_branch
        %158 = sbr.rel (%p156) target = $region24
      $region23: #{tpu_custom_call.1} parent=5 // pred_region
        // Predicated region
        $region25: #{tpu_custom_call.1} parent=23 // pred_check
          %p159 = pneg %p34
        $region26: #{tpu_custom_call.1} parent=23 // pred_check_branch
          %161 = sbr.rel (%p159) target = $region28
        $region27: #{tpu_custom_call.1} parent=23 // pred_region
          %p162 = scmp.lt.s32.totalorder %s14, 1
          %s163 = scalar_select %p162, %s14, 1
          %s164 = smul.addr %s163, 32
          %s165 = smul.addr %s164, 8
          %s166 = scalar_lea.vmem %s0, %s165
        $region28: #{tpu_custom_call.1} parent=23 // pred_fallthru
          _
      $region24: #{tpu_custom_call.1} parent=5 // pred_fallthru
        _
      %p167 = scmp.le.s32.totalorder 1, %s14
      %p168 = scmp.lt.s32.totalorder %s14, 3
      %p169 = pnand %p167, %p168
      %p170 = pneg %p169
      // Predicated region
      $region29: #{tpu_custom_call.1} parent=5 // pred_check
        _
      $region30: #{tpu_custom_call.1} parent=5 // pred_check_branch
        %172 = sbr.rel (%p169) target = $region32
      $region31: #{tpu_custom_call.1} parent=5 // pred_region
        %s173 = ssub.s32 %s14, 1
        %p174 = scmp.lt.s32.totalorder %s19, 1
        %s175 = scalar_select %p174, %s19, 1
        %s176 = smul.addr %s175, 32
        %s177 = smul.addr %s176, 8
        %s178 = scalar_lea.vmem %s0, %s177
        %p179 = pneg %p40
        %p180 = pneg %p37
        %p181 = pneg %p61
        %p182 = pneg %p58
        %p183 = pneg %p82
        %p184 = pneg %p79
        %p185 = pneg %p108
        %p186 = pneg %p105
        %p187 = scmp.lt.s32.totalorder %s19, 1
        %s188 = scalar_select %p187, %s19, 1
        %s189 = smul.addr %s188, 32
        %s190 = smul.addr %s189, 8
        %s191 = scalar_lea.vmem %s3, %s190
        %p192 = pneg %p134
        %p193 = pneg %p131
        %s194 = sand.u32 %s121, 1
        %s195 = scalar_lea.sflag [#allocation5], %s194
        %s196 = sand.u32 %s121, 1
        %s197 = smul.addr %s196, 2
        %s198 = scalar_lea.vmem [#allocation4], %s197
        %p199 = scmp.lt.s32.totalorder %s19, 1
        %s200 = scalar_select %p199, %s19, 1
        %s201 = smul.addr %s200, 32
        %s202 = smul.addr %s201, 8
        %s203 = scalar_lea.vmem %s0, %s202
        %p204 = scmp.lt.s32.totalorder %s19, 1
        %s205 = scalar_select %p204, %s19, 1
        %s206 = smul.addr %s205, 32
        %s207 = smul.addr %s206, 8
        %s208 = scalar_lea.vmem %s3, %s207
        %v210 = vld [vmem:[%s203] sm:$0xff]
        %v211 = vld [vmem:[%s203 + $0x8] sm:$0xff]
        %v212 = vld [vmem:[%s203 + $0x10] sm:$0xff]
        %v213 = vld [vmem:[%s203 + $0x18] sm:$0xff]
        %v214 = vld [vmem:[%s203 + $0x20] sm:$0xff]
        %v215 = vld [vmem:[%s203 + $0x28] sm:$0xff]
        %v216 = vld [vmem:[%s203 + $0x30] sm:$0xff]
        %v217 = vld [vmem:[%s203 + $0x38] sm:$0xff]
        %v218 = vld [vmem:[%s203 + $0x40] sm:$0xff]
        %v219 = vld [vmem:[%s203 + $0x48] sm:$0xff]
        %v220 = vld [vmem:[%s203 + $0x50] sm:$0xff]
        %v221 = vld [vmem:[%s203 + $0x58] sm:$0xff]
        %v222 = vld [vmem:[%s203 + $0x60] sm:$0xff]
        %v223 = vld [vmem:[%s203 + $0x68] sm:$0xff]
        %v224 = vld [vmem:[%s203 + $0x70] sm:$0xff]
        %v225 = vld [vmem:[%s203 + $0x78] sm:$0xff]
        %v226 = vld [vmem:[%s203 + $0x80] sm:$0xff]
        %v227 = vld [vmem:[%s203 + $0x88] sm:$0xff]
        %v228 = vld [vmem:[%s203 + $0x90] sm:$0xff]
        %v229 = vld [vmem:[%s203 + $0x98] sm:$0xff]
        %v230 = vld [vmem:[%s203 + $0xa0] sm:$0xff]
        %v231 = vld [vmem:[%s203 + $0xa8] sm:$0xff]
        %v232 = vld [vmem:[%s203 + $0xb0] sm:$0xff]
        %v233 = vld [vmem:[%s203 + $0xb8] sm:$0xff]
        %v234 = vld [vmem:[%s203 + $0xc0] sm:$0xff]
        %v235 = vld [vmem:[%s203 + $0xc8] sm:$0xff]
        %v236 = vld [vmem:[%s203 + $0xd0] sm:$0xff]
        %v237 = vld [vmem:[%s203 + $0xd8] sm:$0xff]
        %v238 = vld [vmem:[%s203 + $0xe0] sm:$0xff]
        %v239 = vld [vmem:[%s203 + $0xe8] sm:$0xff]
        %v240 = vld [vmem:[%s203 + $0xf0] sm:$0xff]
        %v241 = vld [vmem:[%s203 + $0xf8] sm:$0xff]
        %v242 = vpack.c.bf16 %v211, %v210
        %v243 = vpack.c.bf16 %v213, %v212
        %v244 = vpack.c.bf16 %v215, %v214
        %v245 = vpack.c.bf16 %v217, %v216
        %v246 = vpack.c.bf16 %v219, %v218
        %v247 = vpack.c.bf16 %v221, %v220
        %v248 = vpack.c.bf16 %v223, %v222
        %v249 = vpack.c.bf16 %v225, %v224
        %v250 = vpack.c.bf16 %v227, %v226
        %v251 = vpack.c.bf16 %v229, %v228
        %v252 = vpack.c.bf16 %v231, %v230
        %v253 = vpack.c.bf16 %v233, %v232
        %v254 = vpack.c.bf16 %v235, %v234
        %v255 = vpack.c.bf16 %v237, %v236
        %v256 = vpack.c.bf16 %v239, %v238
        %v257 = vpack.c.bf16 %v241, %v240
        %vm258 = vcmask 27648
        %259 = vst.msk [vmem:[#allocation2] sm:$0xf] %vm258, 0
        %260 = vst.msk [vmem:[#allocation2 + $0x4] sm:$0xf] %vm258, 0
        %vm261 = vcmask 24576
        %262 = vst.msk [vmem:[#allocation2 + $0x8] sm:$0x1] %vm261, 0
        %s263 = scalar_lea.vmem [#allocation2], 204
        %264 = vst.msk [vmem:[%s263] sm:$0xf] %vm258, 0
        %265 = vst.msk [vmem:[%s263 + $0x4] sm:$0xf] %vm258, 0
        %266 = vst.msk [vmem:[%s263 + $0x8] sm:$0x1] %vm261, 0
        %s267 = scalar_lea.vmem [#allocation2], 12
        %vm268 = vcmask 24576
        %vm269 = vsmask.f32 256
        %vm270 = vmand %vm268, %vm269
        %v271 = vld [vmem:[%s267] sm:$0x1]
        %v272 = vsel %vm270, 0, %v271
        %273 = vst [vmem:[%s267] sm:$0x1] %v272
        %v274 = vld [vmem:[%s267 + $0xc] sm:$0x1]
        %v275 = vsel %vm270, 0, %v274
        %276 = vst [vmem:[%s267 + $0xc] sm:$0x1] %v275
        %v277 = vld [vmem:[%s267 + $0x18] sm:$0x1]
        %v278 = vsel %vm270, 0, %v277
        %279 = vst [vmem:[%s267 + $0x18] sm:$0x1] %v278
        %v280 = vld [vmem:[%s267 + $0x24] sm:$0x1]
        %v281 = vsel %vm270, 0, %v280
        %282 = vst [vmem:[%s267 + $0x24] sm:$0x1] %v281
        %v283 = vld [vmem:[%s267 + $0x30] sm:$0x1]
        %v284 = vsel %vm270, 0, %v283
        %285 = vst [vmem:[%s267 + $0x30] sm:$0x1] %v284
        %v286 = vld [vmem:[%s267 + $0x3c] sm:$0x1]
        %v287 = vsel %vm270, 0, %v286
        %288 = vst [vmem:[%s267 + $0x3c] sm:$0x1] %v287
        %v289 = vld [vmem:[%s267 + $0x48] sm:$0x1]
        %v290 = vsel %vm270, 0, %v289
        %291 = vst [vmem:[%s267 + $0x48] sm:$0x1] %v290
        %v292 = vld [vmem:[%s267 + $0x54] sm:$0x1]
        %v293 = vsel %vm270, 0, %v292
        %294 = vst [vmem:[%s267 + $0x54] sm:$0x1] %v293
        %v295 = vld [vmem:[%s267 + $0x60] sm:$0x1]
        %v296 = vsel %vm270, 0, %v295
        %297 = vst [vmem:[%s267 + $0x60] sm:$0x1] %v296
        %v298 = vld [vmem:[%s267 + $0x6c] sm:$0x1]
        %v299 = vsel %vm270, 0, %v298
        %300 = vst [vmem:[%s267 + $0x6c] sm:$0x1] %v299
        %v301 = vld [vmem:[%s267 + $0x78] sm:$0x1]
        %v302 = vsel %vm270, 0, %v301
        %303 = vst [vmem:[%s267 + $0x78] sm:$0x1] %v302
        %v304 = vld [vmem:[%s267 + $0x84] sm:$0x1]
        %v305 = vsel %vm270, 0, %v304
        %306 = vst [vmem:[%s267 + $0x84] sm:$0x1] %v305
        %v307 = vld [vmem:[%s267 + $0x90] sm:$0x1]
        %v308 = vsel %vm270, 0, %v307
        %309 = vst [vmem:[%s267 + $0x90] sm:$0x1] %v308
        %v310 = vld [vmem:[%s267 + $0x9c] sm:$0x1]
        %v311 = vsel %vm270, 0, %v310
        %312 = vst [vmem:[%s267 + $0x9c] sm:$0x1] %v311
        %v313 = vld [vmem:[%s267 + $0xa8] sm:$0x1]
        %v314 = vsel %vm270, 0, %v313
        %315 = vst [vmem:[%s267 + $0xa8] sm:$0x1] %v314
        %v316 = vld [vmem:[%s267 + $0xb4] sm:$0x1]
        %v317 = vsel %vm270, 0, %v316
        %318 = vst [vmem:[%s267 + $0xb4] sm:$0x1] %v317
        %vm319 = vsmask.f32 7938
        %vm320 = vmand %vm268, %vm319
        %v321 = vld [vmem:[%s267 + $0x8] sm:$0x1]
        %v322 = vsel %vm320, 0, %v321
        %323 = vst [vmem:[%s267 + $0x8] sm:$0x1] %v322
        %v324 = vld [vmem:[%s267 + $0x14] sm:$0x1]
        %v325 = vsel %vm320, 0, %v324
        %326 = vst [vmem:[%s267 + $0x14] sm:$0x1] %v325
        %v327 = vld [vmem:[%s267 + $0x20] sm:$0x1]
        %v328 = vsel %vm320, 0, %v327
        %329 = vst [vmem:[%s267 + $0x20] sm:$0x1] %v328
        %v330 = vld [vmem:[%s267 + $0x2c] sm:$0x1]
        %v331 = vsel %vm320, 0, %v330
        %332 = vst [vmem:[%s267 + $0x2c] sm:$0x1] %v331
        %v333 = vld [vmem:[%s267 + $0x38] sm:$0x1]
        %v334 = vsel %vm320, 0, %v333
        %335 = vst [vmem:[%s267 + $0x38] sm:$0x1] %v334
        %v336 = vld [vmem:[%s267 + $0x44] sm:$0x1]
        %v337 = vsel %vm320, 0, %v336
        %338 = vst [vmem:[%s267 + $0x44] sm:$0x1] %v337
        %v339 = vld [vmem:[%s267 + $0x50] sm:$0x1]
        %v340 = vsel %vm320, 0, %v339
        %341 = vst [vmem:[%s267 + $0x50] sm:$0x1] %v340
        %v342 = vld [vmem:[%s267 + $0x5c] sm:$0x1]
        %v343 = vsel %vm320, 0, %v342
        %344 = vst [vmem:[%s267 + $0x5c] sm:$0x1] %v343
        %v345 = vld [vmem:[%s267 + $0x68] sm:$0x1]
        %v346 = vsel %vm320, 0, %v345
        %347 = vst [vmem:[%s267 + $0x68] sm:$0x1] %v346
        %v348 = vld [vmem:[%s267 + $0x74] sm:$0x1]
        %v349 = vsel %vm320, 0, %v348
        %350 = vst [vmem:[%s267 + $0x74] sm:$0x1] %v349
        %v351 = vld [vmem:[%s267 + $0x80] sm:$0x1]
        %v352 = vsel %vm320, 0, %v351
        %353 = vst [vmem:[%s267 + $0x80] sm:$0x1] %v352
        %v354 = vld [vmem:[%s267 + $0x8c] sm:$0x1]
        %v355 = vsel %vm320, 0, %v354
        %356 = vst [vmem:[%s267 + $0x8c] sm:$0x1] %v355
        %v357 = vld [vmem:[%s267 + $0x98] sm:$0x1]
        %v358 = vsel %vm320, 0, %v357
        %359 = vst [vmem:[%s267 + $0x98] sm:$0x1] %v358
        %v360 = vld [vmem:[%s267 + $0xa4] sm:$0x1]
        %v361 = vsel %vm320, 0, %v360
        %362 = vst [vmem:[%s267 + $0xa4] sm:$0x1] %v361
        %v363 = vld [vmem:[%s267 + $0xb0] sm:$0x1]
        %v364 = vsel %vm320, 0, %v363
        %365 = vst [vmem:[%s267 + $0xb0] sm:$0x1] %v364
        %v366 = vld [vmem:[%s267 + $0xbc] sm:$0x1]
        %v367 = vsel %vm320, 0, %v366
        %368 = vst [vmem:[%s267 + $0xbc] sm:$0x1] %v367
        %v385 = vunpack.c.l.b16 %v242
        %v386 = vunpack.c.h.b16 %v242
        %v387 = vunpack.c.l.b16 %v243
        %v388 = vunpack.c.h.b16 %v243
        %v389 = vunpack.c.l.b16 %v244
        %v390 = vunpack.c.h.b16 %v244
        %v391 = vunpack.c.l.b16 %v245
        %v392 = vunpack.c.h.b16 %v245
        %v393 = vunpack.c.l.b16 %v246
        %v394 = vunpack.c.h.b16 %v246
        %v395 = vunpack.c.l.b16 %v247
        %v396 = vunpack.c.h.b16 %v247
        %v397 = vunpack.c.l.b16 %v248
        %v398 = vunpack.c.h.b16 %v248
        %v399 = vunpack.c.l.b16 %v249
        %v400 = vunpack.c.h.b16 %v249
        %v401 = vunpack.c.l.b16 %v250
        %v402 = vunpack.c.h.b16 %v250
        %v403 = vunpack.c.l.b16 %v251
        %v404 = vunpack.c.h.b16 %v251
        %v405 = vunpack.c.l.b16 %v252
        %v406 = vunpack.c.h.b16 %v252
        %v407 = vunpack.c.l.b16 %v253
        %v408 = vunpack.c.h.b16 %v253
        %v409 = vunpack.c.l.b16 %v254
        %v410 = vunpack.c.h.b16 %v254
        %v411 = vunpack.c.l.b16 %v255
        %v412 = vunpack.c.h.b16 %v255
        %v413 = vunpack.c.l.b16 %v256
        %v414 = vunpack.c.h.b16 %v256
        %v415 = vunpack.c.l.b16 %v257
        %v416 = vunpack.c.h.b16 %v257
        %v417 = vpack.c.b16 %v385, %v385
        %v418 = vpack.c.b16 %v386, %v386
        %v419 = vpack.c.b16 %v387, %v387
        %v420 = vpack.c.b16 %v388, %v388
        %v421 = vpack.c.b16 %v389, %v389
        %v422 = vpack.c.b16 %v390, %v390
        %v423 = vpack.c.b16 %v391, %v391
        %v424 = vpack.c.b16 %v392, %v392
        %v425 = vpack.c.b16 %v393, %v393
        %v426 = vpack.c.b16 %v394, %v394
        %v427 = vpack.c.b16 %v395, %v395
        %v428 = vpack.c.b16 %v396, %v396
        %v429 = vpack.c.b16 %v397, %v397
        %v430 = vpack.c.b16 %v398, %v398
        %v431 = vpack.c.b16 %v399, %v399
        %v432 = vpack.c.b16 %v400, %v400
        %v433 = vpack.c.b16 %v401, %v401
        %v434 = vpack.c.b16 %v402, %v402
        %v435 = vpack.c.b16 %v403, %v403
        %v436 = vpack.c.b16 %v404, %v404
        %v437 = vpack.c.b16 %v405, %v405
        %v438 = vpack.c.b16 %v406, %v406
        %v439 = vpack.c.b16 %v407, %v407
        %v440 = vpack.c.b16 %v408, %v408
        %v441 = vpack.c.b16 %v409, %v409
        %v442 = vpack.c.b16 %v410, %v410
        %v443 = vpack.c.b16 %v411, %v411
        %v444 = vpack.c.b16 %v412, %v412
        %v445 = vpack.c.b16 %v413, %v413
        %v446 = vpack.c.b16 %v414, %v414
        %v447 = vpack.c.b16 %v415, %v415
        %v448 = vpack.c.b16 %v416, %v416
        %vm449 = vsmask.f32 4368
        %vm450 = vmor %vm269, %vm449
        %v452 = vshrl.u32 %v417, 16
        %v454 = vrot.slane %v452, 7
        %v455 = vshll.u32 %v417, 16
        %v457 = vor.u32 %v454, %v455
        %v458 = vrot.slane %v454, 4
        %v460 = vshrl.u32 %v418, 16
        %v462 = vrot.slane %v460, 7
        %v463 = vshll.u32 %v418, 16
        %v465 = vor.u32 %v462, %v463
        %v466 = vsel %vm450, %v458, %v465
        %v467 = vrot.slane %v462, 4
        %v469 = vshrl.u32 %v419, 16
        %v471 = vrot.slane %v469, 7
        %v472 = vshll.u32 %v419, 16
        %v474 = vor.u32 %v471, %v472
        %v475 = vrot.slane %v471, 4
        %v477 = vshrl.u32 %v420, 16
        %v479 = vrot.slane %v477, 7
        %v480 = vshll.u32 %v420, 16
        %v482 = vor.u32 %v479, %v480
        %v483 = vsel %vm450, %v475, %v482
        %v484 = vrot.slane %v479, 4
        %v486 = vshrl.u32 %v421, 16
        %v488 = vrot.slane %v486, 7
        %v489 = vshll.u32 %v421, 16
        %v491 = vor.u32 %v488, %v489
        %v492 = vrot.slane %v488, 4
        %v494 = vshrl.u32 %v422, 16
        %v496 = vrot.slane %v494, 7
        %v497 = vshll.u32 %v422, 16
        %v499 = vor.u32 %v496, %v497
        %v500 = vsel %vm450, %v492, %v499
        %v501 = vrot.slane %v496, 4
        %v503 = vshrl.u32 %v423, 16
        %v505 = vrot.slane %v503, 7
        %v506 = vshll.u32 %v423, 16
        %v508 = vor.u32 %v505, %v506
        %v509 = vrot.slane %v505, 4
        %v511 = vshrl.u32 %v424, 16
        %v513 = vrot.slane %v511, 7
        %v514 = vshll.u32 %v424, 16
        %v516 = vor.u32 %v513, %v514
        %v517 = vsel %vm450, %v509, %v516
        %v518 = vrot.slane %v513, 4
        %v520 = vshrl.u32 %v425, 16
        %v522 = vrot.slane %v520, 7
        %v523 = vshll.u32 %v425, 16
        %v525 = vor.u32 %v522, %v523
        %v526 = vrot.slane %v522, 4
        %v528 = vshrl.u32 %v426, 16
        %v530 = vrot.slane %v528, 7
        %v531 = vshll.u32 %v426, 16
        %v533 = vor.u32 %v530, %v531
        %v534 = vsel %vm450, %v526, %v533
        %v535 = vrot.slane %v530, 4
        %v537 = vshrl.u32 %v427, 16
        %v539 = vrot.slane %v537, 7
        %v540 = vshll.u32 %v427, 16
        %v542 = vor.u32 %v539, %v540
        %v543 = vrot.slane %v539, 4
        %v545 = vshrl.u32 %v428, 16
        %v547 = vrot.slane %v545, 7
        %v548 = vshll.u32 %v428, 16
        %v550 = vor.u32 %v547, %v548
        %v551 = vsel %vm450, %v543, %v550
        %v552 = vrot.slane %v547, 4
        %v554 = vshrl.u32 %v429, 16
        %v556 = vrot.slane %v554, 7
        %v557 = vshll.u32 %v429, 16
        %v559 = vor.u32 %v556, %v557
        %v560 = vrot.slane %v556, 4
        %v562 = vshrl.u32 %v430, 16
        %v564 = vrot.slane %v562, 7
        %v565 = vshll.u32 %v430, 16
        %v567 = vor.u32 %v564, %v565
        %v568 = vsel %vm450, %v560, %v567
        %v569 = vrot.slane %v564, 4
        %v571 = vshrl.u32 %v431, 16
        %v573 = vrot.slane %v571, 7
        %v574 = vshll.u32 %v431, 16
        %v576 = vor.u32 %v573, %v574
        %v577 = vrot.slane %v573, 4
        %v579 = vshrl.u32 %v432, 16
        %v581 = vrot.slane %v579, 7
        %v582 = vshll.u32 %v432, 16
        %v584 = vor.u32 %v581, %v582
        %v585 = vsel %vm450, %v577, %v584
        %v586 = vrot.slane %v581, 4
        %v588 = vshrl.u32 %v433, 16
        %v590 = vrot.slane %v588, 7
        %v591 = vshll.u32 %v433, 16
        %v593 = vor.u32 %v590, %v591
        %v594 = vrot.slane %v590, 4
        %v596 = vshrl.u32 %v434, 16
        %v598 = vrot.slane %v596, 7
        %v599 = vshll.u32 %v434, 16
        %v601 = vor.u32 %v598, %v599
        %v602 = vsel %vm450, %v594, %v601
        %v603 = vrot.slane %v598, 4
        %v605 = vshrl.u32 %v435, 16
        %v607 = vrot.slane %v605, 7
        %v608 = vshll.u32 %v435, 16
        %v610 = vor.u32 %v607, %v608
        %v611 = vrot.slane %v607, 4
        %v613 = vshrl.u32 %v436, 16
        %v615 = vrot.slane %v613, 7
        %v616 = vshll.u32 %v436, 16
        %v618 = vor.u32 %v615, %v616
        %v619 = vsel %vm450, %v611, %v618
        %v620 = vrot.slane %v615, 4
        %v622 = vshrl.u32 %v437, 16
        %v624 = vrot.slane %v622, 7
        %v625 = vshll.u32 %v437, 16
        %v627 = vor.u32 %v624, %v625
        %v628 = vrot.slane %v624, 4
        %v630 = vshrl.u32 %v438, 16
        %v632 = vrot.slane %v630, 7
        %v633 = vshll.u32 %v438, 16
        %v635 = vor.u32 %v632, %v633
        %v636 = vsel %vm450, %v628, %v635
        %v637 = vrot.slane %v632, 4
        %v639 = vshrl.u32 %v439, 16
        %v641 = vrot.slane %v639, 7
        %v642 = vshll.u32 %v439, 16
        %v644 = vor.u32 %v641, %v642
        %v645 = vrot.slane %v641, 4
        %v647 = vshrl.u32 %v440, 16
        %v649 = vrot.slane %v647, 7
        %v650 = vshll.u32 %v440, 16
        %v652 = vor.u32 %v649, %v650
        %v653 = vsel %vm450, %v645, %v652
        %v654 = vrot.slane %v649, 4
        %v656 = vshrl.u32 %v441, 16
        %v658 = vrot.slane %v656, 7
        %v659 = vshll.u32 %v441, 16
        %v661 = vor.u32 %v658, %v659
        %v662 = vrot.slane %v658, 4
        %v664 = vshrl.u32 %v442, 16
        %v666 = vrot.slane %v664, 7
        %v667 = vshll.u32 %v442, 16
        %v669 = vor.u32 %v666, %v667
        %v670 = vsel %vm450, %v662, %v669
        %v671 = vrot.slane %v666, 4
        %v673 = vshrl.u32 %v443, 16
        %v675 = vrot.slane %v673, 7
        %v676 = vshll.u32 %v443, 16
        %v678 = vor.u32 %v675, %v676
        %v679 = vrot.slane %v675, 4
        %v681 = vshrl.u32 %v444, 16
        %v683 = vrot.slane %v681, 7
        %v684 = vshll.u32 %v444, 16
        %v686 = vor.u32 %v683, %v684
        %v687 = vsel %vm450, %v679, %v686
        %v688 = vrot.slane %v683, 4
        %v690 = vshrl.u32 %v445, 16
        %v692 = vrot.slane %v690, 7
        %v693 = vshll.u32 %v445, 16
        %v695 = vor.u32 %v692, %v693
        %v696 = vrot.slane %v692, 4
        %v698 = vshrl.u32 %v446, 16
        %v700 = vrot.slane %v698, 7
        %v701 = vshll.u32 %v446, 16
        %v703 = vor.u32 %v700, %v701
        %v704 = vsel %vm450, %v696, %v703
        %v705 = vrot.slane %v700, 4
        %v707 = vshrl.u32 %v447, 16
        %v709 = vrot.slane %v707, 7
        %v710 = vshll.u32 %v447, 16
        %v712 = vor.u32 %v709, %v710
        %v713 = vrot.slane %v709, 4
        %v715 = vshrl.u32 %v448, 16
        %v717 = vrot.slane %v715, 7
        %v718 = vshll.u32 %v448, 16
        %v720 = vor.u32 %v717, %v718
        %v721 = vsel %vm450, %v713, %v720
        %v722 = vrot.slane %v717, 4
        %vm771 = vcmask 27648
        %vm772 = vmand %vm771, %vm319
        %v773 = vld [vmem:[%s267] sm:$0xf]
        %v774 = vsel %vm772, %v457, %v773
        %775 = vst [vmem:[%s267] sm:$0xf] %v774
        %776 = vst.msk [vmem:[%s267 + $0x4] sm:$0xf] %vm258, %v466
        %v777 = vld [vmem:[%s267 + $0x8] sm:$0x1]
        %v778 = vsel %vm270, %v467, %v777
        %779 = vst [vmem:[%s267 + $0x8] sm:$0x1] %v778
        %v780 = vld [vmem:[%s267 + $0xc] sm:$0xf]
        %v781 = vsel %vm772, %v474, %v780
        %782 = vst [vmem:[%s267 + $0xc] sm:$0xf] %v781
        %783 = vst.msk [vmem:[%s267 + $0x10] sm:$0xf] %vm258, %v483
        %v784 = vld [vmem:[%s267 + $0x14] sm:$0x1]
        %v785 = vsel %vm270, %v484, %v784
        %786 = vst [vmem:[%s267 + $0x14] sm:$0x1] %v785
        %v787 = vld [vmem:[%s267 + $0x18] sm:$0xf]
        %v788 = vsel %vm772, %v491, %v787
        %789 = vst [vmem:[%s267 + $0x18] sm:$0xf] %v788
        %790 = vst.msk [vmem:[%s267 + $0x1c] sm:$0xf] %vm258, %v500
        %v791 = vld [vmem:[%s267 + $0x20] sm:$0x1]
        %v792 = vsel %vm270, %v501, %v791
        %793 = vst [vmem:[%s267 + $0x20] sm:$0x1] %v792
        %v794 = vld [vmem:[%s267 + $0x24] sm:$0xf]
        %v795 = vsel %vm772, %v508, %v794
        %796 = vst [vmem:[%s267 + $0x24] sm:$0xf] %v795
        %797 = vst.msk [vmem:[%s267 + $0x28] sm:$0xf] %vm258, %v517
        %v798 = vld [vmem:[%s267 + $0x2c] sm:$0x1]
        %v799 = vsel %vm270, %v518, %v798
        %800 = vst [vmem:[%s267 + $0x2c] sm:$0x1] %v799
        %v801 = vld [vmem:[%s267 + $0x30] sm:$0xf]
        %v802 = vsel %vm772, %v525, %v801
        %803 = vst [vmem:[%s267 + $0x30] sm:$0xf] %v802
        %804 = vst.msk [vmem:[%s267 + $0x34] sm:$0xf] %vm258, %v534
        %v805 = vld [vmem:[%s267 + $0x38] sm:$0x1]
        %v806 = vsel %vm270, %v535, %v805
        %807 = vst [vmem:[%s267 + $0x38] sm:$0x1] %v806
        %v808 = vld [vmem:[%s267 + $0x3c] sm:$0xf]
        %v809 = vsel %vm772, %v542, %v808
        %810 = vst [vmem:[%s267 + $0x3c] sm:$0xf] %v809
        %811 = vst.msk [vmem:[%s267 + $0x40] sm:$0xf] %vm258, %v551
        %v812 = vld [vmem:[%s267 + $0x44] sm:$0x1]
        %v813 = vsel %vm270, %v552, %v812
        %814 = vst [vmem:[%s267 + $0x44] sm:$0x1] %v813
        %v815 = vld [vmem:[%s267 + $0x48] sm:$0xf]
        %v816 = vsel %vm772, %v559, %v815
        %817 = vst [vmem:[%s267 + $0x48] sm:$0xf] %v816
        %818 = vst.msk [vmem:[%s267 + $0x4c] sm:$0xf] %vm258, %v568
        %v819 = vld [vmem:[%s267 + $0x50] sm:$0x1]
        %v820 = vsel %vm270, %v569, %v819
        %821 = vst [vmem:[%s267 + $0x50] sm:$0x1] %v820
        %v822 = vld [vmem:[%s267 + $0x54] sm:$0xf]
        %v823 = vsel %vm772, %v576, %v822
        %824 = vst [vmem:[%s267 + $0x54] sm:$0xf] %v823
        %825 = vst.msk [vmem:[%s267 + $0x58] sm:$0xf] %vm258, %v585
        %v826 = vld [vmem:[%s267 + $0x5c] sm:$0x1]
        %v827 = vsel %vm270, %v586, %v826
        %828 = vst [vmem:[%s267 + $0x5c] sm:$0x1] %v827
        %v829 = vld [vmem:[%s267 + $0x60] sm:$0xf]
        %v830 = vsel %vm772, %v593, %v829
        %831 = vst [vmem:[%s267 + $0x60] sm:$0xf] %v830
        %832 = vst.msk [vmem:[%s267 + $0x64] sm:$0xf] %vm258, %v602
        %v833 = vld [vmem:[%s267 + $0x68] sm:$0x1]
        %v834 = vsel %vm270, %v603, %v833
        %835 = vst [vmem:[%s267 + $0x68] sm:$0x1] %v834
        %v836 = vld [vmem:[%s267 + $0x6c] sm:$0xf]
        %v837 = vsel %vm772, %v610, %v836
        %838 = vst [vmem:[%s267 + $0x6c] sm:$0xf] %v837
        %839 = vst.msk [vmem:[%s267 + $0x70] sm:$0xf] %vm258, %v619
        %v840 = vld [vmem:[%s267 + $0x74] sm:$0x1]
        %v841 = vsel %vm270, %v620, %v840
        %842 = vst [vmem:[%s267 + $0x74] sm:$0x1] %v841
        %v843 = vld [vmem:[%s267 + $0x78] sm:$0xf]
        %v844 = vsel %vm772, %v627, %v843
        %845 = vst [vmem:[%s267 + $0x78] sm:$0xf] %v844
        %846 = vst.msk [vmem:[%s267 + $0x7c] sm:$0xf] %vm258, %v636
        %v847 = vld [vmem:[%s267 + $0x80] sm:$0x1]
        %v848 = vsel %vm270, %v637, %v847
        %849 = vst [vmem:[%s267 + $0x80] sm:$0x1] %v848
        %v850 = vld [vmem:[%s267 + $0x84] sm:$0xf]
        %v851 = vsel %vm772, %v644, %v850
        %852 = vst [vmem:[%s267 + $0x84] sm:$0xf] %v851
        %853 = vst.msk [vmem:[%s267 + $0x88] sm:$0xf] %vm258, %v653
        %v854 = vld [vmem:[%s267 + $0x8c] sm:$0x1]
        %v855 = vsel %vm270, %v654, %v854
        %856 = vst [vmem:[%s267 + $0x8c] sm:$0x1] %v855
        %v857 = vld [vmem:[%s267 + $0x90] sm:$0xf]
        %v858 = vsel %vm772, %v661, %v857
        %859 = vst [vmem:[%s267 + $0x90] sm:$0xf] %v858
        %860 = vst.msk [vmem:[%s267 + $0x94] sm:$0xf] %vm258, %v670
        %v861 = vld [vmem:[%s267 + $0x98] sm:$0x1]
        %v862 = vsel %vm270, %v671, %v861
        %863 = vst [vmem:[%s267 + $0x98] sm:$0x1] %v862
        %v864 = vld [vmem:[%s267 + $0x9c] sm:$0xf]
        %v865 = vsel %vm772, %v678, %v864
        %866 = vst [vmem:[%s267 + $0x9c] sm:$0xf] %v865
        %867 = vst.msk [vmem:[%s267 + $0xa0] sm:$0xf] %vm258, %v687
        %v868 = vld [vmem:[%s267 + $0xa4] sm:$0x1]
        %v869 = vsel %vm270, %v688, %v868
        %870 = vst [vmem:[%s267 + $0xa4] sm:$0x1] %v869
        %v871 = vld [vmem:[%s267 + $0xa8] sm:$0xf]
        %v872 = vsel %vm772, %v695, %v871
        %873 = vst [vmem:[%s267 + $0xa8] sm:$0xf] %v872
        %874 = vst.msk [vmem:[%s267 + $0xac] sm:$0xf] %vm258, %v704
        %v875 = vld [vmem:[%s267 + $0xb0] sm:$0x1]
        %v876 = vsel %vm270, %v705, %v875
        %877 = vst [vmem:[%s267 + $0xb0] sm:$0x1] %v876
        %v878 = vld [vmem:[%s267 + $0xb4] sm:$0xf]
        %v879 = vsel %vm772, %v712, %v878
        %880 = vst [vmem:[%s267 + $0xb4] sm:$0xf] %v879
        %881 = vst.msk [vmem:[%s267 + $0xb8] sm:$0xf] %vm258, %v721
        %v882 = vld [vmem:[%s267 + $0xbc] sm:$0x1]
        %v883 = vsel %vm270, %v722, %v882
        %884 = vst [vmem:[%s267 + $0xbc] sm:$0x1] %v883
        %v885 = vld [vmem:[#allocation2] sm:$0xf]
        %v886 = vld [vmem:[#allocation2 + $0x4] sm:$0xf]
        %v887 = vld [vmem:[#allocation2 + $0xc] sm:$0xf]
        %v888 = vld [vmem:[#allocation2 + $0x10] sm:$0xf]
        %v889 = vld [vmem:[#allocation2 + $0x18] sm:$0xf]
        %v890 = vld [vmem:[#allocation2 + $0x1c] sm:$0xf]
        %v891 = vld [vmem:[#allocation2 + $0x24] sm:$0xf]
        %v892 = vld [vmem:[#allocation2 + $0x28] sm:$0xf]
        %v893 = vld [vmem:[#allocation2 + $0x30] sm:$0xf]
        %v894 = vld [vmem:[#allocation2 + $0x34] sm:$0xf]
        %v895 = vld [vmem:[#allocation2 + $0x3c] sm:$0xf]
        %v896 = vld [vmem:[#allocation2 + $0x40] sm:$0xf]
        %v897 = vld [vmem:[#allocation2 + $0x48] sm:$0xf]
        %v898 = vld [vmem:[#allocation2 + $0x4c] sm:$0xf]
        %v899 = vld [vmem:[#allocation2 + $0x54] sm:$0xf]
        %v900 = vld [vmem:[#allocation2 + $0x58] sm:$0xf]
        %v901 = vld [vmem:[#allocation2 + $0x60] sm:$0xf]
        %v902 = vld [vmem:[#allocation2 + $0x64] sm:$0xf]
        %v903 = vld [vmem:[#allocation2 + $0x6c] sm:$0xf]
        %v904 = vld [vmem:[#allocation2 + $0x70] sm:$0xf]
        %v905 = vld [vmem:[#allocation2 + $0x78] sm:$0xf]
        %v906 = vld [vmem:[#allocation2 + $0x7c] sm:$0xf]
        %v907 = vld [vmem:[#allocation2 + $0x84] sm:$0xf]
        %v908 = vld [vmem:[#allocation2 + $0x88] sm:$0xf]
        %v909 = vld [vmem:[#allocation2 + $0x90] sm:$0xf]
        %v910 = vld [vmem:[#allocation2 + $0x94] sm:$0xf]
        %v911 = vld [vmem:[#allocation2 + $0x9c] sm:$0xf]
        %v912 = vld [vmem:[#allocation2 + $0xa0] sm:$0xf]
        %v913 = vld [vmem:[#allocation2 + $0xa8] sm:$0xf]
        %v914 = vld [vmem:[#allocation2 + $0xac] sm:$0xf]
        %v915 = vld [vmem:[#allocation2 + $0xb4] sm:$0xf]
        %v916 = vld [vmem:[#allocation2 + $0xb8] sm:$0xf]
        %v949 = vunpack.c.l.b16 %v885
        %v950 = vunpack.c.l.b16 %v886
        %v951 = vunpack.c.l.b16 %v887
        %v952 = vunpack.c.l.b16 %v888
        %v953 = vunpack.c.l.b16 %v889
        %v954 = vunpack.c.l.b16 %v890
        %v955 = vunpack.c.l.b16 %v891
        %v956 = vunpack.c.l.b16 %v892
        %v957 = vunpack.c.l.b16 %v893
        %v958 = vunpack.c.l.b16 %v894
        %v959 = vunpack.c.l.b16 %v895
        %v960 = vunpack.c.l.b16 %v896
        %v961 = vunpack.c.l.b16 %v897
        %v962 = vunpack.c.l.b16 %v898
        %v963 = vunpack.c.l.b16 %v899
        %v964 = vunpack.c.l.b16 %v900
        %v965 = vunpack.c.l.b16 %v901
        %v966 = vunpack.c.l.b16 %v902
        %v967 = vunpack.c.l.b16 %v903
        %v968 = vunpack.c.l.b16 %v904
        %v969 = vunpack.c.l.b16 %v905
        %v970 = vunpack.c.l.b16 %v906
        %v971 = vunpack.c.l.b16 %v907
        %v972 = vunpack.c.l.b16 %v908
        %v973 = vunpack.c.l.b16 %v909
        %v974 = vunpack.c.l.b16 %v910
        %v975 = vunpack.c.l.b16 %v911
        %v976 = vunpack.c.l.b16 %v912
        %v977 = vunpack.c.l.b16 %v913
        %v978 = vunpack.c.l.b16 %v914
        %v979 = vunpack.c.l.b16 %v915
        %v980 = vunpack.c.l.b16 %v916
        %v981 = vpack.c.b16 %v950, %v949
        %v982 = vpack.c.b16 %v952, %v951
        %v983 = vpack.c.b16 %v954, %v953
        %v984 = vpack.c.b16 %v956, %v955
        %v985 = vpack.c.b16 %v958, %v957
        %v986 = vpack.c.b16 %v960, %v959
        %v987 = vpack.c.b16 %v962, %v961
        %v988 = vpack.c.b16 %v964, %v963
        %v989 = vpack.c.b16 %v966, %v965
        %v990 = vpack.c.b16 %v968, %v967
        %v991 = vpack.c.b16 %v970, %v969
        %v992 = vpack.c.b16 %v972, %v971
        %v993 = vpack.c.b16 %v974, %v973
        %v994 = vpack.c.b16 %v976, %v975
        %v995 = vpack.c.b16 %v978, %v977
        %v996 = vpack.c.b16 %v980, %v979
        %vm1013 = vcmask 31744
        %1014 = vst.msk [vmem:[#allocation3] sm:$0xff] %vm1013, %v981
        %1015 = vst.msk [vmem:[#allocation3 + $0x8] sm:$0xff] %vm1013, %v982
        %1016 = vst.msk [vmem:[#allocation3 + $0x10] sm:$0xff] %vm1013, %v983
        %1017 = vst.msk [vmem:[#allocation3 + $0x18] sm:$0xff] %vm1013, %v984
        %1018 = vst.msk [vmem:[#allocation3 + $0x20] sm:$0xff] %vm1013, %v985
        %1019 = vst.msk [vmem:[#allocation3 + $0x28] sm:$0xff] %vm1013, %v986
        %1020 = vst.msk [vmem:[#allocation3 + $0x30] sm:$0xff] %vm1013, %v987
        %1021 = vst.msk [vmem:[#allocation3 + $0x38] sm:$0xff] %vm1013, %v988
        %1022 = vst.msk [vmem:[#allocation3 + $0x40] sm:$0xff] %vm1013, %v989
        %1023 = vst.msk [vmem:[#allocation3 + $0x48] sm:$0xff] %vm1013, %v990
        %1024 = vst.msk [vmem:[#allocation3 + $0x50] sm:$0xff] %vm1013, %v991
        %1025 = vst.msk [vmem:[#allocation3 + $0x58] sm:$0xff] %vm1013, %v992
        %1026 = vst.msk [vmem:[#allocation3 + $0x60] sm:$0xff] %vm1013, %v993
        %1027 = vst.msk [vmem:[#allocation3 + $0x68] sm:$0xff] %vm1013, %v994
        %1028 = vst.msk [vmem:[#allocation3 + $0x70] sm:$0xff] %vm1013, %v995
        %1029 = vst.msk [vmem:[#allocation3 + $0x78] sm:$0xff] %vm1013, %v996
        %v1030 = vld [vmem:[#allocation2] sm:$0xf]
        %v1031 = vld [vmem:[#allocation2 + $0x4] sm:$0xf]
        %v1032 = vld [vmem:[#allocation2 + $0x8] sm:$0x1]
        %v1033 = vld [vmem:[#allocation2 + $0xc] sm:$0xf]
        %v1034 = vld [vmem:[#allocation2 + $0x10] sm:$0xf]
        %v1035 = vld [vmem:[#allocation2 + $0x14] sm:$0x1]
        %v1036 = vld [vmem:[#allocation2 + $0x18] sm:$0xf]
        %v1037 = vld [vmem:[#allocation2 + $0x1c] sm:$0xf]
        %v1038 = vld [vmem:[#allocation2 + $0x20] sm:$0x1]
        %v1039 = vld [vmem:[#allocation2 + $0x24] sm:$0xf]
        %v1040 = vld [vmem:[#allocation2 + $0x28] sm:$0xf]
        %v1041 = vld [vmem:[#allocation2 + $0x2c] sm:$0x1]
        %v1042 = vld [vmem:[#allocation2 + $0x30] sm:$0xf]
        %v1043 = vld [vmem:[#allocation2 + $0x34] sm:$0xf]
        %v1044 = vld [vmem:[#allocation2 + $0x38] sm:$0x1]
        %v1045 = vld [vmem:[#allocation2 + $0x3c] sm:$0xf]
        %v1046 = vld [vmem:[#allocation2 + $0x40] sm:$0xf]
        %v1047 = vld [vmem:[#allocation2 + $0x44] sm:$0x1]
        %v1048 = vld [vmem:[#allocation2 + $0x48] sm:$0xf]
        %v1049 = vld [vmem:[#allocation2 + $0x4c] sm:$0xf]
        %v1050 = vld [vmem:[#allocation2 + $0x50] sm:$0x1]
        %v1051 = vld [vmem:[#allocation2 + $0x54] sm:$0xf]
        %v1052 = vld [vmem:[#allocation2 + $0x58] sm:$0xf]
        %v1053 = vld [vmem:[#allocation2 + $0x5c] sm:$0x1]
        %v1054 = vld [vmem:[#allocation2 + $0x60] sm:$0xf]
        %v1055 = vld [vmem:[#allocation2 + $0x64] sm:$0xf]
        %v1056 = vld [vmem:[#allocation2 + $0x68] sm:$0x1]
        %v1057 = vld [vmem:[#allocation2 + $0x6c] sm:$0xf]
        %v1058 = vld [vmem:[#allocation2 + $0x70] sm:$0xf]
        %v1059 = vld [vmem:[#allocation2 + $0x74] sm:$0x1]
        %v1060 = vld [vmem:[#allocation2 + $0x78] sm:$0xf]
        %v1061 = vld [vmem:[#allocation2 + $0x7c] sm:$0xf]
        %v1062 = vld [vmem:[#allocation2 + $0x80] sm:$0x1]
        %v1063 = vld [vmem:[#allocation2 + $0x84] sm:$0xf]
        %v1064 = vld [vmem:[#allocation2 + $0x88] sm:$0xf]
        %v1065 = vld [vmem:[#allocation2 + $0x8c] sm:$0x1]
        %v1066 = vld [vmem:[#allocation2 + $0x90] sm:$0xf]
        %v1067 = vld [vmem:[#allocation2 + $0x94] sm:$0xf]
        %v1068 = vld [vmem:[#allocation2 + $0x98] sm:$0x1]
        %v1069 = vld [vmem:[#allocation2 + $0x9c] sm:$0xf]
        %v1070 = vld [vmem:[#allocation2 + $0xa0] sm:$0xf]
        %v1071 = vld [vmem:[#allocation2 + $0xa4] sm:$0x1]
        %v1072 = vld [vmem:[#allocation2 + $0xa8] sm:$0xf]
        %v1073 = vld [vmem:[#allocation2 + $0xac] sm:$0xf]
        %v1074 = vld [vmem:[#allocation2 + $0xb0] sm:$0x1]
        %v1075 = vld [vmem:[#allocation2 + $0xb4] sm:$0xf]
        %v1076 = vld [vmem:[#allocation2 + $0xb8] sm:$0xf]
        %v1077 = vld [vmem:[#allocation2 + $0xbc] sm:$0x1]
        %v1126 = vunpack.c.l.b16 %v1030
        %v1127 = vunpack.c.l.b16 %v1031
        %v1128 = vunpack.c.l.b16 %v1032
        %v1129 = vunpack.c.l.b16 %v1033
        %v1130 = vunpack.c.l.b16 %v1034
        %v1131 = vunpack.c.l.b16 %v1035
        %v1132 = vunpack.c.l.b16 %v1036
        %v1133 = vunpack.c.l.b16 %v1037
        %v1134 = vunpack.c.l.b16 %v1038
        %v1135 = vunpack.c.l.b16 %v1039
        %v1136 = vunpack.c.l.b16 %v1040
        %v1137 = vunpack.c.l.b16 %v1041
        %v1138 = vunpack.c.l.b16 %v1042
        %v1139 = vunpack.c.l.b16 %v1043
        %v1140 = vunpack.c.l.b16 %v1044
        %v1141 = vunpack.c.l.b16 %v1045
        %v1142 = vunpack.c.l.b16 %v1046
        %v1143 = vunpack.c.l.b16 %v1047
        %v1144 = vunpack.c.l.b16 %v1048
        %v1145 = vunpack.c.l.b16 %v1049
        %v1146 = vunpack.c.l.b16 %v1050
        %v1147 = vunpack.c.l.b16 %v1051
        %v1148 = vunpack.c.l.b16 %v1052
        %v1149 = vunpack.c.l.b16 %v1053
        %v1150 = vunpack.c.l.b16 %v1054
        %v1151 = vunpack.c.l.b16 %v1055
        %v1152 = vunpack.c.l.b16 %v1056
        %v1153 = vunpack.c.l.b16 %v1057
        %v1154 = vunpack.c.l.b16 %v1058
        %v1155 = vunpack.c.l.b16 %v1059
        %v1156 = vunpack.c.l.b16 %v1060
        %v1157 = vunpack.c.l.b16 %v1061
        %v1158 = vunpack.c.l.b16 %v1062
        %v1159 = vunpack.c.l.b16 %v1063
        %v1160 = vunpack.c.l.b16 %v1064
        %v1161 = vunpack.c.l.b16 %v1065
        %v1162 = vunpack.c.l.b16 %v1066
        %v1163 = vunpack.c.l.b16 %v1067
        %v1164 = vunpack.c.l.b16 %v1068
        %v1165 = vunpack.c.l.b16 %v1069
        %v1166 = vunpack.c.l.b16 %v1070
        %v1167 = vunpack.c.l.b16 %v1071
        %v1168 = vunpack.c.l.b16 %v1072
        %v1169 = vunpack.c.l.b16 %v1073
        %v1170 = vunpack.c.l.b16 %v1074
        %v1171 = vunpack.c.l.b16 %v1075
        %v1172 = vunpack.c.l.b16 %v1076
        %v1173 = vunpack.c.l.b16 %v1077
        %v1174 = vpack.c.b16 %v1127, %v1126
        %v1175 = vpack.c.b16 %v1128, %v1128
        %v1176 = vpack.c.b16 %v1130, %v1129
        %v1177 = vpack.c.b16 %v1131, %v1131
        %v1178 = vpack.c.b16 %v1133, %v1132
        %v1179 = vpack.c.b16 %v1134, %v1134
        %v1180 = vpack.c.b16 %v1136, %v1135
        %v1181 = vpack.c.b16 %v1137, %v1137
        %v1182 = vpack.c.b16 %v1139, %v1138
        %v1183 = vpack.c.b16 %v1140, %v1140
        %v1184 = vpack.c.b16 %v1142, %v1141
        %v1185 = vpack.c.b16 %v1143, %v1143
        %v1186 = vpack.c.b16 %v1145, %v1144
        %v1187 = vpack.c.b16 %v1146, %v1146
        %v1188 = vpack.c.b16 %v1148, %v1147
        %v1189 = vpack.c.b16 %v1149, %v1149
        %v1190 = vpack.c.b16 %v1151, %v1150
        %v1191 = vpack.c.b16 %v1152, %v1152
        %v1192 = vpack.c.b16 %v1154, %v1153
        %v1193 = vpack.c.b16 %v1155, %v1155
        %v1194 = vpack.c.b16 %v1157, %v1156
        %v1195 = vpack.c.b16 %v1158, %v1158
        %v1196 = vpack.c.b16 %v1160, %v1159
        %v1197 = vpack.c.b16 %v1161, %v1161
        %v1198 = vpack.c.b16 %v1163, %v1162
        %v1199 = vpack.c.b16 %v1164, %v1164
        %v1200 = vpack.c.b16 %v1166, %v1165
        %v1201 = vpack.c.b16 %v1167, %v1167
        %v1202 = vpack.c.b16 %v1169, %v1168
        %v1203 = vpack.c.b16 %v1170, %v1170
        %v1204 = vpack.c.b16 %v1172, %v1171
        %v1205 = vpack.c.b16 %v1173, %v1173
        %vm1206 = vsmask.f32 7424
        %v1208 = vshrl.u32 %v1174, 16
        %v1210 = vshll.u32 %v1174, 16
        %v1212 = vrot.slane %v1210, 1
        %v1213 = vor.u32 %v1208, %v1212
        %v1215 = vshll.u32 %v1175, 16
        %v1217 = vrot.slane %v1215, 1
        %v1218 = vsel %vm1206, %v1213, %v1217
        %v1220 = vshrl.u32 %v1176, 16
        %v1222 = vshll.u32 %v1176, 16
        %v1224 = vrot.slane %v1222, 1
        %v1225 = vor.u32 %v1220, %v1224
        %v1227 = vshll.u32 %v1177, 16
        %v1229 = vrot.slane %v1227, 1
        %v1230 = vsel %vm1206, %v1225, %v1229
        %v1232 = vshrl.u32 %v1178, 16
        %v1234 = vshll.u32 %v1178, 16
        %v1236 = vrot.slane %v1234, 1
        %v1237 = vor.u32 %v1232, %v1236
        %v1239 = vshll.u32 %v1179, 16
        %v1241 = vrot.slane %v1239, 1
        %v1242 = vsel %vm1206, %v1237, %v1241
        %v1244 = vshrl.u32 %v1180, 16
        %v1246 = vshll.u32 %v1180, 16
        %v1248 = vrot.slane %v1246, 1
        %v1249 = vor.u32 %v1244, %v1248
        %v1251 = vshll.u32 %v1181, 16
        %v1253 = vrot.slane %v1251, 1
        %v1254 = vsel %vm1206, %v1249, %v1253
        %v1256 = vshrl.u32 %v1182, 16
        %v1258 = vshll.u32 %v1182, 16
        %v1260 = vrot.slane %v1258, 1
        %v1261 = vor.u32 %v1256, %v1260
        %v1263 = vshll.u32 %v1183, 16
        %v1265 = vrot.slane %v1263, 1
        %v1266 = vsel %vm1206, %v1261, %v1265
        %v1268 = vshrl.u32 %v1184, 16
        %v1270 = vshll.u32 %v1184, 16
        %v1272 = vrot.slane %v1270, 1
        %v1273 = vor.u32 %v1268, %v1272
        %v1275 = vshll.u32 %v1185, 16
        %v1277 = vrot.slane %v1275, 1
        %v1278 = vsel %vm1206, %v1273, %v1277
        %v1280 = vshrl.u32 %v1186, 16
        %v1282 = vshll.u32 %v1186, 16
        %v1284 = vrot.slane %v1282, 1
        %v1285 = vor.u32 %v1280, %v1284
        %v1287 = vshll.u32 %v1187, 16
        %v1289 = vrot.slane %v1287, 1
        %v1290 = vsel %vm1206, %v1285, %v1289
        %v1292 = vshrl.u32 %v1188, 16
        %v1294 = vshll.u32 %v1188, 16
        %v1296 = vrot.slane %v1294, 1
        %v1297 = vor.u32 %v1292, %v1296
        %v1299 = vshll.u32 %v1189, 16
        %v1301 = vrot.slane %v1299, 1
        %v1302 = vsel %vm1206, %v1297, %v1301
        %v1304 = vshrl.u32 %v1190, 16
        %v1306 = vshll.u32 %v1190, 16
        %v1308 = vrot.slane %v1306, 1
        %v1309 = vor.u32 %v1304, %v1308
        %v1311 = vshll.u32 %v1191, 16
        %v1313 = vrot.slane %v1311, 1
        %v1314 = vsel %vm1206, %v1309, %v1313
        %v1316 = vshrl.u32 %v1192, 16
        %v1318 = vshll.u32 %v1192, 16
        %v1320 = vrot.slane %v1318, 1
        %v1321 = vor.u32 %v1316, %v1320
        %v1323 = vshll.u32 %v1193, 16
        %v1325 = vrot.slane %v1323, 1
        %v1326 = vsel %vm1206, %v1321, %v1325
        %v1328 = vshrl.u32 %v1194, 16
        %v1330 = vshll.u32 %v1194, 16
        %v1332 = vrot.slane %v1330, 1
        %v1333 = vor.u32 %v1328, %v1332
        %v1335 = vshll.u32 %v1195, 16
        %v1337 = vrot.slane %v1335, 1
        %v1338 = vsel %vm1206, %v1333, %v1337
        %v1340 = vshrl.u32 %v1196, 16
        %v1342 = vshll.u32 %v1196, 16
        %v1344 = vrot.slane %v1342, 1
        %v1345 = vor.u32 %v1340, %v1344
        %v1347 = vshll.u32 %v1197, 16
        %v1349 = vrot.slane %v1347, 1
        %v1350 = vsel %vm1206, %v1345, %v1349
        %v1352 = vshrl.u32 %v1198, 16
        %v1354 = vshll.u32 %v1198, 16
        %v1356 = vrot.slane %v1354, 1
        %v1357 = vor.u32 %v1352, %v1356
        %v1359 = vshll.u32 %v1199, 16
        %v1361 = vrot.slane %v1359, 1
        %v1362 = vsel %vm1206, %v1357, %v1361
        %v1364 = vshrl.u32 %v1200, 16
        %v1366 = vshll.u32 %v1200, 16
        %v1368 = vrot.slane %v1366, 1
        %v1369 = vor.u32 %v1364, %v1368
        %v1371 = vshll.u32 %v1201, 16
        %v1373 = vrot.slane %v1371, 1
        %v1374 = vsel %vm1206, %v1369, %v1373
        %v1376 = vshrl.u32 %v1202, 16
        %v1378 = vshll.u32 %v1202, 16
        %v1380 = vrot.slane %v1378, 1
        %v1381 = vor.u32 %v1376, %v1380
        %v1383 = vshll.u32 %v1203, 16
        %v1385 = vrot.slane %v1383, 1
        %v1386 = vsel %vm1206, %v1381, %v1385
        %v1388 = vshrl.u32 %v1204, 16
        %v1390 = vshll.u32 %v1204, 16
        %v1392 = vrot.slane %v1390, 1
        %v1393 = vor.u32 %v1388, %v1392
        %v1395 = vshll.u32 %v1205, 16
        %v1397 = vrot.slane %v1395, 1
        %v1398 = vsel %vm1206, %v1393, %v1397
        %1399 = vrot.lane.b32.xlu0 %v1218, 4
        %v1400 = vpop.permute.xlu0 %1399
        %1401 = vrot.lane.b32.xlu0 %v1230, 4
        %v1402 = vpop.permute.xlu0 %1401
        %1403 = vrot.lane.b32.xlu0 %v1242, 4
        %v1404 = vpop.permute.xlu0 %1403
        %1405 = vrot.lane.b32.xlu0 %v1254, 4
        %v1406 = vpop.permute.xlu0 %1405
        %1407 = vrot.lane.b32.xlu0 %v1266, 4
        %v1408 = vpop.permute.xlu0 %1407
        %1409 = vrot.lane.b32.xlu0 %v1278, 4
        %v1410 = vpop.permute.xlu0 %1409
        %1411 = vrot.lane.b32.xlu0 %v1290, 4
        %v1412 = vpop.permute.xlu0 %1411
        %1413 = vrot.lane.b32.xlu0 %v1302, 4
        %v1414 = vpop.permute.xlu0 %1413
        %1415 = vrot.lane.b32.xlu0 %v1314, 4
        %v1416 = vpop.permute.xlu0 %1415
        %1417 = vrot.lane.b32.xlu0 %v1326, 4
        %v1418 = vpop.permute.xlu0 %1417
        %1419 = vrot.lane.b32.xlu0 %v1338, 4
        %v1420 = vpop.permute.xlu0 %1419
        %1421 = vrot.lane.b32.xlu0 %v1350, 4
        %v1422 = vpop.permute.xlu0 %1421
        %1423 = vrot.lane.b32.xlu0 %v1362, 4
        %v1424 = vpop.permute.xlu0 %1423
        %1425 = vrot.lane.b32.xlu0 %v1374, 4
        %v1426 = vpop.permute.xlu0 %1425
        %1427 = vrot.lane.b32.xlu0 %v1386, 4
        %v1428 = vpop.permute.xlu0 %1427
        %1429 = vrot.lane.b32.xlu0 %v1398, 4
        %v1430 = vpop.permute.xlu0 %1429
        %vm1447 = vcmask 64544
        %1448 = vst.msk [vmem:[#allocation3] sm:$0xff] %vm1447, %v1400
        %1449 = vst.msk [vmem:[#allocation3 + $0x8] sm:$0xff] %vm1447, %v1402
        %1450 = vst.msk [vmem:[#allocation3 + $0x10] sm:$0xff] %vm1447, %v1404
        %1451 = vst.msk [vmem:[#allocation3 + $0x18] sm:$0xff] %vm1447, %v1406
        %1452 = vst.msk [vmem:[#allocation3 + $0x20] sm:$0xff] %vm1447, %v1408
        %1453 = vst.msk [vmem:[#allocation3 + $0x28] sm:$0xff] %vm1447, %v1410
        %1454 = vst.msk [vmem:[#allocation3 + $0x30] sm:$0xff] %vm1447, %v1412
        %1455 = vst.msk [vmem:[#allocation3 + $0x38] sm:$0xff] %vm1447, %v1414
        %1456 = vst.msk [vmem:[#allocation3 + $0x40] sm:$0xff] %vm1447, %v1416
        %1457 = vst.msk [vmem:[#allocation3 + $0x48] sm:$0xff] %vm1447, %v1418
        %1458 = vst.msk [vmem:[#allocation3 + $0x50] sm:$0xff] %vm1447, %v1420
        %1459 = vst.msk [vmem:[#allocation3 + $0x58] sm:$0xff] %vm1447, %v1422
        %1460 = vst.msk [vmem:[#allocation3 + $0x60] sm:$0xff] %vm1447, %v1424
        %1461 = vst.msk [vmem:[#allocation3 + $0x68] sm:$0xff] %vm1447, %v1426
        %1462 = vst.msk [vmem:[#allocation3 + $0x70] sm:$0xff] %vm1447, %v1428
        %1463 = vst.msk [vmem:[#allocation3 + $0x78] sm:$0xff] %vm1447, %v1430
        %v1464 = vld [vmem:[#allocation2] sm:$0xe]
        %v1465 = vld [vmem:[#allocation2 + $0x4] sm:$0xf]
        %v1466 = vld [vmem:[#allocation2 + $0x8] sm:$0x1]
        %v1467 = vld [vmem:[#allocation2 + $0xc] sm:$0xe]
        %v1468 = vld [vmem:[#allocation2 + $0x10] sm:$0xf]
        %v1469 = vld [vmem:[#allocation2 + $0x14] sm:$0x1]
        %v1470 = vld [vmem:[#allocation2 + $0x18] sm:$0xe]
        %v1471 = vld [vmem:[#allocation2 + $0x1c] sm:$0xf]
        %v1472 = vld [vmem:[#allocation2 + $0x20] sm:$0x1]
        %v1473 = vld [vmem:[#allocation2 + $0x24] sm:$0xe]
        %v1474 = vld [vmem:[#allocation2 + $0x28] sm:$0xf]
        %v1475 = vld [vmem:[#allocation2 + $0x2c] sm:$0x1]
        %v1476 = vld [vmem:[#allocation2 + $0x30] sm:$0xe]
        %v1477 = vld [vmem:[#allocation2 + $0x34] sm:$0xf]
        %v1478 = vld [vmem:[#allocation2 + $0x38] sm:$0x1]
        %v1479 = vld [vmem:[#allocation2 + $0x3c] sm:$0xe]
        %v1480 = vld [vmem:[#allocation2 + $0x40] sm:$0xf]
        %v1481 = vld [vmem:[#allocation2 + $0x44] sm:$0x1]
        %v1482 = vld [vmem:[#allocation2 + $0x48] sm:$0xe]
        %v1483 = vld [vmem:[#allocation2 + $0x4c] sm:$0xf]
        %v1484 = vld [vmem:[#allocation2 + $0x50] sm:$0x1]
        %v1485 = vld [vmem:[#allocation2 + $0x54] sm:$0xe]
        %v1486 = vld [vmem:[#allocation2 + $0x58] sm:$0xf]
        %v1487 = vld [vmem:[#allocation2 + $0x5c] sm:$0x1]
        %v1488 = vld [vmem:[#allocation2 + $0x60] sm:$0xe]
        %v1489 = vld [vmem:[#allocation2 + $0x64] sm:$0xf]
        %v1490 = vld [vmem:[#allocation2 + $0x68] sm:$0x1]
        %v1491 = vld [vmem:[#allocation2 + $0x6c] sm:$0xe]
        %v1492 = vld [vmem:[#allocation2 + $0x70] sm:$0xf]
        %v1493 = vld [vmem:[#allocation2 + $0x74] sm:$0x1]
        %v1494 = vld [vmem:[#allocation2 + $0x78] sm:$0xe]
        %v1495 = vld [vmem:[#allocation2 + $0x7c] sm:$0xf]
        %v1496 = vld [vmem:[#allocation2 + $0x80] sm:$0x1]
        %v1497 = vld [vmem:[#allocation2 + $0x84] sm:$0xe]
        %v1498 = vld [vmem:[#allocation2 + $0x88] sm:$0xf]
        %v1499 = vld [vmem:[#allocation2 + $0x8c] sm:$0x1]
        %v1500 = vld [vmem:[#allocation2 + $0x90] sm:$0xe]
        %v1501 = vld [vmem:[#allocation2 + $0x94] sm:$0xf]
        %v1502 = vld [vmem:[#allocation2 + $0x98] sm:$0x1]
        %v1503 = vld [vmem:[#allocation2 + $0x9c] sm:$0xe]
        %v1504 = vld [vmem:[#allocation2 + $0xa0] sm:$0xf]
        %v1505 = vld [vmem:[#allocation2 + $0xa4] sm:$0x1]
        %v1506 = vld [vmem:[#allocation2 + $0xa8] sm:$0xe]
        %v1507 = vld [vmem:[#allocation2 + $0xac] sm:$0xf]
        %v1508 = vld [vmem:[#allocation2 + $0xb0] sm:$0x1]
        %v1509 = vld [vmem:[#allocation2 + $0xb4] sm:$0xe]
        %v1510 = vld [vmem:[#allocation2 + $0xb8] sm:$0xf]
        %v1511 = vld [vmem:[#allocation2 + $0xbc] sm:$0x1]
        %v1560 = vunpack.c.l.b16 %v1464
        %v1561 = vunpack.c.l.b16 %v1465
        %v1562 = vunpack.c.l.b16 %v1466
        %v1563 = vunpack.c.l.b16 %v1467
        %v1564 = vunpack.c.l.b16 %v1468
        %v1565 = vunpack.c.l.b16 %v1469
        %v1566 = vunpack.c.l.b16 %v1470
        %v1567 = vunpack.c.l.b16 %v1471
        %v1568 = vunpack.c.l.b16 %v1472
        %v1569 = vunpack.c.l.b16 %v1473
        %v1570 = vunpack.c.l.b16 %v1474
        %v1571 = vunpack.c.l.b16 %v1475
        %v1572 = vunpack.c.l.b16 %v1476
        %v1573 = vunpack.c.l.b16 %v1477
        %v1574 = vunpack.c.l.b16 %v1478
        %v1575 = vunpack.c.l.b16 %v1479
        %v1576 = vunpack.c.l.b16 %v1480
        %v1577 = vunpack.c.l.b16 %v1481
        %v1578 = vunpack.c.l.b16 %v1482
        %v1579 = vunpack.c.l.b16 %v1483
        %v1580 = vunpack.c.l.b16 %v1484
        %v1581 = vunpack.c.l.b16 %v1485
        %v1582 = vunpack.c.l.b16 %v1486
        %v1583 = vunpack.c.l.b16 %v1487
        %v1584 = vunpack.c.l.b16 %v1488
        %v1585 = vunpack.c.l.b16 %v1489
        %v1586 = vunpack.c.l.b16 %v1490
        %v1587 = vunpack.c.l.b16 %v1491
        %v1588 = vunpack.c.l.b16 %v1492
        %v1589 = vunpack.c.l.b16 %v1493
        %v1590 = vunpack.c.l.b16 %v1494
        %v1591 = vunpack.c.l.b16 %v1495
        %v1592 = vunpack.c.l.b16 %v1496
        %v1593 = vunpack.c.l.b16 %v1497
        %v1594 = vunpack.c.l.b16 %v1498
        %v1595 = vunpack.c.l.b16 %v1499
        %v1596 = vunpack.c.l.b16 %v1500
        %v1597 = vunpack.c.l.b16 %v1501
        %v1598 = vunpack.c.l.b16 %v1502
        %v1599 = vunpack.c.l.b16 %v1503
        %v1600 = vunpack.c.l.b16 %v1504
        %v1601 = vunpack.c.l.b16 %v1505
        %v1602 = vunpack.c.l.b16 %v1506
        %v1603 = vunpack.c.l.b16 %v1507
        %v1604 = vunpack.c.l.b16 %v1508
        %v1605 = vunpack.c.l.b16 %v1509
        %v1606 = vunpack.c.l.b16 %v1510
        %v1607 = vunpack.c.l.b16 %v1511
        %v1608 = vpack.c.b16 %v1561, %v1560
        %v1609 = vpack.c.b16 %v1562, %v1562
        %v1610 = vpack.c.b16 %v1564, %v1563
        %v1611 = vpack.c.b16 %v1565, %v1565
        %v1612 = vpack.c.b16 %v1567, %v1566
        %v1613 = vpack.c.b16 %v1568, %v1568
        %v1614 = vpack.c.b16 %v1570, %v1569
        %v1615 = vpack.c.b16 %v1571, %v1571
        %v1616 = vpack.c.b16 %v1573, %v1572
        %v1617 = vpack.c.b16 %v1574, %v1574
        %v1618 = vpack.c.b16 %v1576, %v1575
        %v1619 = vpack.c.b16 %v1577, %v1577
        %v1620 = vpack.c.b16 %v1579, %v1578
        %v1621 = vpack.c.b16 %v1580, %v1580
        %v1622 = vpack.c.b16 %v1582, %v1581
        %v1623 = vpack.c.b16 %v1583, %v1583
        %v1624 = vpack.c.b16 %v1585, %v1584
        %v1625 = vpack.c.b16 %v1586, %v1586
        %v1626 = vpack.c.b16 %v1588, %v1587
        %v1627 = vpack.c.b16 %v1589, %v1589
        %v1628 = vpack.c.b16 %v1591, %v1590
        %v1629 = vpack.c.b16 %v1592, %v1592
        %v1630 = vpack.c.b16 %v1594, %v1593
        %v1631 = vpack.c.b16 %v1595, %v1595
        %v1632 = vpack.c.b16 %v1597, %v1596
        %v1633 = vpack.c.b16 %v1598, %v1598
        %v1634 = vpack.c.b16 %v1600, %v1599
        %v1635 = vpack.c.b16 %v1601, %v1601
        %v1636 = vpack.c.b16 %v1603, %v1602
        %v1637 = vpack.c.b16 %v1604, %v1604
        %v1638 = vpack.c.b16 %v1606, %v1605
        %v1639 = vpack.c.b16 %v1607, %v1607
        %vm1640 = vcmask 1046528
        %v1641 = vrot.slane %v1608, 1
        %v1642 = vrot.slane %v1609, 1
        %v1643 = vsel %vm1640, %v1641, %v1642
        %v1644 = vrot.slane %v1610, 1
        %v1645 = vrot.slane %v1611, 1
        %v1646 = vsel %vm1640, %v1644, %v1645
        %v1647 = vrot.slane %v1612, 1
        %v1648 = vrot.slane %v1613, 1
        %v1649 = vsel %vm1640, %v1647, %v1648
        %v1650 = vrot.slane %v1614, 1
        %v1651 = vrot.slane %v1615, 1
        %v1652 = vsel %vm1640, %v1650, %v1651
        %v1653 = vrot.slane %v1616, 1
        %v1654 = vrot.slane %v1617, 1
        %v1655 = vsel %vm1640, %v1653, %v1654
        %v1656 = vrot.slane %v1618, 1
        %v1657 = vrot.slane %v1619, 1
        %v1658 = vsel %vm1640, %v1656, %v1657
        %v1659 = vrot.slane %v1620, 1
        %v1660 = vrot.slane %v1621, 1
        %v1661 = vsel %vm1640, %v1659, %v1660
        %v1662 = vrot.slane %v1622, 1
        %v1663 = vrot.slane %v1623, 1
        %v1664 = vsel %vm1640, %v1662, %v1663
        %v1665 = vrot.slane %v1624, 1
        %v1666 = vrot.slane %v1625, 1
        %v1667 = vsel %vm1640, %v1665, %v1666
        %v1668 = vrot.slane %v1626, 1
        %v1669 = vrot.slane %v1627, 1
        %v1670 = vsel %vm1640, %v1668, %v1669
        %v1671 = vrot.slane %v1628, 1
        %v1672 = vrot.slane %v1629, 1
        %v1673 = vsel %vm1640, %v1671, %v1672
        %v1674 = vrot.slane %v1630, 1
        %v1675 = vrot.slane %v1631, 1
        %v1676 = vsel %vm1640, %v1674, %v1675
        %v1677 = vrot.slane %v1632, 1
        %v1678 = vrot.slane %v1633, 1
        %v1679 = vsel %vm1640, %v1677, %v1678
        %v1680 = vrot.slane %v1634, 1
        %v1681 = vrot.slane %v1635, 1
        %v1682 = vsel %vm1640, %v1680, %v1681
        %v1683 = vrot.slane %v1636, 1
        %v1684 = vrot.slane %v1637, 1
        %v1685 = vsel %vm1640, %v1683, %v1684
        %v1686 = vrot.slane %v1638, 1
        %v1687 = vrot.slane %v1639, 1
        %v1688 = vsel %vm1640, %v1686, %v1687
        %1689 = vrot.lane.b32.xlu0 %v1643, 8
        %v1690 = vpop.permute.xlu0 %1689
        %1691 = vrot.lane.b32.xlu0 %v1646, 8
        %v1692 = vpop.permute.xlu0 %1691
        %1693 = vrot.lane.b32.xlu0 %v1649, 8
        %v1694 = vpop.permute.xlu0 %1693
        %1695 = vrot.lane.b32.xlu0 %v1652, 8
        %v1696 = vpop.permute.xlu0 %1695
        %1697 = vrot.lane.b32.xlu0 %v1655, 8
        %v1698 = vpop.permute.xlu0 %1697
        %1699 = vrot.lane.b32.xlu0 %v1658, 8
        %v1700 = vpop.permute.xlu0 %1699
        %1701 = vrot.lane.b32.xlu0 %v1661, 8
        %v1702 = vpop.permute.xlu0 %1701
        %1703 = vrot.lane.b32.xlu0 %v1664, 8
        %v1704 = vpop.permute.xlu0 %1703
        %1705 = vrot.lane.b32.xlu0 %v1667, 8
        %v1706 = vpop.permute.xlu0 %1705
        %1707 = vrot.lane.b32.xlu0 %v1670, 8
        %v1708 = vpop.permute.xlu0 %1707
        %1709 = vrot.lane.b32.xlu0 %v1673, 8
        %v1710 = vpop.permute.xlu0 %1709
        %1711 = vrot.lane.b32.xlu0 %v1676, 8
        %v1712 = vpop.permute.xlu0 %1711
        %1713 = vrot.lane.b32.xlu0 %v1679, 8
        %v1714 = vpop.permute.xlu0 %1713
        %1715 = vrot.lane.b32.xlu0 %v1682, 8
        %v1716 = vpop.permute.xlu0 %1715
        %1717 = vrot.lane.b32.xlu0 %v1685, 8
        %v1718 = vpop.permute.xlu0 %1717
        %1719 = vrot.lane.b32.xlu0 %v1688, 8
        %v1720 = vpop.permute.xlu0 %1719
        %vm1737 = vcmask 97344
        %1738 = vst.msk [vmem:[#allocation3] sm:$0xff] %vm1737, %v1690
        %1739 = vst.msk [vmem:[#allocation3 + $0x8] sm:$0xff] %vm1737, %v1692
        %1740 = vst.msk [vmem:[#allocation3 + $0x10] sm:$0xff] %vm1737, %v1694
        %1741 = vst.msk [vmem:[#allocation3 + $0x18] sm:$0xff] %vm1737, %v1696
        %1742 = vst.msk [vmem:[#allocation3 + $0x20] sm:$0xff] %vm1737, %v1698
        %1743 = vst.msk [vmem:[#allocation3 + $0x28] sm:$0xff] %vm1737, %v1700
        %1744 = vst.msk [vmem:[#allocation3 + $0x30] sm:$0xff] %vm1737, %v1702
        %1745 = vst.msk [vmem:[#allocation3 + $0x38] sm:$0xff] %vm1737, %v1704
        %1746 = vst.msk [vmem:[#allocation3 + $0x40] sm:$0xff] %vm1737, %v1706
        %1747 = vst.msk [vmem:[#allocation3 + $0x48] sm:$0xff] %vm1737, %v1708
        %1748 = vst.msk [vmem:[#allocation3 + $0x50] sm:$0xff] %vm1737, %v1710
        %1749 = vst.msk [vmem:[#allocation3 + $0x58] sm:$0xff] %vm1737, %v1712
        %1750 = vst.msk [vmem:[#allocation3 + $0x60] sm:$0xff] %vm1737, %v1714
        %1751 = vst.msk [vmem:[#allocation3 + $0x68] sm:$0xff] %vm1737, %v1716
        %1752 = vst.msk [vmem:[#allocation3 + $0x70] sm:$0xff] %vm1737, %v1718
        %1753 = vst.msk [vmem:[#allocation3 + $0x78] sm:$0xff] %vm1737, %v1720
        %v1754 = vld [vmem:[%s267] sm:$0xf]
        %v1755 = vld [vmem:[%s267 + $0x4] sm:$0xf]
        %v1756 = vld [vmem:[%s267 + $0xc] sm:$0xf]
        %v1757 = vld [vmem:[%s267 + $0x10] sm:$0xf]
        %v1758 = vld [vmem:[%s267 + $0x18] sm:$0xf]
        %v1759 = vld [vmem:[%s267 + $0x1c] sm:$0xf]
        %v1760 = vld [vmem:[%s267 + $0x24] sm:$0xf]
        %v1761 = vld [vmem:[%s267 + $0x28] sm:$0xf]
        %v1762 = vld [vmem:[%s267 + $0x30] sm:$0xf]
        %v1763 = vld [vmem:[%s267 + $0x34] sm:$0xf]
        %v1764 = vld [vmem:[%s267 + $0x3c] sm:$0xf]
        %v1765 = vld [vmem:[%s267 + $0x40] sm:$0xf]
        %v1766 = vld [vmem:[%s267 + $0x48] sm:$0xf]
        %v1767 = vld [vmem:[%s267 + $0x4c] sm:$0xf]
        %v1768 = vld [vmem:[%s267 + $0x54] sm:$0xf]
        %v1769 = vld [vmem:[%s267 + $0x58] sm:$0xf]
        %v1770 = vld [vmem:[%s267 + $0x60] sm:$0xf]
        %v1771 = vld [vmem:[%s267 + $0x64] sm:$0xf]
        %v1772 = vld [vmem:[%s267 + $0x6c] sm:$0xf]
        %v1773 = vld [vmem:[%s267 + $0x70] sm:$0xf]
        %v1774 = vld [vmem:[%s267 + $0x78] sm:$0xf]
        %v1775 = vld [vmem:[%s267 + $0x7c] sm:$0xf]
        %v1776 = vld [vmem:[%s267 + $0x84] sm:$0xf]
        %v1777 = vld [vmem:[%s267 + $0x88] sm:$0xf]
        %v1778 = vld [vmem:[%s267 + $0x90] sm:$0xf]
        %v1779 = vld [vmem:[%s267 + $0x94] sm:$0xf]
        %v1780 = vld [vmem:[%s267 + $0x9c] sm:$0xf]
        %v1781 = vld [vmem:[%s267 + $0xa0] sm:$0xf]
        %v1782 = vld [vmem:[%s267 + $0xa8] sm:$0xf]
        %v1783 = vld [vmem:[%s267 + $0xac] sm:$0xf]
        %v1784 = vld [vmem:[%s267 + $0xb4] sm:$0xf]
        %v1785 = vld [vmem:[%s267 + $0xb8] sm:$0xf]
        %v1818 = vunpack.c.l.b16 %v1754
        %v1819 = vunpack.c.l.b16 %v1755
        %v1820 = vunpack.c.l.b16 %v1756
        %v1821 = vunpack.c.l.b16 %v1757
        %v1822 = vunpack.c.l.b16 %v1758
        %v1823 = vunpack.c.l.b16 %v1759
        %v1824 = vunpack.c.l.b16 %v1760
        %v1825 = vunpack.c.l.b16 %v1761
        %v1826 = vunpack.c.l.b16 %v1762
        %v1827 = vunpack.c.l.b16 %v1763
        %v1828 = vunpack.c.l.b16 %v1764
        %v1829 = vunpack.c.l.b16 %v1765
        %v1830 = vunpack.c.l.b16 %v1766
        %v1831 = vunpack.c.l.b16 %v1767
        %v1832 = vunpack.c.l.b16 %v1768
        %v1833 = vunpack.c.l.b16 %v1769
        %v1834 = vunpack.c.l.b16 %v1770
        %v1835 = vunpack.c.l.b16 %v1771
        %v1836 = vunpack.c.l.b16 %v1772
        %v1837 = vunpack.c.l.b16 %v1773
        %v1838 = vunpack.c.l.b16 %v1774
        %v1839 = vunpack.c.l.b16 %v1775
        %v1840 = vunpack.c.l.b16 %v1776
        %v1841 = vunpack.c.l.b16 %v1777
        %v1842 = vunpack.c.l.b16 %v1778
        %v1843 = vunpack.c.l.b16 %v1779
        %v1844 = vunpack.c.l.b16 %v1780
        %v1845 = vunpack.c.l.b16 %v1781
        %v1846 = vunpack.c.l.b16 %v1782
        %v1847 = vunpack.c.l.b16 %v1783
        %v1848 = vunpack.c.l.b16 %v1784
        %v1849 = vunpack.c.l.b16 %v1785
        %v1850 = vpack.c.b16 %v1819, %v1818
        %v1851 = vpack.c.b16 %v1821, %v1820
        %v1852 = vpack.c.b16 %v1823, %v1822
        %v1853 = vpack.c.b16 %v1825, %v1824
        %v1854 = vpack.c.b16 %v1827, %v1826
        %v1855 = vpack.c.b16 %v1829, %v1828
        %v1856 = vpack.c.b16 %v1831, %v1830
        %v1857 = vpack.c.b16 %v1833, %v1832
        %v1858 = vpack.c.b16 %v1835, %v1834
        %v1859 = vpack.c.b16 %v1837, %v1836
        %v1860 = vpack.c.b16 %v1839, %v1838
        %v1861 = vpack.c.b16 %v1841, %v1840
        %v1862 = vpack.c.b16 %v1843, %v1842
        %v1863 = vpack.c.b16 %v1845, %v1844
        %v1864 = vpack.c.b16 %v1847, %v1846
        %v1865 = vpack.c.b16 %v1849, %v1848
        %1866 = vrot.lane.b32.xlu0 %v1850, 12
        %v1867 = vpop.permute.xlu0 %1866
        %1868 = vrot.lane.b32.xlu0 %v1851, 12
        %v1869 = vpop.permute.xlu0 %1868
        %1870 = vrot.lane.b32.xlu0 %v1852, 12
        %v1871 = vpop.permute.xlu0 %1870
        %1872 = vrot.lane.b32.xlu0 %v1853, 12
        %v1873 = vpop.permute.xlu0 %1872
        %1874 = vrot.lane.b32.xlu0 %v1854, 12
        %v1875 = vpop.permute.xlu0 %1874
        %1876 = vrot.lane.b32.xlu0 %v1855, 12
        %v1877 = vpop.permute.xlu0 %1876
        %1878 = vrot.lane.b32.xlu0 %v1856, 12
        %v1879 = vpop.permute.xlu0 %1878
        %1880 = vrot.lane.b32.xlu0 %v1857, 12
        %v1881 = vpop.permute.xlu0 %1880
        %1882 = vrot.lane.b32.xlu0 %v1858, 12
        %v1883 = vpop.permute.xlu0 %1882
        %1884 = vrot.lane.b32.xlu0 %v1859, 12
        %v1885 = vpop.permute.xlu0 %1884
        %1886 = vrot.lane.b32.xlu0 %v1860, 12
        %v1887 = vpop.permute.xlu0 %1886
        %1888 = vrot.lane.b32.xlu0 %v1861, 12
        %v1889 = vpop.permute.xlu0 %1888
        %1890 = vrot.lane.b32.xlu0 %v1862, 12
        %v1891 = vpop.permute.xlu0 %1890
        %1892 = vrot.lane.b32.xlu0 %v1863, 12
        %v1893 = vpop.permute.xlu0 %1892
        %1894 = vrot.lane.b32.xlu0 %v1864, 12
        %v1895 = vpop.permute.xlu0 %1894
        %1896 = vrot.lane.b32.xlu0 %v1865, 12
        %v1897 = vpop.permute.xlu0 %1896
        %vm1914 = vcmask 130144
        %1915 = vst.msk [vmem:[#allocation3] sm:$0xff] %vm1914, %v1867
        %1916 = vst.msk [vmem:[#allocation3 + $0x8] sm:$0xff] %vm1914, %v1869
        %1917 = vst.msk [vmem:[#allocation3 + $0x10] sm:$0xff] %vm1914, %v1871
        %1918 = vst.msk [vmem:[#allocation3 + $0x18] sm:$0xff] %vm1914, %v1873
        %1919 = vst.msk [vmem:[#allocation3 + $0x20] sm:$0xff] %vm1914, %v1875
        %1920 = vst.msk [vmem:[#allocation3 + $0x28] sm:$0xff] %vm1914, %v1877
        %1921 = vst.msk [vmem:[#allocation3 + $0x30] sm:$0xff] %vm1914, %v1879
        %1922 = vst.msk [vmem:[#allocation3 + $0x38] sm:$0xff] %vm1914, %v1881
        %1923 = vst.msk [vmem:[#allocation3 + $0x40] sm:$0xff] %vm1914, %v1883
        %1924 = vst.msk [vmem:[#allocation3 + $0x48] sm:$0xff] %vm1914, %v1885
        %1925 = vst.msk [vmem:[#allocation3 + $0x50] sm:$0xff] %vm1914, %v1887
        %1926 = vst.msk [vmem:[#allocation3 + $0x58] sm:$0xff] %vm1914, %v1889
        %1927 = vst.msk [vmem:[#allocation3 + $0x60] sm:$0xff] %vm1914, %v1891
        %1928 = vst.msk [vmem:[#allocation3 + $0x68] sm:$0xff] %vm1914, %v1893
        %1929 = vst.msk [vmem:[#allocation3 + $0x70] sm:$0xff] %vm1914, %v1895
        %1930 = vst.msk [vmem:[#allocation3 + $0x78] sm:$0xff] %vm1914, %v1897
        %v1931 = vld [vmem:[%s267] sm:$0xf]
        %v1932 = vld [vmem:[%s267 + $0x4] sm:$0xf]
        %v1933 = vld [vmem:[%s267 + $0x8] sm:$0x1]
        %v1934 = vld [vmem:[%s267 + $0xc] sm:$0xf]
        %v1935 = vld [vmem:[%s267 + $0x10] sm:$0xf]
        %v1936 = vld [vmem:[%s267 + $0x14] sm:$0x1]
        %v1937 = vld [vmem:[%s267 + $0x18] sm:$0xf]
        %v1938 = vld [vmem:[%s267 + $0x1c] sm:$0xf]
        %v1939 = vld [vmem:[%s267 + $0x20] sm:$0x1]
        %v1940 = vld [vmem:[%s267 + $0x24] sm:$0xf]
        %v1941 = vld [vmem:[%s267 + $0x28] sm:$0xf]
        %v1942 = vld [vmem:[%s267 + $0x2c] sm:$0x1]
        %v1943 = vld [vmem:[%s267 + $0x30] sm:$0xf]
        %v1944 = vld [vmem:[%s267 + $0x34] sm:$0xf]
        %v1945 = vld [vmem:[%s267 + $0x38] sm:$0x1]
        %v1946 = vld [vmem:[%s267 + $0x3c] sm:$0xf]
        %v1947 = vld [vmem:[%s267 + $0x40] sm:$0xf]
        %v1948 = vld [vmem:[%s267 + $0x44] sm:$0x1]
        %v1949 = vld [vmem:[%s267 + $0x48] sm:$0xf]
        %v1950 = vld [vmem:[%s267 + $0x4c] sm:$0xf]
        %v1951 = vld [vmem:[%s267 + $0x50] sm:$0x1]
        %v1952 = vld [vmem:[%s267 + $0x54] sm:$0xf]
        %v1953 = vld [vmem:[%s267 + $0x58] sm:$0xf]
        %v1954 = vld [vmem:[%s267 + $0x5c] sm:$0x1]
        %v1955 = vld [vmem:[%s267 + $0x60] sm:$0xf]
        %v1956 = vld [vmem:[%s267 + $0x64] sm:$0xf]
        %v1957 = vld [vmem:[%s267 + $0x68] sm:$0x1]
        %v1958 = vld [vmem:[%s267 + $0x6c] sm:$0xf]
        %v1959 = vld [vmem:[%s267 + $0x70] sm:$0xf]
        %v1960 = vld [vmem:[%s267 + $0x74] sm:$0x1]
        %v1961 = vld [vmem:[%s267 + $0x78] sm:$0xf]
        %v1962 = vld [vmem:[%s267 + $0x7c] sm:$0xf]
        %v1963 = vld [vmem:[%s267 + $0x80] sm:$0x1]
        %v1964 = vld [vmem:[%s267 + $0x84] sm:$0xf]
        %v1965 = vld [vmem:[%s267 + $0x88] sm:$0xf]
        %v1966 = vld [vmem:[%s267 + $0x8c] sm:$0x1]
        %v1967 = vld [vmem:[%s267 + $0x90] sm:$0xf]
        %v1968 = vld [vmem:[%s267 + $0x94] sm:$0xf]
        %v1969 = vld [vmem:[%s267 + $0x98] sm:$0x1]
        %v1970 = vld [vmem:[%s267 + $0x9c] sm:$0xf]
        %v1971 = vld [vmem:[%s267 + $0xa0] sm:$0xf]
        %v1972 = vld [vmem:[%s267 + $0xa4] sm:$0x1]
        %v1973 = vld [vmem:[%s267 + $0xa8] sm:$0xf]
        %v1974 = vld [vmem:[%s267 + $0xac] sm:$0xf]
        %v1975 = vld [vmem:[%s267 + $0xb0] sm:$0x1]
        %v1976 = vld [vmem:[%s267 + $0xb4] sm:$0xf]
        %v1977 = vld [vmem:[%s267 + $0xb8] sm:$0xf]
        %v1978 = vld [vmem:[%s267 + $0xbc] sm:$0x1]
        %v2027 = vunpack.c.l.b16 %v1931
        %v2028 = vunpack.c.l.b16 %v1932
        %v2029 = vunpack.c.l.b16 %v1933
        %v2030 = vunpack.c.l.b16 %v1934
        %v2031 = vunpack.c.l.b16 %v1935
        %v2032 = vunpack.c.l.b16 %v1936
        %v2033 = vunpack.c.l.b16 %v1937
        %v2034 = vunpack.c.l.b16 %v1938
        %v2035 = vunpack.c.l.b16 %v1939
        %v2036 = vunpack.c.l.b16 %v1940
        %v2037 = vunpack.c.l.b16 %v1941
        %v2038 = vunpack.c.l.b16 %v1942
        %v2039 = vunpack.c.l.b16 %v1943
        %v2040 = vunpack.c.l.b16 %v1944
        %v2041 = vunpack.c.l.b16 %v1945
        %v2042 = vunpack.c.l.b16 %v1946
        %v2043 = vunpack.c.l.b16 %v1947
        %v2044 = vunpack.c.l.b16 %v1948
        %v2045 = vunpack.c.l.b16 %v1949
        %v2046 = vunpack.c.l.b16 %v1950
        %v2047 = vunpack.c.l.b16 %v1951
        %v2048 = vunpack.c.l.b16 %v1952
        %v2049 = vunpack.c.l.b16 %v1953
        %v2050 = vunpack.c.l.b16 %v1954
        %v2051 = vunpack.c.l.b16 %v1955
        %v2052 = vunpack.c.l.b16 %v1956
        %v2053 = vunpack.c.l.b16 %v1957
        %v2054 = vunpack.c.l.b16 %v1958
        %v2055 = vunpack.c.l.b16 %v1959
        %v2056 = vunpack.c.l.b16 %v1960
        %v2057 = vunpack.c.l.b16 %v1961
        %v2058 = vunpack.c.l.b16 %v1962
        %v2059 = vunpack.c.l.b16 %v1963
        %v2060 = vunpack.c.l.b16 %v1964
        %v2061 = vunpack.c.l.b16 %v1965
        %v2062 = vunpack.c.l.b16 %v1966
        %v2063 = vunpack.c.l.b16 %v1967
        %v2064 = vunpack.c.l.b16 %v1968
        %v2065 = vunpack.c.l.b16 %v1969
        %v2066 = vunpack.c.l.b16 %v1970
        %v2067 = vunpack.c.l.b16 %v1971
        %v2068 = vunpack.c.l.b16 %v1972
        %v2069 = vunpack.c.l.b16 %v1973
        %v2070 = vunpack.c.l.b16 %v1974
        %v2071 = vunpack.c.l.b16 %v1975
        %v2072 = vunpack.c.l.b16 %v1976
        %v2073 = vunpack.c.l.b16 %v1977
        %v2074 = vunpack.c.l.b16 %v1978
        %v2075 = vpack.c.b16 %v2028, %v2027
        %v2076 = vpack.c.b16 %v2029, %v2029
        %v2077 = vpack.c.b16 %v2031, %v2030
        %v2078 = vpack.c.b16 %v2032, %v2032
        %v2079 = vpack.c.b16 %v2034, %v2033
        %v2080 = vpack.c.b16 %v2035, %v2035
        %v2081 = vpack.c.b16 %v2037, %v2036
        %v2082 = vpack.c.b16 %v2038, %v2038
        %v2083 = vpack.c.b16 %v2040, %v2039
        %v2084 = vpack.c.b16 %v2041, %v2041
        %v2085 = vpack.c.b16 %v2043, %v2042
        %v2086 = vpack.c.b16 %v2044, %v2044
        %v2087 = vpack.c.b16 %v2046, %v2045
        %v2088 = vpack.c.b16 %v2047, %v2047
        %v2089 = vpack.c.b16 %v2049, %v2048
        %v2090 = vpack.c.b16 %v2050, %v2050
        %v2091 = vpack.c.b16 %v2052, %v2051
        %v2092 = vpack.c.b16 %v2053, %v2053
        %v2093 = vpack.c.b16 %v2055, %v2054
        %v2094 = vpack.c.b16 %v2056, %v2056
        %v2095 = vpack.c.b16 %v2058, %v2057
        %v2096 = vpack.c.b16 %v2059, %v2059
        %v2097 = vpack.c.b16 %v2061, %v2060
        %v2098 = vpack.c.b16 %v2062, %v2062
        %v2099 = vpack.c.b16 %v2064, %v2063
        %v2100 = vpack.c.b16 %v2065, %v2065
        %v2101 = vpack.c.b16 %v2067, %v2066
        %v2102 = vpack.c.b16 %v2068, %v2068
        %v2103 = vpack.c.b16 %v2070, %v2069
        %v2104 = vpack.c.b16 %v2071, %v2071
        %v2105 = vpack.c.b16 %v2073, %v2072
        %v2106 = vpack.c.b16 %v2074, %v2074
        %v2108 = vshrl.u32 %v2075, 16
        %v2110 = vshll.u32 %v2075, 16
        %v2112 = vrot.slane %v2110, 1
        %v2113 = vor.u32 %v2108, %v2112
        %v2115 = vshll.u32 %v2076, 16
        %v2117 = vrot.slane %v2115, 1
        %v2118 = vsel %vm1206, %v2113, %v2117
        %v2120 = vshrl.u32 %v2077, 16
        %v2122 = vshll.u32 %v2077, 16
        %v2124 = vrot.slane %v2122, 1
        %v2125 = vor.u32 %v2120, %v2124
        %v2127 = vshll.u32 %v2078, 16
        %v2129 = vrot.slane %v2127, 1
        %v2130 = vsel %vm1206, %v2125, %v2129
        %v2132 = vshrl.u32 %v2079, 16
        %v2134 = vshll.u32 %v2079, 16
        %v2136 = vrot.slane %v2134, 1
        %v2137 = vor.u32 %v2132, %v2136
        %v2139 = vshll.u32 %v2080, 16
        %v2141 = vrot.slane %v2139, 1
        %v2142 = vsel %vm1206, %v2137, %v2141
        %v2144 = vshrl.u32 %v2081, 16
        %v2146 = vshll.u32 %v2081, 16
        %v2148 = vrot.slane %v2146, 1
        %v2149 = vor.u32 %v2144, %v2148
        %v2151 = vshll.u32 %v2082, 16
        %v2153 = vrot.slane %v2151, 1
        %v2154 = vsel %vm1206, %v2149, %v2153
        %v2156 = vshrl.u32 %v2083, 16
        %v2158 = vshll.u32 %v2083, 16
        %v2160 = vrot.slane %v2158, 1
        %v2161 = vor.u32 %v2156, %v2160
        %v2163 = vshll.u32 %v2084, 16
        %v2165 = vrot.slane %v2163, 1
        %v2166 = vsel %vm1206, %v2161, %v2165
        %v2168 = vshrl.u32 %v2085, 16
        %v2170 = vshll.u32 %v2085, 16
        %v2172 = vrot.slane %v2170, 1
        %v2173 = vor.u32 %v2168, %v2172
        %v2175 = vshll.u32 %v2086, 16
        %v2177 = vrot.slane %v2175, 1
        %v2178 = vsel %vm1206, %v2173, %v2177
        %v2180 = vshrl.u32 %v2087, 16
        %v2182 = vshll.u32 %v2087, 16
        %v2184 = vrot.slane %v2182, 1
        %v2185 = vor.u32 %v2180, %v2184
        %v2187 = vshll.u32 %v2088, 16
        %v2189 = vrot.slane %v2187, 1
        %v2190 = vsel %vm1206, %v2185, %v2189
        %v2192 = vshrl.u32 %v2089, 16
        %v2194 = vshll.u32 %v2089, 16
        %v2196 = vrot.slane %v2194, 1
        %v2197 = vor.u32 %v2192, %v2196
        %v2199 = vshll.u32 %v2090, 16
        %v2201 = vrot.slane %v2199, 1
        %v2202 = vsel %vm1206, %v2197, %v2201
        %v2204 = vshrl.u32 %v2091, 16
        %v2206 = vshll.u32 %v2091, 16
        %v2208 = vrot.slane %v2206, 1
        %v2209 = vor.u32 %v2204, %v2208
        %v2211 = vshll.u32 %v2092, 16
        %v2213 = vrot.slane %v2211, 1
        %v2214 = vsel %vm1206, %v2209, %v2213
        %v2216 = vshrl.u32 %v2093, 16
        %v2218 = vshll.u32 %v2093, 16
        %v2220 = vrot.slane %v2218, 1
        %v2221 = vor.u32 %v2216, %v2220
        %v2223 = vshll.u32 %v2094, 16
        %v2225 = vrot.slane %v2223, 1
        %v2226 = vsel %vm1206, %v2221, %v2225
        %v2228 = vshrl.u32 %v2095, 16
        %v2230 = vshll.u32 %v2095, 16
        %v2232 = vrot.slane %v2230, 1
        %v2233 = vor.u32 %v2228, %v2232
        %v2235 = vshll.u32 %v2096, 16
        %v2237 = vrot.slane %v2235, 1
        %v2238 = vsel %vm1206, %v2233, %v2237
        %v2240 = vshrl.u32 %v2097, 16
        %v2242 = vshll.u32 %v2097, 16
        %v2244 = vrot.slane %v2242, 1
        %v2245 = vor.u32 %v2240, %v2244
        %v2247 = vshll.u32 %v2098, 16
        %v2249 = vrot.slane %v2247, 1
        %v2250 = vsel %vm1206, %v2245, %v2249
        %v2252 = vshrl.u32 %v2099, 16
        %v2254 = vshll.u32 %v2099, 16
        %v2256 = vrot.slane %v2254, 1
        %v2257 = vor.u32 %v2252, %v2256
        %v2259 = vshll.u32 %v2100, 16
        %v2261 = vrot.slane %v2259, 1
        %v2262 = vsel %vm1206, %v2257, %v2261
        %v2264 = vshrl.u32 %v2101, 16
        %v2266 = vshll.u32 %v2101, 16
        %v2268 = vrot.slane %v2266, 1
        %v2269 = vor.u32 %v2264, %v2268
        %v2271 = vshll.u32 %v2102, 16
        %v2273 = vrot.slane %v2271, 1
        %v2274 = vsel %vm1206, %v2269, %v2273
        %v2276 = vshrl.u32 %v2103, 16
        %v2278 = vshll.u32 %v2103, 16
        %v2280 = vrot.slane %v2278, 1
        %v2281 = vor.u32 %v2276, %v2280
        %v2283 = vshll.u32 %v2104, 16
        %v2285 = vrot.slane %v2283, 1
        %v2286 = vsel %vm1206, %v2281, %v2285
        %v2288 = vshrl.u32 %v2105, 16
        %v2290 = vshll.u32 %v2105, 16
        %v2292 = vrot.slane %v2290, 1
        %v2293 = vor.u32 %v2288, %v2292
        %v2295 = vshll.u32 %v2106, 16
        %v2297 = vrot.slane %v2295, 1
        %v2298 = vsel %vm1206, %v2293, %v2297
        %2299 = vrot.lane.b32.xlu0 %v2118, 16
        %v2300 = vpop.permute.xlu0 %2299
        %2301 = vrot.lane.b32.xlu0 %v2130, 16
        %v2302 = vpop.permute.xlu0 %2301
        %2303 = vrot.lane.b32.xlu0 %v2142, 16
        %v2304 = vpop.permute.xlu0 %2303
        %2305 = vrot.lane.b32.xlu0 %v2154, 16
        %v2306 = vpop.permute.xlu0 %2305
        %2307 = vrot.lane.b32.xlu0 %v2166, 16
        %v2308 = vpop.permute.xlu0 %2307
        %2309 = vrot.lane.b32.xlu0 %v2178, 16
        %v2310 = vpop.permute.xlu0 %2309
        %2311 = vrot.lane.b32.xlu0 %v2190, 16
        %v2312 = vpop.permute.xlu0 %2311
        %2313 = vrot.lane.b32.xlu0 %v2202, 16
        %v2314 = vpop.permute.xlu0 %2313
        %2315 = vrot.lane.b32.xlu0 %v2214, 16
        %v2316 = vpop.permute.xlu0 %2315
        %2317 = vrot.lane.b32.xlu0 %v2226, 16
        %v2318 = vpop.permute.xlu0 %2317
        %2319 = vrot.lane.b32.xlu0 %v2238, 16
        %v2320 = vpop.permute.xlu0 %2319
        %2321 = vrot.lane.b32.xlu0 %v2250, 16
        %v2322 = vpop.permute.xlu0 %2321
        %2323 = vrot.lane.b32.xlu0 %v2262, 16
        %v2324 = vpop.permute.xlu0 %2323
        %2325 = vrot.lane.b32.xlu0 %v2274, 16
        %v2326 = vpop.permute.xlu0 %2325
        %2327 = vrot.lane.b32.xlu0 %v2286, 16
        %v2328 = vpop.permute.xlu0 %2327
        %2329 = vrot.lane.b32.xlu0 %v2298, 16
        %v2330 = vpop.permute.xlu0 %2329
        %vm2347 = vcmask 162944
        %2348 = vst.msk [vmem:[#allocation3] sm:$0xff] %vm2347, %v2300
        %2349 = vst.msk [vmem:[#allocation3 + $0x8] sm:$0xff] %vm2347, %v2302
        %2350 = vst.msk [vmem:[#allocation3 + $0x10] sm:$0xff] %vm2347, %v2304
        %2351 = vst.msk [vmem:[#allocation3 + $0x18] sm:$0xff] %vm2347, %v2306
        %2352 = vst.msk [vmem:[#allocation3 + $0x20] sm:$0xff] %vm2347, %v2308
        %2353 = vst.msk [vmem:[#allocation3 + $0x28] sm:$0xff] %vm2347, %v2310
        %2354 = vst.msk [vmem:[#allocation3 + $0x30] sm:$0xff] %vm2347, %v2312
        %2355 = vst.msk [vmem:[#allocation3 + $0x38] sm:$0xff] %vm2347, %v2314
        %2356 = vst.msk [vmem:[#allocation3 + $0x40] sm:$0xff] %vm2347, %v2316
        %2357 = vst.msk [vmem:[#allocation3 + $0x48] sm:$0xff] %vm2347, %v2318
        %2358 = vst.msk [vmem:[#allocation3 + $0x50] sm:$0xff] %vm2347, %v2320
        %2359 = vst.msk [vmem:[#allocation3 + $0x58] sm:$0xff] %vm2347, %v2322
        %2360 = vst.msk [vmem:[#allocation3 + $0x60] sm:$0xff] %vm2347, %v2324
        %2361 = vst.msk [vmem:[#allocation3 + $0x68] sm:$0xff] %vm2347, %v2326
        %2362 = vst.msk [vmem:[#allocation3 + $0x70] sm:$0xff] %vm2347, %v2328
        %2363 = vst.msk [vmem:[#allocation3 + $0x78] sm:$0xff] %vm2347, %v2330
        %v2364 = vld [vmem:[%s267] sm:$0xe]
        %v2365 = vld [vmem:[%s267 + $0x4] sm:$0xf]
        %v2366 = vld [vmem:[%s267 + $0x8] sm:$0x1]
        %v2367 = vld [vmem:[%s267 + $0xc] sm:$0xe]
        %v2368 = vld [vmem:[%s267 + $0x10] sm:$0xf]
        %v2369 = vld [vmem:[%s267 + $0x14] sm:$0x1]
        %v2370 = vld [vmem:[%s267 + $0x18] sm:$0xe]
        %v2371 = vld [vmem:[%s267 + $0x1c] sm:$0xf]
        %v2372 = vld [vmem:[%s267 + $0x20] sm:$0x1]
        %v2373 = vld [vmem:[%s267 + $0x24] sm:$0xe]
        %v2374 = vld [vmem:[%s267 + $0x28] sm:$0xf]
        %v2375 = vld [vmem:[%s267 + $0x2c] sm:$0x1]
        %v2376 = vld [vmem:[%s267 + $0x30] sm:$0xe]
        %v2377 = vld [vmem:[%s267 + $0x34] sm:$0xf]
        %v2378 = vld [vmem:[%s267 + $0x38] sm:$0x1]
        %v2379 = vld [vmem:[%s267 + $0x3c] sm:$0xe]
        %v2380 = vld [vmem:[%s267 + $0x40] sm:$0xf]
        %v2381 = vld [vmem:[%s267 + $0x44] sm:$0x1]
        %v2382 = vld [vmem:[%s267 + $0x48] sm:$0xe]
        %v2383 = vld [vmem:[%s267 + $0x4c] sm:$0xf]
        %v2384 = vld [vmem:[%s267 + $0x50] sm:$0x1]
        %v2385 = vld [vmem:[%s267 + $0x54] sm:$0xe]
        %v2386 = vld [vmem:[%s267 + $0x58] sm:$0xf]
        %v2387 = vld [vmem:[%s267 + $0x5c] sm:$0x1]
        %v2388 = vld [vmem:[%s267 + $0x60] sm:$0xe]
        %v2389 = vld [vmem:[%s267 + $0x64] sm:$0xf]
        %v2390 = vld [vmem:[%s267 + $0x68] sm:$0x1]
        %v2391 = vld [vmem:[%s267 + $0x6c] sm:$0xe]
        %v2392 = vld [vmem:[%s267 + $0x70] sm:$0xf]
        %v2393 = vld [vmem:[%s267 + $0x74] sm:$0x1]
        %v2394 = vld [vmem:[%s267 + $0x78] sm:$0xe]
        %v2395 = vld [vmem:[%s267 + $0x7c] sm:$0xf]
        %v2396 = vld [vmem:[%s267 + $0x80] sm:$0x1]
        %v2397 = vld [vmem:[%s267 + $0x84] sm:$0xe]
        %v2398 = vld [vmem:[%s267 + $0x88] sm:$0xf]
        %v2399 = vld [vmem:[%s267 + $0x8c] sm:$0x1]
        %v2400 = vld [vmem:[%s267 + $0x90] sm:$0xe]
        %v2401 = vld [vmem:[%s267 + $0x94] sm:$0xf]
        %v2402 = vld [vmem:[%s267 + $0x98] sm:$0x1]
        %v2403 = vld [vmem:[%s267 + $0x9c] sm:$0xe]
        %v2404 = vld [vmem:[%s267 + $0xa0] sm:$0xf]
        %v2405 = vld [vmem:[%s267 + $0xa4] sm:$0x1]
        %v2406 = vld [vmem:[%s267 + $0xa8] sm:$0xe]
        %v2407 = vld [vmem:[%s267 + $0xac] sm:$0xf]
        %v2408 = vld [vmem:[%s267 + $0xb0] sm:$0x1]
        %v2409 = vld [vmem:[%s267 + $0xb4] sm:$0xe]
        %v2410 = vld [vmem:[%s267 + $0xb8] sm:$0xf]
        %v2411 = vld [vmem:[%s267 + $0xbc] sm:$0x1]
        %v2460 = vunpack.c.l.b16 %v2364
        %v2461 = vunpack.c.l.b16 %v2365
        %v2462 = vunpack.c.l.b16 %v2366
        %v2463 = vunpack.c.l.b16 %v2367
        %v2464 = vunpack.c.l.b16 %v2368
        %v2465 = vunpack.c.l.b16 %v2369
        %v2466 = vunpack.c.l.b16 %v2370
        %v2467 = vunpack.c.l.b16 %v2371
        %v2468 = vunpack.c.l.b16 %v2372
        %v2469 = vunpack.c.l.b16 %v2373
        %v2470 = vunpack.c.l.b16 %v2374
        %v2471 = vunpack.c.l.b16 %v2375
        %v2472 = vunpack.c.l.b16 %v2376
        %v2473 = vunpack.c.l.b16 %v2377
        %v2474 = vunpack.c.l.b16 %v2378
        %v2475 = vunpack.c.l.b16 %v2379
        %v2476 = vunpack.c.l.b16 %v2380
        %v2477 = vunpack.c.l.b16 %v2381
        %v2478 = vunpack.c.l.b16 %v2382
        %v2479 = vunpack.c.l.b16 %v2383
        %v2480 = vunpack.c.l.b16 %v2384
        %v2481 = vunpack.c.l.b16 %v2385
        %v2482 = vunpack.c.l.b16 %v2386
        %v2483 = vunpack.c.l.b16 %v2387
        %v2484 = vunpack.c.l.b16 %v2388
        %v2485 = vunpack.c.l.b16 %v2389
        %v2486 = vunpack.c.l.b16 %v2390
        %v2487 = vunpack.c.l.b16 %v2391
        %v2488 = vunpack.c.l.b16 %v2392
        %v2489 = vunpack.c.l.b16 %v2393
        %v2490 = vunpack.c.l.b16 %v2394
        %v2491 = vunpack.c.l.b16 %v2395
        %v2492 = vunpack.c.l.b16 %v2396
        %v2493 = vunpack.c.l.b16 %v2397
        %v2494 = vunpack.c.l.b16 %v2398
        %v2495 = vunpack.c.l.b16 %v2399
        %v2496 = vunpack.c.l.b16 %v2400
        %v2497 = vunpack.c.l.b16 %v2401
        %v2498 = vunpack.c.l.b16 %v2402
        %v2499 = vunpack.c.l.b16 %v2403
        %v2500 = vunpack.c.l.b16 %v2404
        %v2501 = vunpack.c.l.b16 %v2405
        %v2502 = vunpack.c.l.b16 %v2406
        %v2503 = vunpack.c.l.b16 %v2407
        %v2504 = vunpack.c.l.b16 %v2408
        %v2505 = vunpack.c.l.b16 %v2409
        %v2506 = vunpack.c.l.b16 %v2410
        %v2507 = vunpack.c.l.b16 %v2411
        %v2508 = vpack.c.b16 %v2461, %v2460
        %v2509 = vpack.c.b16 %v2462, %v2462
        %v2510 = vpack.c.b16 %v2464, %v2463
        %v2511 = vpack.c.b16 %v2465, %v2465
        %v2512 = vpack.c.b16 %v2467, %v2466
        %v2513 = vpack.c.b16 %v2468, %v2468
        %v2514 = vpack.c.b16 %v2470, %v2469
        %v2515 = vpack.c.b16 %v2471, %v2471
        %v2516 = vpack.c.b16 %v2473, %v2472
        %v2517 = vpack.c.b16 %v2474, %v2474
        %v2518 = vpack.c.b16 %v2476, %v2475
        %v2519 = vpack.c.b16 %v2477, %v2477
        %v2520 = vpack.c.b16 %v2479, %v2478
        %v2521 = vpack.c.b16 %v2480, %v2480
        %v2522 = vpack.c.b16 %v2482, %v2481
        %v2523 = vpack.c.b16 %v2483, %v2483
        %v2524 = vpack.c.b16 %v2485, %v2484
        %v2525 = vpack.c.b16 %v2486, %v2486
        %v2526 = vpack.c.b16 %v2488, %v2487
        %v2527 = vpack.c.b16 %v2489, %v2489
        %v2528 = vpack.c.b16 %v2491, %v2490
        %v2529 = vpack.c.b16 %v2492, %v2492
        %v2530 = vpack.c.b16 %v2494, %v2493
        %v2531 = vpack.c.b16 %v2495, %v2495
        %v2532 = vpack.c.b16 %v2497, %v2496
        %v2533 = vpack.c.b16 %v2498, %v2498
        %v2534 = vpack.c.b16 %v2500, %v2499
        %v2535 = vpack.c.b16 %v2501, %v2501
        %v2536 = vpack.c.b16 %v2503, %v2502
        %v2537 = vpack.c.b16 %v2504, %v2504
        %v2538 = vpack.c.b16 %v2506, %v2505
        %v2539 = vpack.c.b16 %v2507, %v2507
        %v2540 = vrot.slane %v2508, 1
        %v2541 = vrot.slane %v2509, 1
        %v2542 = vsel %vm1640, %v2540, %v2541
        %v2543 = vrot.slane %v2510, 1
        %v2544 = vrot.slane %v2511, 1
        %v2545 = vsel %vm1640, %v2543, %v2544
        %v2546 = vrot.slane %v2512, 1
        %v2547 = vrot.slane %v2513, 1
        %v2548 = vsel %vm1640, %v2546, %v2547
        %v2549 = vrot.slane %v2514, 1
        %v2550 = vrot.slane %v2515, 1
        %v2551 = vsel %vm1640, %v2549, %v2550
        %v2552 = vrot.slane %v2516, 1
        %v2553 = vrot.slane %v2517, 1
        %v2554 = vsel %vm1640, %v2552, %v2553
        %v2555 = vrot.slane %v2518, 1
        %v2556 = vrot.slane %v2519, 1
        %v2557 = vsel %vm1640, %v2555, %v2556
        %v2558 = vrot.slane %v2520, 1
        %v2559 = vrot.slane %v2521, 1
        %v2560 = vsel %vm1640, %v2558, %v2559
        %v2561 = vrot.slane %v2522, 1
        %v2562 = vrot.slane %v2523, 1
        %v2563 = vsel %vm1640, %v2561, %v2562
        %v2564 = vrot.slane %v2524, 1
        %v2565 = vrot.slane %v2525, 1
        %v2566 = vsel %vm1640, %v2564, %v2565
        %v2567 = vrot.slane %v2526, 1
        %v2568 = vrot.slane %v2527, 1
        %v2569 = vsel %vm1640, %v2567, %v2568
        %v2570 = vrot.slane %v2528, 1
        %v2571 = vrot.slane %v2529, 1
        %v2572 = vsel %vm1640, %v2570, %v2571
        %v2573 = vrot.slane %v2530, 1
        %v2574 = vrot.slane %v2531, 1
        %v2575 = vsel %vm1640, %v2573, %v2574
        %v2576 = vrot.slane %v2532, 1
        %v2577 = vrot.slane %v2533, 1
        %v2578 = vsel %vm1640, %v2576, %v2577
        %v2579 = vrot.slane %v2534, 1
        %v2580 = vrot.slane %v2535, 1
        %v2581 = vsel %vm1640, %v2579, %v2580
        %v2582 = vrot.slane %v2536, 1
        %v2583 = vrot.slane %v2537, 1
        %v2584 = vsel %vm1640, %v2582, %v2583
        %v2585 = vrot.slane %v2538, 1
        %v2586 = vrot.slane %v2539, 1
        %v2587 = vsel %vm1640, %v2585, %v2586
        %2588 = vrot.lane.b32.xlu0 %v2542, 20
        %v2589 = vpop.permute.xlu0 %2588
        %2590 = vrot.lane.b32.xlu0 %v2545, 20
        %v2591 = vpop.permute.xlu0 %2590
        %2592 = vrot.lane.b32.xlu0 %v2548, 20
        %v2593 = vpop.permute.xlu0 %2592
        %2594 = vrot.lane.b32.xlu0 %v2551, 20
        %v2595 = vpop.permute.xlu0 %2594
        %2596 = vrot.lane.b32.xlu0 %v2554, 20
        %v2597 = vpop.permute.xlu0 %2596
        %2598 = vrot.lane.b32.xlu0 %v2557, 20
        %v2599 = vpop.permute.xlu0 %2598
        %2600 = vrot.lane.b32.xlu0 %v2560, 20
        %v2601 = vpop.permute.xlu0 %2600
        %2602 = vrot.lane.b32.xlu0 %v2563, 20
        %v2603 = vpop.permute.xlu0 %2602
        %2604 = vrot.lane.b32.xlu0 %v2566, 20
        %v2605 = vpop.permute.xlu0 %2604
        %2606 = vrot.lane.b32.xlu0 %v2569, 20
        %v2607 = vpop.permute.xlu0 %2606
        %2608 = vrot.lane.b32.xlu0 %v2572, 20
        %v2609 = vpop.permute.xlu0 %2608
        %2610 = vrot.lane.b32.xlu0 %v2575, 20
        %v2611 = vpop.permute.xlu0 %2610
        %2612 = vrot.lane.b32.xlu0 %v2578, 20
        %v2613 = vpop.permute.xlu0 %2612
        %2614 = vrot.lane.b32.xlu0 %v2581, 20
        %v2615 = vpop.permute.xlu0 %2614
        %2616 = vrot.lane.b32.xlu0 %v2584, 20
        %v2617 = vpop.permute.xlu0 %2616
        %2618 = vrot.lane.b32.xlu0 %v2587, 20
        %v2619 = vpop.permute.xlu0 %2618
        %vm2636 = vcmask 195744
        %2637 = vst.msk [vmem:[#allocation3] sm:$0xff] %vm2636, %v2589
        %2638 = vst.msk [vmem:[#allocation3 + $0x8] sm:$0xff] %vm2636, %v2591
        %2639 = vst.msk [vmem:[#allocation3 + $0x10] sm:$0xff] %vm2636, %v2593
        %2640 = vst.msk [vmem:[#allocation3 + $0x18] sm:$0xff] %vm2636, %v2595
        %2641 = vst.msk [vmem:[#allocation3 + $0x20] sm:$0xff] %vm2636, %v2597
        %2642 = vst.msk [vmem:[#allocation3 + $0x28] sm:$0xff] %vm2636, %v2599
        %2643 = vst.msk [vmem:[#allocation3 + $0x30] sm:$0xff] %vm2636, %v2601
        %2644 = vst.msk [vmem:[#allocation3 + $0x38] sm:$0xff] %vm2636, %v2603
        %2645 = vst.msk [vmem:[#allocation3 + $0x40] sm:$0xff] %vm2636, %v2605
        %2646 = vst.msk [vmem:[#allocation3 + $0x48] sm:$0xff] %vm2636, %v2607
        %2647 = vst.msk [vmem:[#allocation3 + $0x50] sm:$0xff] %vm2636, %v2609
        %2648 = vst.msk [vmem:[#allocation3 + $0x58] sm:$0xff] %vm2636, %v2611
        %2649 = vst.msk [vmem:[#allocation3 + $0x60] sm:$0xff] %vm2636, %v2613
        %2650 = vst.msk [vmem:[#allocation3 + $0x68] sm:$0xff] %vm2636, %v2615
        %2651 = vst.msk [vmem:[#allocation3 + $0x70] sm:$0xff] %vm2636, %v2617
        %2652 = vst.msk [vmem:[#allocation3 + $0x78] sm:$0xff] %vm2636, %v2619
        %s2653 = scalar_lea.vmem [#allocation2], 24
        %v2654 = vld [vmem:[%s2653] sm:$0xf]
        %v2655 = vld [vmem:[%s2653 + $0x4] sm:$0xf]
        %v2656 = vld [vmem:[%s2653 + $0xc] sm:$0xf]
        %v2657 = vld [vmem:[%s2653 + $0x10] sm:$0xf]
        %v2658 = vld [vmem:[%s2653 + $0x18] sm:$0xf]
        %v2659 = vld [vmem:[%s2653 + $0x1c] sm:$0xf]
        %v2660 = vld [vmem:[%s2653 + $0x24] sm:$0xf]
        %v2661 = vld [vmem:[%s2653 + $0x28] sm:$0xf]
        %v2662 = vld [vmem:[%s2653 + $0x30] sm:$0xf]
        %v2663 = vld [vmem:[%s2653 + $0x34] sm:$0xf]
        %v2664 = vld [vmem:[%s2653 + $0x3c] sm:$0xf]
        %v2665 = vld [vmem:[%s2653 + $0x40] sm:$0xf]
        %v2666 = vld [vmem:[%s2653 + $0x48] sm:$0xf]
        %v2667 = vld [vmem:[%s2653 + $0x4c] sm:$0xf]
        %v2668 = vld [vmem:[%s2653 + $0x54] sm:$0xf]
        %v2669 = vld [vmem:[%s2653 + $0x58] sm:$0xf]
        %v2670 = vld [vmem:[%s2653 + $0x60] sm:$0xf]
        %v2671 = vld [vmem:[%s2653 + $0x64] sm:$0xf]
        %v2672 = vld [vmem:[%s2653 + $0x6c] sm:$0xf]
        %v2673 = vld [vmem:[%s2653 + $0x70] sm:$0xf]
        %v2674 = vld [vmem:[%s2653 + $0x78] sm:$0xf]
        %v2675 = vld [vmem:[%s2653 + $0x7c] sm:$0xf]
        %v2676 = vld [vmem:[%s2653 + $0x84] sm:$0xf]
        %v2677 = vld [vmem:[%s2653 + $0x88] sm:$0xf]
        %v2678 = vld [vmem:[%s2653 + $0x90] sm:$0xf]
        %v2679 = vld [vmem:[%s2653 + $0x94] sm:$0xf]
        %v2680 = vld [vmem:[%s2653 + $0x9c] sm:$0xf]
        %v2681 = vld [vmem:[%s2653 + $0xa0] sm:$0xf]
        %v2682 = vld [vmem:[%s2653 + $0xa8] sm:$0xf]
        %v2683 = vld [vmem:[%s2653 + $0xac] sm:$0xf]
        %v2684 = vld [vmem:[%s2653 + $0xb4] sm:$0xf]
        %v2685 = vld [vmem:[%s2653 + $0xb8] sm:$0xf]
        %v2718 = vunpack.c.l.b16 %v2654
        %v2719 = vunpack.c.l.b16 %v2655
        %v2720 = vunpack.c.l.b16 %v2656
        %v2721 = vunpack.c.l.b16 %v2657
        %v2722 = vunpack.c.l.b16 %v2658
        %v2723 = vunpack.c.l.b16 %v2659
        %v2724 = vunpack.c.l.b16 %v2660
        %v2725 = vunpack.c.l.b16 %v2661
        %v2726 = vunpack.c.l.b16 %v2662
        %v2727 = vunpack.c.l.b16 %v2663
        %v2728 = vunpack.c.l.b16 %v2664
        %v2729 = vunpack.c.l.b16 %v2665
        %v2730 = vunpack.c.l.b16 %v2666
        %v2731 = vunpack.c.l.b16 %v2667
        %v2732 = vunpack.c.l.b16 %v2668
        %v2733 = vunpack.c.l.b16 %v2669
        %v2734 = vunpack.c.l.b16 %v2670
        %v2735 = vunpack.c.l.b16 %v2671
        %v2736 = vunpack.c.l.b16 %v2672
        %v2737 = vunpack.c.l.b16 %v2673
        %v2738 = vunpack.c.l.b16 %v2674
        %v2739 = vunpack.c.l.b16 %v2675
        %v2740 = vunpack.c.l.b16 %v2676
        %v2741 = vunpack.c.l.b16 %v2677
        %v2742 = vunpack.c.l.b16 %v2678
        %v2743 = vunpack.c.l.b16 %v2679
        %v2744 = vunpack.c.l.b16 %v2680
        %v2745 = vunpack.c.l.b16 %v2681
        %v2746 = vunpack.c.l.b16 %v2682
        %v2747 = vunpack.c.l.b16 %v2683
        %v2748 = vunpack.c.l.b16 %v2684
        %v2749 = vunpack.c.l.b16 %v2685
        %v2750 = vpack.c.b16 %v2719, %v2718
        %v2751 = vpack.c.b16 %v2721, %v2720
        %v2752 = vpack.c.b16 %v2723, %v2722
        %v2753 = vpack.c.b16 %v2725, %v2724
        %v2754 = vpack.c.b16 %v2727, %v2726
        %v2755 = vpack.c.b16 %v2729, %v2728
        %v2756 = vpack.c.b16 %v2731, %v2730
        %v2757 = vpack.c.b16 %v2733, %v2732
        %v2758 = vpack.c.b16 %v2735, %v2734
        %v2759 = vpack.c.b16 %v2737, %v2736
        %v2760 = vpack.c.b16 %v2739, %v2738
        %v2761 = vpack.c.b16 %v2741, %v2740
        %v2762 = vpack.c.b16 %v2743, %v2742
        %v2763 = vpack.c.b16 %v2745, %v2744
        %v2764 = vpack.c.b16 %v2747, %v2746
        %v2765 = vpack.c.b16 %v2749, %v2748
        %2766 = vrot.lane.b32.xlu0 %v2750, 24
        %v2767 = vpop.permute.xlu0 %2766
        %2768 = vrot.lane.b32.xlu0 %v2751, 24
        %v2769 = vpop.permute.xlu0 %2768
        %2770 = vrot.lane.b32.xlu0 %v2752, 24
        %v2771 = vpop.permute.xlu0 %2770
        %2772 = vrot.lane.b32.xlu0 %v2753, 24
        %v2773 = vpop.permute.xlu0 %2772
        %2774 = vrot.lane.b32.xlu0 %v2754, 24
        %v2775 = vpop.permute.xlu0 %2774
        %2776 = vrot.lane.b32.xlu0 %v2755, 24
        %v2777 = vpop.permute.xlu0 %2776
        %2778 = vrot.lane.b32.xlu0 %v2756, 24
        %v2779 = vpop.permute.xlu0 %2778
        %2780 = vrot.lane.b32.xlu0 %v2757, 24
        %v2781 = vpop.permute.xlu0 %2780
        %2782 = vrot.lane.b32.xlu0 %v2758, 24
        %v2783 = vpop.permute.xlu0 %2782
        %2784 = vrot.lane.b32.xlu0 %v2759, 24
        %v2785 = vpop.permute.xlu0 %2784
        %2786 = vrot.lane.b32.xlu0 %v2760, 24
        %v2787 = vpop.permute.xlu0 %2786
        %2788 = vrot.lane.b32.xlu0 %v2761, 24
        %v2789 = vpop.permute.xlu0 %2788
        %2790 = vrot.lane.b32.xlu0 %v2762, 24
        %v2791 = vpop.permute.xlu0 %2790
        %2792 = vrot.lane.b32.xlu0 %v2763, 24
        %v2793 = vpop.permute.xlu0 %2792
        %2794 = vrot.lane.b32.xlu0 %v2764, 24
        %v2795 = vpop.permute.xlu0 %2794
        %2796 = vrot.lane.b32.xlu0 %v2765, 24
        %v2797 = vpop.permute.xlu0 %2796
        %vm2814 = vcmask 228544
        %2815 = vst.msk [vmem:[#allocation3] sm:$0xff] %vm2814, %v2767
        %2816 = vst.msk [vmem:[#allocation3 + $0x8] sm:$0xff] %vm2814, %v2769
        %2817 = vst.msk [vmem:[#allocation3 + $0x10] sm:$0xff] %vm2814, %v2771
        %2818 = vst.msk [vmem:[#allocation3 + $0x18] sm:$0xff] %vm2814, %v2773
        %2819 = vst.msk [vmem:[#allocation3 + $0x20] sm:$0xff] %vm2814, %v2775
        %2820 = vst.msk [vmem:[#allocation3 + $0x28] sm:$0xff] %vm2814, %v2777
        %2821 = vst.msk [vmem:[#allocation3 + $0x30] sm:$0xff] %vm2814, %v2779
        %2822 = vst.msk [vmem:[#allocation3 + $0x38] sm:$0xff] %vm2814, %v2781
        %2823 = vst.msk [vmem:[#allocation3 + $0x40] sm:$0xff] %vm2814, %v2783
        %2824 = vst.msk [vmem:[#allocation3 + $0x48] sm:$0xff] %vm2814, %v2785
        %2825 = vst.msk [vmem:[#allocation3 + $0x50] sm:$0xff] %vm2814, %v2787
        %2826 = vst.msk [vmem:[#allocation3 + $0x58] sm:$0xff] %vm2814, %v2789
        %2827 = vst.msk [vmem:[#allocation3 + $0x60] sm:$0xff] %vm2814, %v2791
        %2828 = vst.msk [vmem:[#allocation3 + $0x68] sm:$0xff] %vm2814, %v2793
        %2829 = vst.msk [vmem:[#allocation3 + $0x70] sm:$0xff] %vm2814, %v2795
        %2830 = vst.msk [vmem:[#allocation3 + $0x78] sm:$0xff] %vm2814, %v2797
        %v2831 = vld [vmem:[%s2653] sm:$0xf]
        %v2832 = vld [vmem:[%s2653 + $0x4] sm:$0xf]
        %v2833 = vld [vmem:[%s2653 + $0x8] sm:$0x1]
        %v2834 = vld [vmem:[%s2653 + $0xc] sm:$0xf]
        %v2835 = vld [vmem:[%s2653 + $0x10] sm:$0xf]
        %v2836 = vld [vmem:[%s2653 + $0x14] sm:$0x1]
        %v2837 = vld [vmem:[%s2653 + $0x18] sm:$0xf]
        %v2838 = vld [vmem:[%s2653 + $0x1c] sm:$0xf]
        %v2839 = vld [vmem:[%s2653 + $0x20] sm:$0x1]
        %v2840 = vld [vmem:[%s2653 + $0x24] sm:$0xf]
        %v2841 = vld [vmem:[%s2653 + $0x28] sm:$0xf]
        %v2842 = vld [vmem:[%s2653 + $0x2c] sm:$0x1]
        %v2843 = vld [vmem:[%s2653 + $0x30] sm:$0xf]
        %v2844 = vld [vmem:[%s2653 + $0x34] sm:$0xf]
        %v2845 = vld [vmem:[%s2653 + $0x38] sm:$0x1]
        %v2846 = vld [vmem:[%s2653 + $0x3c] sm:$0xf]
        %v2847 = vld [vmem:[%s2653 + $0x40] sm:$0xf]
        %v2848 = vld [vmem:[%s2653 + $0x44] sm:$0x1]
        %v2849 = vld [vmem:[%s2653 + $0x48] sm:$0xf]
        %v2850 = vld [vmem:[%s2653 + $0x4c] sm:$0xf]
        %v2851 = vld [vmem:[%s2653 + $0x50] sm:$0x1]
        %v2852 = vld [vmem:[%s2653 + $0x54] sm:$0xf]
        %v2853 = vld [vmem:[%s2653 + $0x58] sm:$0xf]
        %v2854 = vld [vmem:[%s2653 + $0x5c] sm:$0x1]
        %v2855 = vld [vmem:[%s2653 + $0x60] sm:$0xf]
        %v2856 = vld [vmem:[%s2653 + $0x64] sm:$0xf]
        %v2857 = vld [vmem:[%s2653 + $0x68] sm:$0x1]
        %v2858 = vld [vmem:[%s2653 + $0x6c] sm:$0xf]
        %v2859 = vld [vmem:[%s2653 + $0x70] sm:$0xf]
        %v2860 = vld [vmem:[%s2653 + $0x74] sm:$0x1]
        %v2861 = vld [vmem:[%s2653 + $0x78] sm:$0xf]
        %v2862 = vld [vmem:[%s2653 + $0x7c] sm:$0xf]
        %v2863 = vld [vmem:[%s2653 + $0x80] sm:$0x1]
        %v2864 = vld [vmem:[%s2653 + $0x84] sm:$0xf]
        %v2865 = vld [vmem:[%s2653 + $0x88] sm:$0xf]
        %v2866 = vld [vmem:[%s2653 + $0x8c] sm:$0x1]
        %v2867 = vld [vmem:[%s2653 + $0x90] sm:$0xf]
        %v2868 = vld [vmem:[%s2653 + $0x94] sm:$0xf]
        %v2869 = vld [vmem:[%s2653 + $0x98] sm:$0x1]
        %v2870 = vld [vmem:[%s2653 + $0x9c] sm:$0xf]
        %v2871 = vld [vmem:[%s2653 + $0xa0] sm:$0xf]
        %v2872 = vld [vmem:[%s2653 + $0xa4] sm:$0x1]
        %v2873 = vld [vmem:[%s2653 + $0xa8] sm:$0xf]
        %v2874 = vld [vmem:[%s2653 + $0xac] sm:$0xf]
        %v2875 = vld [vmem:[%s2653 + $0xb0] sm:$0x1]
        %v2876 = vld [vmem:[%s2653 + $0xb4] sm:$0xf]
        %v2877 = vld [vmem:[%s2653 + $0xb8] sm:$0xf]
        %v2878 = vld [vmem:[%s2653 + $0xbc] sm:$0x1]
        %v2927 = vunpack.c.l.b16 %v2831
        %v2928 = vunpack.c.l.b16 %v2832
        %v2929 = vunpack.c.l.b16 %v2833
        %v2930 = vunpack.c.l.b16 %v2834
        %v2931 = vunpack.c.l.b16 %v2835
        %v2932 = vunpack.c.l.b16 %v2836
        %v2933 = vunpack.c.l.b16 %v2837
        %v2934 = vunpack.c.l.b16 %v2838
        %v2935 = vunpack.c.l.b16 %v2839
        %v2936 = vunpack.c.l.b16 %v2840
        %v2937 = vunpack.c.l.b16 %v2841
        %v2938 = vunpack.c.l.b16 %v2842
        %v2939 = vunpack.c.l.b16 %v2843
        %v2940 = vunpack.c.l.b16 %v2844
        %v2941 = vunpack.c.l.b16 %v2845
        %v2942 = vunpack.c.l.b16 %v2846
        %v2943 = vunpack.c.l.b16 %v2847
        %v2944 = vunpack.c.l.b16 %v2848
        %v2945 = vunpack.c.l.b16 %v2849
        %v2946 = vunpack.c.l.b16 %v2850
        %v2947 = vunpack.c.l.b16 %v2851
        %v2948 = vunpack.c.l.b16 %v2852
        %v2949 = vunpack.c.l.b16 %v2853
        %v2950 = vunpack.c.l.b16 %v2854
        %v2951 = vunpack.c.l.b16 %v2855
        %v2952 = vunpack.c.l.b16 %v2856
        %v2953 = vunpack.c.l.b16 %v2857
        %v2954 = vunpack.c.l.b16 %v2858
        %v2955 = vunpack.c.l.b16 %v2859
        %v2956 = vunpack.c.l.b16 %v2860
        %v2957 = vunpack.c.l.b16 %v2861
        %v2958 = vunpack.c.l.b16 %v2862
        %v2959 = vunpack.c.l.b16 %v2863
        %v2960 = vunpack.c.l.b16 %v2864
        %v2961 = vunpack.c.l.b16 %v2865
        %v2962 = vunpack.c.l.b16 %v2866
        %v2963 = vunpack.c.l.b16 %v2867
        %v2964 = vunpack.c.l.b16 %v2868
        %v2965 = vunpack.c.l.b16 %v2869
        %v2966 = vunpack.c.l.b16 %v2870
        %v2967 = vunpack.c.l.b16 %v2871
        %v2968 = vunpack.c.l.b16 %v2872
        %v2969 = vunpack.c.l.b16 %v2873
        %v2970 = vunpack.c.l.b16 %v2874
        %v2971 = vunpack.c.l.b16 %v2875
        %v2972 = vunpack.c.l.b16 %v2876
        %v2973 = vunpack.c.l.b16 %v2877
        %v2974 = vunpack.c.l.b16 %v2878
        %v2975 = vpack.c.b16 %v2928, %v2927
        %v2976 = vpack.c.b16 %v2929, %v2929
        %v2977 = vpack.c.b16 %v2931, %v2930
        %v2978 = vpack.c.b16 %v2932, %v2932
        %v2979 = vpack.c.b16 %v2934, %v2933
        %v2980 = vpack.c.b16 %v2935, %v2935
        %v2981 = vpack.c.b16 %v2937, %v2936
        %v2982 = vpack.c.b16 %v2938, %v2938
        %v2983 = vpack.c.b16 %v2940, %v2939
        %v2984 = vpack.c.b16 %v2941, %v2941
        %v2985 = vpack.c.b16 %v2943, %v2942
        %v2986 = vpack.c.b16 %v2944, %v2944
        %v2987 = vpack.c.b16 %v2946, %v2945
        %v2988 = vpack.c.b16 %v2947, %v2947
        %v2989 = vpack.c.b16 %v2949, %v2948
        %v2990 = vpack.c.b16 %v2950, %v2950
        %v2991 = vpack.c.b16 %v2952, %v2951
        %v2992 = vpack.c.b16 %v2953, %v2953
        %v2993 = vpack.c.b16 %v2955, %v2954
        %v2994 = vpack.c.b16 %v2956, %v2956
        %v2995 = vpack.c.b16 %v2958, %v2957
        %v2996 = vpack.c.b16 %v2959, %v2959
        %v2997 = vpack.c.b16 %v2961, %v2960
        %v2998 = vpack.c.b16 %v2962, %v2962
        %v2999 = vpack.c.b16 %v2964, %v2963
        %v3000 = vpack.c.b16 %v2965, %v2965
        %v3001 = vpack.c.b16 %v2967, %v2966
        %v3002 = vpack.c.b16 %v2968, %v2968
        %v3003 = vpack.c.b16 %v2970, %v2969
        %v3004 = vpack.c.b16 %v2971, %v2971
        %v3005 = vpack.c.b16 %v2973, %v2972
        %v3006 = vpack.c.b16 %v2974, %v2974
        %v3008 = vshrl.u32 %v2975, 16
        %v3010 = vshll.u32 %v2975, 16
        %v3012 = vrot.slane %v3010, 1
        %v3013 = vor.u32 %v3008, %v3012
        %v3015 = vshll.u32 %v2976, 16
        %v3017 = vrot.slane %v3015, 1
        %v3018 = vsel %vm1206, %v3013, %v3017
        %v3020 = vshrl.u32 %v2977, 16
        %v3022 = vshll.u32 %v2977, 16
        %v3024 = vrot.slane %v3022, 1
        %v3025 = vor.u32 %v3020, %v3024
        %v3027 = vshll.u32 %v2978, 16
        %v3029 = vrot.slane %v3027, 1
        %v3030 = vsel %vm1206, %v3025, %v3029
        %v3032 = vshrl.u32 %v2979, 16
        %v3034 = vshll.u32 %v2979, 16
        %v3036 = vrot.slane %v3034, 1
        %v3037 = vor.u32 %v3032, %v3036
        %v3039 = vshll.u32 %v2980, 16
        %v3041 = vrot.slane %v3039, 1
        %v3042 = vsel %vm1206, %v3037, %v3041
        %v3044 = vshrl.u32 %v2981, 16
        %v3046 = vshll.u32 %v2981, 16
        %v3048 = vrot.slane %v3046, 1
        %v3049 = vor.u32 %v3044, %v3048
        %v3051 = vshll.u32 %v2982, 16
        %v3053 = vrot.slane %v3051, 1
        %v3054 = vsel %vm1206, %v3049, %v3053
        %v3056 = vshrl.u32 %v2983, 16
        %v3058 = vshll.u32 %v2983, 16
        %v3060 = vrot.slane %v3058, 1
        %v3061 = vor.u32 %v3056, %v3060
        %v3063 = vshll.u32 %v2984, 16
        %v3065 = vrot.slane %v3063, 1
        %v3066 = vsel %vm1206, %v3061, %v3065
        %v3068 = vshrl.u32 %v2985, 16
        %v3070 = vshll.u32 %v2985, 16
        %v3072 = vrot.slane %v3070, 1
        %v3073 = vor.u32 %v3068, %v3072
        %v3075 = vshll.u32 %v2986, 16
        %v3077 = vrot.slane %v3075, 1
        %v3078 = vsel %vm1206, %v3073, %v3077
        %v3080 = vshrl.u32 %v2987, 16
        %v3082 = vshll.u32 %v2987, 16
        %v3084 = vrot.slane %v3082, 1
        %v3085 = vor.u32 %v3080, %v3084
        %v3087 = vshll.u32 %v2988, 16
        %v3089 = vrot.slane %v3087, 1
        %v3090 = vsel %vm1206, %v3085, %v3089
        %v3092 = vshrl.u32 %v2989, 16
        %v3094 = vshll.u32 %v2989, 16
        %v3096 = vrot.slane %v3094, 1
        %v3097 = vor.u32 %v3092, %v3096
        %v3099 = vshll.u32 %v2990, 16
        %v3101 = vrot.slane %v3099, 1
        %v3102 = vsel %vm1206, %v3097, %v3101
        %v3104 = vshrl.u32 %v2991, 16
        %v3106 = vshll.u32 %v2991, 16
        %v3108 = vrot.slane %v3106, 1
        %v3109 = vor.u32 %v3104, %v3108
        %v3111 = vshll.u32 %v2992, 16
        %v3113 = vrot.slane %v3111, 1
        %v3114 = vsel %vm1206, %v3109, %v3113
        %v3116 = vshrl.u32 %v2993, 16
        %v3118 = vshll.u32 %v2993, 16
        %v3120 = vrot.slane %v3118, 1
        %v3121 = vor.u32 %v3116, %v3120
        %v3123 = vshll.u32 %v2994, 16
        %v3125 = vrot.slane %v3123, 1
        %v3126 = vsel %vm1206, %v3121, %v3125
        %v3128 = vshrl.u32 %v2995, 16
        %v3130 = vshll.u32 %v2995, 16
        %v3132 = vrot.slane %v3130, 1
        %v3133 = vor.u32 %v3128, %v3132
        %v3135 = vshll.u32 %v2996, 16
        %v3137 = vrot.slane %v3135, 1
        %v3138 = vsel %vm1206, %v3133, %v3137
        %v3140 = vshrl.u32 %v2997, 16
        %v3142 = vshll.u32 %v2997, 16
        %v3144 = vrot.slane %v3142, 1
        %v3145 = vor.u32 %v3140, %v3144
        %v3147 = vshll.u32 %v2998, 16
        %v3149 = vrot.slane %v3147, 1
        %v3150 = vsel %vm1206, %v3145, %v3149
        %v3152 = vshrl.u32 %v2999, 16
        %v3154 = vshll.u32 %v2999, 16
        %v3156 = vrot.slane %v3154, 1
        %v3157 = vor.u32 %v3152, %v3156
        %v3159 = vshll.u32 %v3000, 16
        %v3161 = vrot.slane %v3159, 1
        %v3162 = vsel %vm1206, %v3157, %v3161
        %v3164 = vshrl.u32 %v3001, 16
        %v3166 = vshll.u32 %v3001, 16
        %v3168 = vrot.slane %v3166, 1
        %v3169 = vor.u32 %v3164, %v3168
        %v3171 = vshll.u32 %v3002, 16
        %v3173 = vrot.slane %v3171, 1
        %v3174 = vsel %vm1206, %v3169, %v3173
        %v3176 = vshrl.u32 %v3003, 16
        %v3178 = vshll.u32 %v3003, 16
        %v3180 = vrot.slane %v3178, 1
        %v3181 = vor.u32 %v3176, %v3180
        %v3183 = vshll.u32 %v3004, 16
        %v3185 = vrot.slane %v3183, 1
        %v3186 = vsel %vm1206, %v3181, %v3185
        %v3188 = vshrl.u32 %v3005, 16
        %v3190 = vshll.u32 %v3005, 16
        %v3192 = vrot.slane %v3190, 1
        %v3193 = vor.u32 %v3188, %v3192
        %v3195 = vshll.u32 %v3006, 16
        %v3197 = vrot.slane %v3195, 1
        %v3198 = vsel %vm1206, %v3193, %v3197
        %3199 = vrot.lane.b32.xlu0 %v3018, 28
        %v3200 = vpop.permute.xlu0 %3199
        %3201 = vrot.lane.b32.xlu0 %v3030, 28
        %v3202 = vpop.permute.xlu0 %3201
        %3203 = vrot.lane.b32.xlu0 %v3042, 28
        %v3204 = vpop.permute.xlu0 %3203
        %3205 = vrot.lane.b32.xlu0 %v3054, 28
        %v3206 = vpop.permute.xlu0 %3205
        %3207 = vrot.lane.b32.xlu0 %v3066, 28
        %v3208 = vpop.permute.xlu0 %3207
        %3209 = vrot.lane.b32.xlu0 %v3078, 28
        %v3210 = vpop.permute.xlu0 %3209
        %3211 = vrot.lane.b32.xlu0 %v3090, 28
        %v3212 = vpop.permute.xlu0 %3211
        %3213 = vrot.lane.b32.xlu0 %v3102, 28
        %v3214 = vpop.permute.xlu0 %3213
        %3215 = vrot.lane.b32.xlu0 %v3114, 28
        %v3216 = vpop.permute.xlu0 %3215
        %3217 = vrot.lane.b32.xlu0 %v3126, 28
        %v3218 = vpop.permute.xlu0 %3217
        %3219 = vrot.lane.b32.xlu0 %v3138, 28
        %v3220 = vpop.permute.xlu0 %3219
        %3221 = vrot.lane.b32.xlu0 %v3150, 28
        %v3222 = vpop.permute.xlu0 %3221
        %3223 = vrot.lane.b32.xlu0 %v3162, 28
        %v3224 = vpop.permute.xlu0 %3223
        %3225 = vrot.lane.b32.xlu0 %v3174, 28
        %v3226 = vpop.permute.xlu0 %3225
        %3227 = vrot.lane.b32.xlu0 %v3186, 28
        %v3228 = vpop.permute.xlu0 %3227
        %3229 = vrot.lane.b32.xlu0 %v3198, 28
        %v3230 = vpop.permute.xlu0 %3229
        %vm3247 = vcmask 261344
        %3248 = vst.msk [vmem:[#allocation3] sm:$0xff] %vm3247, %v3200
        %3249 = vst.msk [vmem:[#allocation3 + $0x8] sm:$0xff] %vm3247, %v3202
        %3250 = vst.msk [vmem:[#allocation3 + $0x10] sm:$0xff] %vm3247, %v3204
        %3251 = vst.msk [vmem:[#allocation3 + $0x18] sm:$0xff] %vm3247, %v3206
        %3252 = vst.msk [vmem:[#allocation3 + $0x20] sm:$0xff] %vm3247, %v3208
        %3253 = vst.msk [vmem:[#allocation3 + $0x28] sm:$0xff] %vm3247, %v3210
        %3254 = vst.msk [vmem:[#allocation3 + $0x30] sm:$0xff] %vm3247, %v3212
        %3255 = vst.msk [vmem:[#allocation3 + $0x38] sm:$0xff] %vm3247, %v3214
        %3256 = vst.msk [vmem:[#allocation3 + $0x40] sm:$0xff] %vm3247, %v3216
        %3257 = vst.msk [vmem:[#allocation3 + $0x48] sm:$0xff] %vm3247, %v3218
        %3258 = vst.msk [vmem:[#allocation3 + $0x50] sm:$0xff] %vm3247, %v3220
        %3259 = vst.msk [vmem:[#allocation3 + $0x58] sm:$0xff] %vm3247, %v3222
        %3260 = vst.msk [vmem:[#allocation3 + $0x60] sm:$0xff] %vm3247, %v3224
        %3261 = vst.msk [vmem:[#allocation3 + $0x68] sm:$0xff] %vm3247, %v3226
        %3262 = vst.msk [vmem:[#allocation3 + $0x70] sm:$0xff] %vm3247, %v3228
        %3263 = vst.msk [vmem:[#allocation3 + $0x78] sm:$0xff] %vm3247, %v3230
        %v3264 = vld [vmem:[%s2653] sm:$0xe]
        %v3265 = vld [vmem:[%s2653 + $0x4] sm:$0xf]
        %v3266 = vld [vmem:[%s2653 + $0x8] sm:$0x1]
        %v3267 = vld [vmem:[%s2653 + $0xc] sm:$0xe]
        %v3268 = vld [vmem:[%s2653 + $0x10] sm:$0xf]
        %v3269 = vld [vmem:[%s2653 + $0x14] sm:$0x1]
        %v3270 = vld [vmem:[%s2653 + $0x18] sm:$0xe]
        %v3271 = vld [vmem:[%s2653 + $0x1c] sm:$0xf]
        %v3272 = vld [vmem:[%s2653 + $0x20] sm:$0x1]
        %v3273 = vld [vmem:[%s2653 + $0x24] sm:$0xe]
        %v3274 = vld [vmem:[%s2653 + $0x28] sm:$0xf]
        %v3275 = vld [vmem:[%s2653 + $0x2c] sm:$0x1]
        %v3276 = vld [vmem:[%s2653 + $0x30] sm:$0xe]
        %v3277 = vld [vmem:[%s2653 + $0x34] sm:$0xf]
        %v3278 = vld [vmem:[%s2653 + $0x38] sm:$0x1]
        %v3279 = vld [vmem:[%s2653 + $0x3c] sm:$0xe]
        %v3280 = vld [vmem:[%s2653 + $0x40] sm:$0xf]
        %v3281 = vld [vmem:[%s2653 + $0x44] sm:$0x1]
        %v3282 = vld [vmem:[%s2653 + $0x48] sm:$0xe]
        %v3283 = vld [vmem:[%s2653 + $0x4c] sm:$0xf]
        %v3284 = vld [vmem:[%s2653 + $0x50] sm:$0x1]
        %v3285 = vld [vmem:[%s2653 + $0x54] sm:$0xe]
        %v3286 = vld [vmem:[%s2653 + $0x58] sm:$0xf]
        %v3287 = vld [vmem:[%s2653 + $0x5c] sm:$0x1]
        %v3288 = vld [vmem:[%s2653 + $0x60] sm:$0xe]
        %v3289 = vld [vmem:[%s2653 + $0x64] sm:$0xf]
        %v3290 = vld [vmem:[%s2653 + $0x68] sm:$0x1]
        %v3291 = vld [vmem:[%s2653 + $0x6c] sm:$0xe]
        %v3292 = vld [vmem:[%s2653 + $0x70] sm:$0xf]
        %v3293 = vld [vmem:[%s2653 + $0x74] sm:$0x1]
        %v3294 = vld [vmem:[%s2653 + $0x78] sm:$0xe]
        %v3295 = vld [vmem:[%s2653 + $0x7c] sm:$0xf]
        %v3296 = vld [vmem:[%s2653 + $0x80] sm:$0x1]
        %v3297 = vld [vmem:[%s2653 + $0x84] sm:$0xe]
        %v3298 = vld [vmem:[%s2653 + $0x88] sm:$0xf]
        %v3299 = vld [vmem:[%s2653 + $0x8c] sm:$0x1]
        %v3300 = vld [vmem:[%s2653 + $0x90] sm:$0xe]
        %v3301 = vld [vmem:[%s2653 + $0x94] sm:$0xf]
        %v3302 = vld [vmem:[%s2653 + $0x98] sm:$0x1]
        %v3303 = vld [vmem:[%s2653 + $0x9c] sm:$0xe]
        %v3304 = vld [vmem:[%s2653 + $0xa0] sm:$0xf]
        %v3305 = vld [vmem:[%s2653 + $0xa4] sm:$0x1]
        %v3306 = vld [vmem:[%s2653 + $0xa8] sm:$0xe]
        %v3307 = vld [vmem:[%s2653 + $0xac] sm:$0xf]
        %v3308 = vld [vmem:[%s2653 + $0xb0] sm:$0x1]
        %v3309 = vld [vmem:[%s2653 + $0xb4] sm:$0xe]
        %v3310 = vld [vmem:[%s2653 + $0xb8] sm:$0xf]
        %v3311 = vld [vmem:[%s2653 + $0xbc] sm:$0x1]
        %v3360 = vunpack.c.l.b16 %v3264
        %v3361 = vunpack.c.l.b16 %v3265
        %v3362 = vunpack.c.l.b16 %v3266
        %v3363 = vunpack.c.l.b16 %v3267
        %v3364 = vunpack.c.l.b16 %v3268
        %v3365 = vunpack.c.l.b16 %v3269
        %v3366 = vunpack.c.l.b16 %v3270
        %v3367 = vunpack.c.l.b16 %v3271
        %v3368 = vunpack.c.l.b16 %v3272
        %v3369 = vunpack.c.l.b16 %v3273
        %v3370 = vunpack.c.l.b16 %v3274
        %v3371 = vunpack.c.l.b16 %v3275
        %v3372 = vunpack.c.l.b16 %v3276
        %v3373 = vunpack.c.l.b16 %v3277
        %v3374 = vunpack.c.l.b16 %v3278
        %v3375 = vunpack.c.l.b16 %v3279
        %v3376 = vunpack.c.l.b16 %v3280
        %v3377 = vunpack.c.l.b16 %v3281
        %v3378 = vunpack.c.l.b16 %v3282
        %v3379 = vunpack.c.l.b16 %v3283
        %v3380 = vunpack.c.l.b16 %v3284
        %v3381 = vunpack.c.l.b16 %v3285
        %v3382 = vunpack.c.l.b16 %v3286
        %v3383 = vunpack.c.l.b16 %v3287
        %v3384 = vunpack.c.l.b16 %v3288
        %v3385 = vunpack.c.l.b16 %v3289
        %v3386 = vunpack.c.l.b16 %v3290
        %v3387 = vunpack.c.l.b16 %v3291
        %v3388 = vunpack.c.l.b16 %v3292
        %v3389 = vunpack.c.l.b16 %v3293
        %v3390 = vunpack.c.l.b16 %v3294
        %v3391 = vunpack.c.l.b16 %v3295
        %v3392 = vunpack.c.l.b16 %v3296
        %v3393 = vunpack.c.l.b16 %v3297
        %v3394 = vunpack.c.l.b16 %v3298
        %v3395 = vunpack.c.l.b16 %v3299
        %v3396 = vunpack.c.l.b16 %v3300
        %v3397 = vunpack.c.l.b16 %v3301
        %v3398 = vunpack.c.l.b16 %v3302
        %v3399 = vunpack.c.l.b16 %v3303
        %v3400 = vunpack.c.l.b16 %v3304
        %v3401 = vunpack.c.l.b16 %v3305
        %v3402 = vunpack.c.l.b16 %v3306
        %v3403 = vunpack.c.l.b16 %v3307
        %v3404 = vunpack.c.l.b16 %v3308
        %v3405 = vunpack.c.l.b16 %v3309
        %v3406 = vunpack.c.l.b16 %v3310
        %v3407 = vunpack.c.l.b16 %v3311
        %v3408 = vpack.c.b16 %v3361, %v3360
        %v3409 = vpack.c.b16 %v3362, %v3362
        %v3410 = vpack.c.b16 %v3364, %v3363
        %v3411 = vpack.c.b16 %v3365, %v3365
        %v3412 = vpack.c.b16 %v3367, %v3366
        %v3413 = vpack.c.b16 %v3368, %v3368
        %v3414 = vpack.c.b16 %v3370, %v3369
        %v3415 = vpack.c.b16 %v3371, %v3371
        %v3416 = vpack.c.b16 %v3373, %v3372
        %v3417 = vpack.c.b16 %v3374, %v3374
        %v3418 = vpack.c.b16 %v3376, %v3375
        %v3419 = vpack.c.b16 %v3377, %v3377
        %v3420 = vpack.c.b16 %v3379, %v3378
        %v3421 = vpack.c.b16 %v3380, %v3380
        %v3422 = vpack.c.b16 %v3382, %v3381
        %v3423 = vpack.c.b16 %v3383, %v3383
        %v3424 = vpack.c.b16 %v3385, %v3384
        %v3425 = vpack.c.b16 %v3386, %v3386
        %v3426 = vpack.c.b16 %v3388, %v3387
        %v3427 = vpack.c.b16 %v3389, %v3389
        %v3428 = vpack.c.b16 %v3391, %v3390
        %v3429 = vpack.c.b16 %v3392, %v3392
        %v3430 = vpack.c.b16 %v3394, %v3393
        %v3431 = vpack.c.b16 %v3395, %v3395
        %v3432 = vpack.c.b16 %v3397, %v3396
        %v3433 = vpack.c.b16 %v3398, %v3398
        %v3434 = vpack.c.b16 %v3400, %v3399
        %v3435 = vpack.c.b16 %v3401, %v3401
        %v3436 = vpack.c.b16 %v3403, %v3402
        %v3437 = vpack.c.b16 %v3404, %v3404
        %v3438 = vpack.c.b16 %v3406, %v3405
        %v3439 = vpack.c.b16 %v3407, %v3407
        %v3440 = vrot.slane %v3408, 1
        %v3441 = vrot.slane %v3409, 1
        %v3442 = vsel %vm1640, %v3440, %v3441
        %v3443 = vrot.slane %v3410, 1
        %v3444 = vrot.slane %v3411, 1
        %v3445 = vsel %vm1640, %v3443, %v3444
        %v3446 = vrot.slane %v3412, 1
        %v3447 = vrot.slane %v3413, 1
        %v3448 = vsel %vm1640, %v3446, %v3447
        %v3449 = vrot.slane %v3414, 1
        %v3450 = vrot.slane %v3415, 1
        %v3451 = vsel %vm1640, %v3449, %v3450
        %v3452 = vrot.slane %v3416, 1
        %v3453 = vrot.slane %v3417, 1
        %v3454 = vsel %vm1640, %v3452, %v3453
        %v3455 = vrot.slane %v3418, 1
        %v3456 = vrot.slane %v3419, 1
        %v3457 = vsel %vm1640, %v3455, %v3456
        %v3458 = vrot.slane %v3420, 1
        %v3459 = vrot.slane %v3421, 1
        %v3460 = vsel %vm1640, %v3458, %v3459
        %v3461 = vrot.slane %v3422, 1
        %v3462 = vrot.slane %v3423, 1
        %v3463 = vsel %vm1640, %v3461, %v3462
        %v3464 = vrot.slane %v3424, 1
        %v3465 = vrot.slane %v3425, 1
        %v3466 = vsel %vm1640, %v3464, %v3465
        %v3467 = vrot.slane %v3426, 1
        %v3468 = vrot.slane %v3427, 1
        %v3469 = vsel %vm1640, %v3467, %v3468
        %v3470 = vrot.slane %v3428, 1
        %v3471 = vrot.slane %v3429, 1
        %v3472 = vsel %vm1640, %v3470, %v3471
        %v3473 = vrot.slane %v3430, 1
        %v3474 = vrot.slane %v3431, 1
        %v3475 = vsel %vm1640, %v3473, %v3474
        %v3476 = vrot.slane %v3432, 1
        %v3477 = vrot.slane %v3433, 1
        %v3478 = vsel %vm1640, %v3476, %v3477
        %v3479 = vrot.slane %v3434, 1
        %v3480 = vrot.slane %v3435, 1
        %v3481 = vsel %vm1640, %v3479, %v3480
        %v3482 = vrot.slane %v3436, 1
        %v3483 = vrot.slane %v3437, 1
        %v3484 = vsel %vm1640, %v3482, %v3483
        %v3485 = vrot.slane %v3438, 1
        %v3486 = vrot.slane %v3439, 1
        %v3487 = vsel %vm1640, %v3485, %v3486
        %3488 = vrot.lane.b32.xlu0 %v3442, 32
        %v3489 = vpop.permute.xlu0 %3488
        %3490 = vrot.lane.b32.xlu0 %v3445, 32
        %v3491 = vpop.permute.xlu0 %3490
        %3492 = vrot.lane.b32.xlu0 %v3448, 32
        %v3493 = vpop.permute.xlu0 %3492
        %3494 = vrot.lane.b32.xlu0 %v3451, 32
        %v3495 = vpop.permute.xlu0 %3494
        %3496 = vrot.lane.b32.xlu0 %v3454, 32
        %v3497 = vpop.permute.xlu0 %3496
        %3498 = vrot.lane.b32.xlu0 %v3457, 32
        %v3499 = vpop.permute.xlu0 %3498
        %3500 = vrot.lane.b32.xlu0 %v3460, 32
        %v3501 = vpop.permute.xlu0 %3500
        %3502 = vrot.lane.b32.xlu0 %v3463, 32
        %v3503 = vpop.permute.xlu0 %3502
        %3504 = vrot.lane.b32.xlu0 %v3466, 32
        %v3505 = vpop.permute.xlu0 %3504
        %3506 = vrot.lane.b32.xlu0 %v3469, 32
        %v3507 = vpop.permute.xlu0 %3506
        %3508 = vrot.lane.b32.xlu0 %v3472, 32
        %v3509 = vpop.permute.xlu0 %3508
        %3510 = vrot.lane.b32.xlu0 %v3475, 32
        %v3511 = vpop.permute.xlu0 %3510
        %3512 = vrot.lane.b32.xlu0 %v3478, 32
        %v3513 = vpop.permute.xlu0 %3512
        %3514 = vrot.lane.b32.xlu0 %v3481, 32
        %v3515 = vpop.permute.xlu0 %3514
        %3516 = vrot.lane.b32.xlu0 %v3484, 32
        %v3517 = vpop.permute.xlu0 %3516
        %3518 = vrot.lane.b32.xlu0 %v3487, 32
        %v3519 = vpop.permute.xlu0 %3518
        %vm3536 = vcmask 294144
        %3537 = vst.msk [vmem:[#allocation3] sm:$0xff] %vm3536, %v3489
        %3538 = vst.msk [vmem:[#allocation3 + $0x8] sm:$0xff] %vm3536, %v3491
        %3539 = vst.msk [vmem:[#allocation3 + $0x10] sm:$0xff] %vm3536, %v3493
        %3540 = vst.msk [vmem:[#allocation3 + $0x18] sm:$0xff] %vm3536, %v3495
        %3541 = vst.msk [vmem:[#allocation3 + $0x20] sm:$0xff] %vm3536, %v3497
        %3542 = vst.msk [vmem:[#allocation3 + $0x28] sm:$0xff] %vm3536, %v3499
        %3543 = vst.msk [vmem:[#allocation3 + $0x30] sm:$0xff] %vm3536, %v3501
        %3544 = vst.msk [vmem:[#allocation3 + $0x38] sm:$0xff] %vm3536, %v3503
        %3545 = vst.msk [vmem:[#allocation3 + $0x40] sm:$0xff] %vm3536, %v3505
        %3546 = vst.msk [vmem:[#allocation3 + $0x48] sm:$0xff] %vm3536, %v3507
        %3547 = vst.msk [vmem:[#allocation3 + $0x50] sm:$0xff] %vm3536, %v3509
        %3548 = vst.msk [vmem:[#allocation3 + $0x58] sm:$0xff] %vm3536, %v3511
        %3549 = vst.msk [vmem:[#allocation3 + $0x60] sm:$0xff] %vm3536, %v3513
        %3550 = vst.msk [vmem:[#allocation3 + $0x68] sm:$0xff] %vm3536, %v3515
        %3551 = vst.msk [vmem:[#allocation3 + $0x70] sm:$0xff] %vm3536, %v3517
        %3552 = vst.msk [vmem:[#allocation3 + $0x78] sm:$0xff] %vm3536, %v3519
        %v3553 = vld [vmem:[#allocation3] sm:$0xff]
        %v3554 = vld [vmem:[#allocation3 + $0x8] sm:$0xff]
        %v3555 = vld [vmem:[#allocation3 + $0x10] sm:$0xff]
        %v3556 = vld [vmem:[#allocation3 + $0x18] sm:$0xff]
        %v3557 = vld [vmem:[#allocation3 + $0x20] sm:$0xff]
        %v3558 = vld [vmem:[#allocation3 + $0x28] sm:$0xff]
        %v3559 = vld [vmem:[#allocation3 + $0x30] sm:$0xff]
        %v3560 = vld [vmem:[#allocation3 + $0x38] sm:$0xff]
        %v3561 = vld [vmem:[#allocation3 + $0x40] sm:$0xff]
        %v3562 = vld [vmem:[#allocation3 + $0x48] sm:$0xff]
        %v3563 = vld [vmem:[#allocation3 + $0x50] sm:$0xff]
        %v3564 = vld [vmem:[#allocation3 + $0x58] sm:$0xff]
        %v3565 = vld [vmem:[#allocation3 + $0x60] sm:$0xff]
        %v3566 = vld [vmem:[#allocation3 + $0x68] sm:$0xff]
        %v3567 = vld [vmem:[#allocation3 + $0x70] sm:$0xff]
        %v3568 = vld [vmem:[#allocation3 + $0x78] sm:$0xff]
        %v3569 = vld [vmem:[%s1] sm:$0xf]
        %v3570 = vld [vmem:[%s1 + $0x4] sm:$0xf]
        %v3571 = vld [vmem:[%s1 + $0x8] sm:$0xf]
        %v3572 = vld [vmem:[%s1 + $0xc] sm:$0xf]
        %v3573 = vld [vmem:[%s1 + $0x10] sm:$0x3]
        %v3579 = vunpack.c.l.b16 %v3569
        %v3580 = vunpack.c.l.b16 %v3570
        %v3581 = vunpack.c.l.b16 %v3571
        %v3582 = vunpack.c.l.b16 %v3572
        %v3583 = vunpack.c.l.b16 %v3573
        %v3584 = vpack.c.b16 %v3580, %v3579
        %v3585 = vpack.c.b16 %v3582, %v3581
        %v3586 = vpack.c.b16 %v3583, %v3583
        %vm3589 = vcmask 293888
        %v3591 = vsel %vm3589, %v3553, 0
        %v3594 = vsel %vm3589, %v3554, 0
        %v3597 = vsel %vm3589, %v3555, 0
        %v3600 = vsel %vm3589, %v3556, 0
        %v3603 = vsel %vm3589, %v3557, 0
        %v3606 = vsel %vm3589, %v3558, 0
        %v3609 = vsel %vm3589, %v3559, 0
        %v3612 = vsel %vm3589, %v3560, 0
        %v3615 = vsel %vm3589, %v3561, 0
        %v3618 = vsel %vm3589, %v3562, 0
        %v3621 = vsel %vm3589, %v3563, 0
        %v3624 = vsel %vm3589, %v3564, 0
        %v3627 = vsel %vm3589, %v3565, 0
        %v3630 = vsel %vm3589, %v3566, 0
        %v3633 = vsel %vm3589, %v3567, 0
        %v3636 = vsel %vm3589, %v3568, 0
        %vm3638 = vcmask 1041408
        %v3640 = vsel %vm3638, %v3586, 0
        %3642 = vmatprep.subr.bf16.mxu0 0
        %3643 = vmatpush1.bf16.msra.mxu0 %v3584
        %3644 = vmatprep.subr.bf16.mxu0 0
        %3645 = vmatpush1.bf16.msra.mxu0 %v3585
        %3646 = vmatprep.subr.bf16.mxu0 0
        %3647 = vmatpush1.bf16.msra.mxu0 %v3640
        %3648 = vmatprep.subr.bf16.mxu0 0
        %3649 = vmatpush1.bf16.msra.mxu0 0
        %3650 = vmatprep.subr.bf16.mxu0 0
        %3651 = vmatpush1.bf16.msra.mxu0 0
        %3652 = vmatprep.subr.bf16.mxu0 0
        %3653 = vmatpush1.bf16.msra.mxu0 0
        %3654 = vmatprep.subr.bf16.mxu0 0
        %3655 = vmatpush1.bf16.msra.mxu0 0
        %3656 = vmatprep.subr.bf16.mxu0 0
        %3657 = vmatpush1.bf16.msra.mxu0 0
        %3658 = vmatprep.subr.bf16.mxu0 0
        %3659 = vmatpush1.bf16.msra.mxu0 0
        %3660 = vmatprep.subr.bf16.mxu0 0
        %3661 = vmatpush1.bf16.msra.mxu0 0
        %3662 = vmatprep.subr.bf16.mxu0 0
        %3663 = vmatpush1.bf16.msra.mxu0 0
        %3664 = vmatprep.subr.bf16.mxu0 0
        %3665 = vmatpush1.bf16.msra.mxu0 0
        %3666 = vmatprep.subr.bf16.mxu0 0
        %3667 = vmatpush1.bf16.msra.mxu0 0
        %3668 = vmatprep.subr.bf16.mxu0 0
        %3669 = vmatpush1.bf16.msra.mxu0 0
        %3670 = vmatprep.subr.bf16.mxu0 0
        %3671 = vmatpush1.bf16.msra.mxu0 0
        %3672 = vmatprep.subr.bf16.mxu0 0
        %3673 = vmatpush1.bf16.msra.mxu0 0
        %3674 = vmatprep.mubr.bf16.mxu0 0
        %3675 = vmatmul.mubr.bf16.gmra.mrb[0].mxu0 %v3591
        %v3676 = vpop.f32.mrb[0].mxu0
        %v3677 = vadd.f32 0.0, %v3676
        %v3678 = vpop.f32.mrb[0].mxu0
        %v3679 = vpop.f32.mrb[0].mxu0
        %v3680 = vadd.f32 0.0, %v3679
        %v3681 = vpop.f32.mrb[0].mxu0
        %3682 = vmatprep.mubr.bf16.mxu0 0
        %3683 = vmatmul.mubr.bf16.gmra.mrb[0].mxu0 %v3594
        %v3684 = vpop.f32.mrb[0].mxu0
        %v3685 = vadd.f32 0.0, %v3684
        %v3686 = vpop.f32.mrb[0].mxu0
        %v3687 = vpop.f32.mrb[0].mxu0
        %v3688 = vadd.f32 0.0, %v3687
        %v3689 = vpop.f32.mrb[0].mxu0
        %3690 = vmatprep.mubr.bf16.mxu0 0
        %3691 = vmatmul.mubr.bf16.gmra.mrb[0].mxu0 %v3597
        %v3692 = vpop.f32.mrb[0].mxu0
        %v3693 = vadd.f32 0.0, %v3692
        %v3694 = vpop.f32.mrb[0].mxu0
        %v3695 = vpop.f32.mrb[0].mxu0
        %v3696 = vadd.f32 0.0, %v3695
        %v3697 = vpop.f32.mrb[0].mxu0
        %3698 = vmatprep.mubr.bf16.mxu0 0
        %3699 = vmatmul.mubr.bf16.gmra.mrb[0].mxu0 %v3600
        %v3700 = vpop.f32.mrb[0].mxu0
        %v3701 = vadd.f32 0.0, %v3700
        %v3702 = vpop.f32.mrb[0].mxu0
        %v3703 = vpop.f32.mrb[0].mxu0
        %v3704 = vadd.f32 0.0, %v3703
        %v3705 = vpop.f32.mrb[0].mxu0
        %3706 = vmatprep.mubr.bf16.mxu0 0
        %3707 = vmatmul.mubr.bf16.gmra.mrb[0].mxu0 %v3603
        %v3708 = vpop.f32.mrb[0].mxu0
        %v3709 = vadd.f32 0.0, %v3708
        %v3710 = vpop.f32.mrb[0].mxu0
        %v3711 = vpop.f32.mrb[0].mxu0
        %v3712 = vadd.f32 0.0, %v3711
        %v3713 = vpop.f32.mrb[0].mxu0
        %3714 = vmatprep.mubr.bf16.mxu0 0
        %3715 = vmatmul.mubr.bf16.gmra.mrb[0].mxu0 %v3606
        %v3716 = vpop.f32.mrb[0].mxu0
        %v3717 = vadd.f32 0.0, %v3716
        %v3718 = vpop.f32.mrb[0].mxu0
        %v3719 = vpop.f32.mrb[0].mxu0
        %v3720 = vadd.f32 0.0, %v3719
        %v3721 = vpop.f32.mrb[0].mxu0
        %3722 = vmatprep.mubr.bf16.mxu0 0
        %3723 = vmatmul.mubr.bf16.gmra.mrb[0].mxu0 %v3609
        %v3724 = vpop.f32.mrb[0].mxu0
        %v3725 = vadd.f32 0.0, %v3724
        %v3726 = vpop.f32.mrb[0].mxu0
        %v3727 = vpop.f32.mrb[0].mxu0
        %v3728 = vadd.f32 0.0, %v3727
        %v3729 = vpop.f32.mrb[0].mxu0
        %3730 = vmatprep.mubr.bf16.mxu0 0
        %3731 = vmatmul.mubr.bf16.gmra.mrb[0].mxu0 %v3612
        %v3732 = vpop.f32.mrb[0].mxu0
        %v3733 = vadd.f32 0.0, %v3732
        %v3734 = vpop.f32.mrb[0].mxu0
        %v3735 = vpop.f32.mrb[0].mxu0
        %v3736 = vadd.f32 0.0, %v3735
        %v3737 = vpop.f32.mrb[0].mxu0
        %3738 = vmatprep.mubr.bf16.mxu0 0
        %3739 = vmatmul.mubr.bf16.gmra.mrb[0].mxu0 %v3615
        %v3740 = vpop.f32.mrb[0].mxu0
        %v3741 = vadd.f32 0.0, %v3740
        %v3742 = vpop.f32.mrb[0].mxu0
        %v3743 = vpop.f32.mrb[0].mxu0
        %v3744 = vadd.f32 0.0, %v3743
        %v3745 = vpop.f32.mrb[0].mxu0
        %3746 = vmatprep.mubr.bf16.mxu0 0
        %3747 = vmatmul.mubr.bf16.gmra.mrb[0].mxu0 %v3618
        %v3748 = vpop.f32.mrb[0].mxu0
        %v3749 = vadd.f32 0.0, %v3748
        %v3750 = vpop.f32.mrb[0].mxu0
        %v3751 = vpop.f32.mrb[0].mxu0
        %v3752 = vadd.f32 0.0, %v3751
        %v3753 = vpop.f32.mrb[0].mxu0
        %3754 = vmatprep.mubr.bf16.mxu0 0
        %3755 = vmatmul.mubr.bf16.gmra.mrb[0].mxu0 %v3621
        %v3756 = vpop.f32.mrb[0].mxu0
        %v3757 = vadd.f32 0.0, %v3756
        %v3758 = vpop.f32.mrb[0].mxu0
        %v3759 = vpop.f32.mrb[0].mxu0
        %v3760 = vadd.f32 0.0, %v3759
        %v3761 = vpop.f32.mrb[0].mxu0
        %3762 = vmatprep.mubr.bf16.mxu0 0
        %3763 = vmatmul.mubr.bf16.gmra.mrb[0].mxu0 %v3624
        %v3764 = vpop.f32.mrb[0].mxu0
        %v3765 = vadd.f32 0.0, %v3764
        %v3766 = vpop.f32.mrb[0].mxu0
        %v3767 = vpop.f32.mrb[0].mxu0
        %v3768 = vadd.f32 0.0, %v3767
        %v3769 = vpop.f32.mrb[0].mxu0
        %3770 = vmatprep.mubr.bf16.mxu0 0
        %3771 = vmatmul.mubr.bf16.gmra.mrb[0].mxu0 %v3627
        %v3772 = vpop.f32.mrb[0].mxu0
        %v3773 = vadd.f32 0.0, %v3772
        %v3774 = vpop.f32.mrb[0].mxu0
        %v3775 = vpop.f32.mrb[0].mxu0
        %v3776 = vadd.f32 0.0, %v3775
        %v3777 = vpop.f32.mrb[0].mxu0
        %3778 = vmatprep.mubr.bf16.mxu0 0
        %3779 = vmatmul.mubr.bf16.gmra.mrb[0].mxu0 %v3630
        %v3780 = vpop.f32.mrb[0].mxu0
        %v3781 = vadd.f32 0.0, %v3780
        %v3782 = vpop.f32.mrb[0].mxu0
        %v3783 = vpop.f32.mrb[0].mxu0
        %v3784 = vadd.f32 0.0, %v3783
        %v3785 = vpop.f32.mrb[0].mxu0
        %3786 = vmatprep.mubr.bf16.mxu0 0
        %3787 = vmatmul.mubr.bf16.gmra.mrb[0].mxu0 %v3633
        %v3788 = vpop.f32.mrb[0].mxu0
        %v3789 = vadd.f32 0.0, %v3788
        %v3790 = vpop.f32.mrb[0].mxu0
        %v3791 = vpop.f32.mrb[0].mxu0
        %v3792 = vadd.f32 0.0, %v3791
        %v3793 = vpop.f32.mrb[0].mxu0
        %3794 = vmatprep.mubr.bf16.mxu0 0
        %3795 = vmatmul.mubr.bf16.gmra.mrb[0].mxu0 %v3636
        %v3796 = vpop.f32.mrb[0].mxu0
        %v3797 = vadd.f32 0.0, %v3796
        %v3798 = vpop.f32.mrb[0].mxu0
        %v3799 = vpop.f32.mrb[0].mxu0
        %v3800 = vadd.f32 0.0, %v3799
        %v3801 = vpop.f32.mrb[0].mxu0
        %3802 = vdwg.mxu0
        %3803 = vst.msk [vmem:[%s208] sm:$0xff] %vm1013, %v3677
        %3804 = vst.msk [vmem:[%s208 + $0x8] sm:$0xff] %vm1013, %v3680
        %3805 = vst.msk [vmem:[%s208 + $0x10] sm:$0xff] %vm1013, %v3685
        %3806 = vst.msk [vmem:[%s208 + $0x18] sm:$0xff] %vm1013, %v3688
        %3807 = vst.msk [vmem:[%s208 + $0x20] sm:$0xff] %vm1013, %v3693
        %3808 = vst.msk [vmem:[%s208 + $0x28] sm:$0xff] %vm1013, %v3696
        %3809 = vst.msk [vmem:[%s208 + $0x30] sm:$0xff] %vm1013, %v3701
        %3810 = vst.msk [vmem:[%s208 + $0x38] sm:$0xff] %vm1013, %v3704
        %3811 = vst.msk [vmem:[%s208 + $0x40] sm:$0xff] %vm1013, %v3709
        %3812 = vst.msk [vmem:[%s208 + $0x48] sm:$0xff] %vm1013, %v3712
        %3813 = vst.msk [vmem:[%s208 + $0x50] sm:$0xff] %vm1013, %v3717
        %3814 = vst.msk [vmem:[%s208 + $0x58] sm:$0xff] %vm1013, %v3720
        %3815 = vst.msk [vmem:[%s208 + $0x60] sm:$0xff] %vm1013, %v3725
        %3816 = vst.msk [vmem:[%s208 + $0x68] sm:$0xff] %vm1013, %v3728
        %3817 = vst.msk [vmem:[%s208 + $0x70] sm:$0xff] %vm1013, %v3733
        %3818 = vst.msk [vmem:[%s208 + $0x78] sm:$0xff] %vm1013, %v3736
        %3819 = vst.msk [vmem:[%s208 + $0x80] sm:$0xff] %vm1013, %v3741
        %3820 = vst.msk [vmem:[%s208 + $0x88] sm:$0xff] %vm1013, %v3744
        %3821 = vst.msk [vmem:[%s208 + $0x90] sm:$0xff] %vm1013, %v3749
        %3822 = vst.msk [vmem:[%s208 + $0x98] sm:$0xff] %vm1013, %v3752
        %3823 = vst.msk [vmem:[%s208 + $0xa0] sm:$0xff] %vm1013, %v3757
        %3824 = vst.msk [vmem:[%s208 + $0xa8] sm:$0xff] %vm1013, %v3760
        %3825 = vst.msk [vmem:[%s208 + $0xb0] sm:$0xff] %vm1013, %v3765
        %3826 = vst.msk [vmem:[%s208 + $0xb8] sm:$0xff] %vm1013, %v3768
        %3827 = vst.msk [vmem:[%s208 + $0xc0] sm:$0xff] %vm1013, %v3773
        %3828 = vst.msk [vmem:[%s208 + $0xc8] sm:$0xff] %vm1013, %v3776
        %3829 = vst.msk [vmem:[%s208 + $0xd0] sm:$0xff] %vm1013, %v3781
        %3830 = vst.msk [vmem:[%s208 + $0xd8] sm:$0xff] %vm1013, %v3784
        %3831 = vst.msk [vmem:[%s208 + $0xe0] sm:$0xff] %vm1013, %v3789
        %3832 = vst.msk [vmem:[%s208 + $0xe8] sm:$0xff] %vm1013, %v3792
        %3833 = vst.msk [vmem:[%s208 + $0xf0] sm:$0xff] %vm1013, %v3797
        %3834 = vst.msk [vmem:[%s208 + $0xf8] sm:$0xff] %vm1013, %v3800
        %v3835 = vsel %vm1013, %v3677, 0.0
        %v3836 = vsel %vm1013, %v3680, 0.0
        %v3837 = vadd.f32 %v3835, %v3836
        %v3838 = vsel %vm1013, %v3685, 0.0
        %v3839 = vadd.f32 %v3837, %v3838
        %v3840 = vsel %vm1013, %v3688, 0.0
        %v3841 = vadd.f32 %v3839, %v3840
        %v3842 = vsel %vm1013, %v3693, 0.0
        %v3843 = vadd.f32 %v3841, %v3842
        %v3844 = vsel %vm1013, %v3696, 0.0
        %v3845 = vadd.f32 %v3843, %v3844
        %v3846 = vsel %vm1013, %v3701, 0.0
        %v3847 = vadd.f32 %v3845, %v3846
        %v3848 = vsel %vm1013, %v3704, 0.0
        %v3849 = vadd.f32 %v3847, %v3848
        %v3850 = vsel %vm1013, %v3709, 0.0
        %v3851 = vadd.f32 %v3849, %v3850
        %v3852 = vsel %vm1013, %v3712, 0.0
        %v3853 = vadd.f32 %v3851, %v3852
        %v3854 = vsel %vm1013, %v3717, 0.0
        %v3855 = vadd.f32 %v3853, %v3854
        %v3856 = vsel %vm1013, %v3720, 0.0
        %v3857 = vadd.f32 %v3855, %v3856
        %v3858 = vsel %vm1013, %v3725, 0.0
        %v3859 = vadd.f32 %v3857, %v3858
        %v3860 = vsel %vm1013, %v3728, 0.0
        %v3861 = vadd.f32 %v3859, %v3860
        %v3862 = vsel %vm1013, %v3733, 0.0
        %v3863 = vadd.f32 %v3861, %v3862
        %v3864 = vsel %vm1013, %v3736, 0.0
        %v3865 = vadd.f32 %v3863, %v3864
        %v3866 = vsel %vm1013, %v3741, 0.0
        %v3867 = vadd.f32 %v3865, %v3866
        %v3868 = vsel %vm1013, %v3744, 0.0
        %v3869 = vadd.f32 %v3867, %v3868
        %v3870 = vsel %vm1013, %v3749, 0.0
        %v3871 = vadd.f32 %v3869, %v3870
        %v3872 = vsel %vm1013, %v3752, 0.0
        %v3873 = vadd.f32 %v3871, %v3872
        %v3874 = vsel %vm1013, %v3757, 0.0
        %v3875 = vadd.f32 %v3873, %v3874
        %v3876 = vsel %vm1013, %v3760, 0.0
        %v3877 = vadd.f32 %v3875, %v3876
        %v3878 = vsel %vm1013, %v3765, 0.0
        %v3879 = vadd.f32 %v3877, %v3878
        %v3880 = vsel %vm1013, %v3768, 0.0
        %v3881 = vadd.f32 %v3879, %v3880
        %v3882 = vsel %vm1013, %v3773, 0.0
        %v3883 = vadd.f32 %v3881, %v3882
        %v3884 = vsel %vm1013, %v3776, 0.0
        %v3885 = vadd.f32 %v3883, %v3884
        %v3886 = vsel %vm1013, %v3781, 0.0
        %v3887 = vadd.f32 %v3885, %v3886
        %v3888 = vsel %vm1013, %v3784, 0.0
        %v3889 = vadd.f32 %v3887, %v3888
        %v3890 = vsel %vm1013, %v3789, 0.0
        %v3891 = vadd.f32 %v3889, %v3890
        %v3892 = vsel %vm1013, %v3792, 0.0
        %v3893 = vadd.f32 %v3891, %v3892
        %v3894 = vsel %vm1013, %v3797, 0.0
        %v3895 = vadd.f32 %v3893, %v3894
        %v3896 = vsel %vm1013, %v3800, 0.0
        %v3897 = vadd.f32 %v3895, %v3896
        %v3898 = vrot.slane %v3897, 4
        %v3899 = vadd.f32 %v3897, %v3898
        %v3900 = vrot.slane %v3899, 2
        %v3901 = vadd.f32 %v3899, %v3900
        %v3902 = vrot.slane %v3901, 1
        %v3903 = vadd.f32 %v3901, %v3902
        %3904 = vst.msk [vmem:[%s198] sm:$0x1] %vm261, %v3903
        %v3905 = vmul.f32 %v3677, %v3677
        %v3906 = vmul.f32 %v3680, %v3680
        %v3907 = vmul.f32 %v3685, %v3685
        %v3908 = vmul.f32 %v3688, %v3688
        %v3909 = vmul.f32 %v3693, %v3693
        %v3910 = vmul.f32 %v3696, %v3696
        %v3911 = vmul.f32 %v3701, %v3701
        %v3912 = vmul.f32 %v3704, %v3704
        %v3913 = vmul.f32 %v3709, %v3709
        %v3914 = vmul.f32 %v3712, %v3712
        %v3915 = vmul.f32 %v3717, %v3717
        %v3916 = vmul.f32 %v3720, %v3720
        %v3917 = vmul.f32 %v3725, %v3725
        %v3918 = vmul.f32 %v3728, %v3728
        %v3919 = vmul.f32 %v3733, %v3733
        %v3920 = vmul.f32 %v3736, %v3736
        %v3921 = vmul.f32 %v3741, %v3741
        %v3922 = vmul.f32 %v3744, %v3744
        %v3923 = vmul.f32 %v3749, %v3749
        %v3924 = vmul.f32 %v3752, %v3752
        %v3925 = vmul.f32 %v3757, %v3757
        %v3926 = vmul.f32 %v3760, %v3760
        %v3927 = vmul.f32 %v3765, %v3765
        %v3928 = vmul.f32 %v3768, %v3768
        %v3929 = vmul.f32 %v3773, %v3773
        %v3930 = vmul.f32 %v3776, %v3776
        %v3931 = vmul.f32 %v3781, %v3781
        %v3932 = vmul.f32 %v3784, %v3784
        %v3933 = vmul.f32 %v3789, %v3789
        %v3934 = vmul.f32 %v3792, %v3792
        %v3935 = vmul.f32 %v3797, %v3797
        %v3936 = vmul.f32 %v3800, %v3800
        %v3937 = vsel %vm1013, %v3905, 0.0
        %v3938 = vsel %vm1013, %v3906, 0.0
        %v3939 = vadd.f32 %v3937, %v3938
        %v3940 = vsel %vm1013, %v3907, 0.0
        %v3941 = vadd.f32 %v3939, %v3940
        %v3942 = vsel %vm1013, %v3908, 0.0
        %v3943 = vadd.f32 %v3941, %v3942
        %v3944 = vsel %vm1013, %v3909, 0.0
        %v3945 = vadd.f32 %v3943, %v3944
        %v3946 = vsel %vm1013, %v3910, 0.0
        %v3947 = vadd.f32 %v3945, %v3946
        %v3948 = vsel %vm1013, %v3911, 0.0
        %v3949 = vadd.f32 %v3947, %v3948
        %v3950 = vsel %vm1013, %v3912, 0.0
        %v3951 = vadd.f32 %v3949, %v3950
        %v3952 = vsel %vm1013, %v3913, 0.0
        %v3953 = vadd.f32 %v3951, %v3952
        %v3954 = vsel %vm1013, %v3914, 0.0
        %v3955 = vadd.f32 %v3953, %v3954
        %v3956 = vsel %vm1013, %v3915, 0.0
        %v3957 = vadd.f32 %v3955, %v3956
        %v3958 = vsel %vm1013, %v3916, 0.0
        %v3959 = vadd.f32 %v3957, %v3958
        %v3960 = vsel %vm1013, %v3917, 0.0
        %v3961 = vadd.f32 %v3959, %v3960
        %v3962 = vsel %vm1013, %v3918, 0.0
        %v3963 = vadd.f32 %v3961, %v3962
        %v3964 = vsel %vm1013, %v3919, 0.0
        %v3965 = vadd.f32 %v3963, %v3964
        %v3966 = vsel %vm1013, %v3920, 0.0
        %v3967 = vadd.f32 %v3965, %v3966
        %v3968 = vsel %vm1013, %v3921, 0.0
        %v3969 = vadd.f32 %v3967, %v3968
        %v3970 = vsel %vm1013, %v3922, 0.0
        %v3971 = vadd.f32 %v3969, %v3970
        %v3972 = vsel %vm1013, %v3923, 0.0
        %v3973 = vadd.f32 %v3971, %v3972
        %v3974 = vsel %vm1013, %v3924, 0.0
        %v3975 = vadd.f32 %v3973, %v3974
        %v3976 = vsel %vm1013, %v3925, 0.0
        %v3977 = vadd.f32 %v3975, %v3976
        %v3978 = vsel %vm1013, %v3926, 0.0
        %v3979 = vadd.f32 %v3977, %v3978
        %v3980 = vsel %vm1013, %v3927, 0.0
        %v3981 = vadd.f32 %v3979, %v3980
        %v3982 = vsel %vm1013, %v3928, 0.0
        %v3983 = vadd.f32 %v3981, %v3982
        %v3984 = vsel %vm1013, %v3929, 0.0
        %v3985 = vadd.f32 %v3983, %v3984
        %v3986 = vsel %vm1013, %v3930, 0.0
        %v3987 = vadd.f32 %v3985, %v3986
        %v3988 = vsel %vm1013, %v3931, 0.0
        %v3989 = vadd.f32 %v3987, %v3988
        %v3990 = vsel %vm1013, %v3932, 0.0
        %v3991 = vadd.f32 %v3989, %v3990
        %v3992 = vsel %vm1013, %v3933, 0.0
        %v3993 = vadd.f32 %v3991, %v3992
        %v3994 = vsel %vm1013, %v3934, 0.0
        %v3995 = vadd.f32 %v3993, %v3994
        %v3996 = vsel %vm1013, %v3935, 0.0
        %v3997 = vadd.f32 %v3995, %v3996
        %v3998 = vsel %vm1013, %v3936, 0.0
        %v3999 = vadd.f32 %v3997, %v3998
        %v4000 = vrot.slane %v3999, 4
        %v4001 = vadd.f32 %v3999, %v4000
        %v4002 = vrot.slane %v4001, 2
        %v4003 = vadd.f32 %v4001, %v4002
        %v4004 = vrot.slane %v4003, 1
        %v4005 = vadd.f32 %v4003, %v4004
        %4006 = vst.msk [vmem:[%s198 + $0x1] sm:$0x1] %vm261, %v4005
        %p4007 = scmp.lt.s32.totalorder %s19, 1
        %s4008 = scalar_select %p4007, %s19, 1
        %s4009 = smul.addr %s4008, 32
        %s4010 = smul.addr %s4009, 8
        %s4011 = scalar_lea.vmem %s3, %s4010
        %s4012 = sand.u32 %s121, 1
        %s4013 = scalar_lea.sflag [#allocation5], %s4012
        %s4014 = sand.u32 %s121, 1
        %s4015 = smul.addr %s4014, 2
        %s4016 = scalar_lea.vmem [#allocation4], %s4015
        // Predicated region
        $region33: #{tpu_custom_call.1} parent=31 // pred_check
          %p4017 = pneg %p105
        $region34: #{tpu_custom_call.1} parent=31 // pred_check_branch
          %4019 = sbr.rel (%p4017) target = $region36
        $region35: #{tpu_custom_call.1} parent=31 // pred_region
          _
        $region36: #{tpu_custom_call.1} parent=31 // pred_fallthru
          _
        // Predicated region
        $region37: #{tpu_custom_call.1} parent=31 // pred_check
          %p4020 = pneg %p131
        $region38: #{tpu_custom_call.1} parent=31 // pred_check_branch
          %4022 = sbr.rel (%p4020) target = $region40
        $region39: #{tpu_custom_call.1} parent=31 // pred_region
          %s4024 = ssub.s32 32, 32
          %4025 = vsyncadd %s4013, %s4024
          %s4026 = smul.addr %s19, 32
          %s4027 = scalar_lea.hbm %s4, %s4026
          %s4029 = sshll.u32 %s4016, 4
          %s4030 = int_to_ptr.vmem [resolvable:$true] %s4029
          %4032 = dma.vmem_to_hbm [thread:$0]  %s4030, 32, %s4027, %s4013
        $region40: #{tpu_custom_call.1} parent=31 // pred_fallthru
          _
      $region32: #{tpu_custom_call.1} parent=5 // pred_fallthru
        _
      %p4033 = scmp.le.s32.totalorder 2, %s14
      // Predicated region
      $region41: #{tpu_custom_call.1} parent=5 // pred_check
        %p4034 = pneg %p4033
      $region42: #{tpu_custom_call.1} parent=5 // pred_check_branch
        %4036 = sbr.rel (%p4034) target = $region44
      $region43: #{tpu_custom_call.1} parent=5 // pred_region
        %s4037 = ssub.s32 %s14, 2
        // Predicated region
        $region45: #{tpu_custom_call.1} parent=43 // pred_check
          %p4038 = pneg %p111
        $region46: #{tpu_custom_call.1} parent=43 // pred_check_branch
          %4040 = sbr.rel (%p4038) target = $region48
        $region47: #{tpu_custom_call.1} parent=43 // pred_region
          %p4041 = scmp.lt.s32.totalorder %s20, 1
          %s4042 = scalar_select %p4041, %s20, 1
          %s4043 = smul.addr %s4042, 32
          %s4044 = smul.addr %s4043, 8
          %s4045 = scalar_lea.vmem %s3, %s4044
        $region48: #{tpu_custom_call.1} parent=43 // pred_fallthru
          _
        // Predicated region
        $region49: #{tpu_custom_call.1} parent=43 // pred_check
          %p4046 = pneg %p137
        $region50: #{tpu_custom_call.1} parent=43 // pred_check_branch
          %4048 = sbr.rel (%p4046) target = $region52
        $region51: #{tpu_custom_call.1} parent=43 // pred_region
          %s4049 = sand.u32 %s122, 1
          %s4050 = scalar_lea.sflag [#allocation5], %s4049
          %s4051 = sand.u32 %s122, 1
          %s4052 = smul.addr %s4051, 2
          %s4053 = scalar_lea.vmem [#allocation4], %s4052
          %4054 = dma.done %s4050, 32
        $region52: #{tpu_custom_call.1} parent=43 // pred_fallthru
          _
      $region44: #{tpu_custom_call.1} parent=5 // pred_fallthru
        _
    $region6: #{tpu_custom_call.1} parent=1 // loop_footer
      %s18 = sadd.s32 1, %s14
    $region7: #{tpu_custom_call.1} parent=1 // loop_footer_branch
      %13 = sbr.rel target = $region3
    $region8: #{tpu_custom_call.1} parent=1 // loop_exit
      _
    %4055 = vsyncpa [#allocation5], 1
    %s4056 = scalar_lea.sflag [#allocation5], 1
    %4057 = vsyncpa %s4056, 1

</llo_original>
